<compile_context>
chip_gen: v7x
topology: tpu7x:2x2x1
jax: 0.10.0
libtpu: 0.0.40
codegen_flags: <defaults>
</compile_context>

<pallas_src>
import functools
import math

import jax
import jax.numpy as jnp
from jax.experimental import pallas as pl
from jax.experimental.pallas import tpu as pltpu

SQRT_2_OVER_PI = 0.7978845608028654
_MIB = 1024 * 1024


def _gelu_new(x):
    # transformers' gelu_new == config.hidden_act and Transformer.relu
    return 0.5 * x * (1.0 + jnp.tanh(SQRT_2_OVER_PI * (x + 0.044715 * x * x * x)))


@functools.lru_cache(maxsize=1)
def _vmem_limit_bytes():
    # Generation-aware scoped-VMEM ceiling: ~3/4 of physical, capped at 100 MiB
    # (v5e/v6e: 96-100 MiB, v7x: 48 MiB).  Fallback is a safe cross-gen default.
    try:
        cap = pltpu.get_tpu_info().vmem_capacity_bytes
        return int(min(100 * _MIB, (cap * 3) // 4))
    except Exception:  # noqa: BLE001
        return 64 * _MIB


def _pick_tile(m, cap=512):
    """Largest tile (multiple of 8, <= cap) dividing m; falls back to full m."""
    for t in (cap, 512, 256, 128, 64, 32, 16, 8):
        if t <= cap and t <= m and m % t == 0:
            return t
    return m


# ---------------------------------------------------------------------------
# Kernel 1: row-tiled linear over flattened (B*N, K):  y = act(x @ W + b)
# ---------------------------------------------------------------------------
def _linear_kernel(x_ref, w_ref, b_ref, o_ref, *, act, mxu_dtype):
    x = x_ref[...].astype(mxu_dtype)
    y = jnp.dot(x, w_ref[...], preferred_element_type=jnp.float32) + b_ref[...]
    if act == "relu":
        y = jnp.maximum(y, 0.0)
    elif act == "gelu_new":
        y = _gelu_new(y)
    o_ref[...] = y


def linear_pallas(x2d, w, b, *, act="none", mxu_dtype=jnp.bfloat16, tile_m=512):
    M, K = x2d.shape
    C = w.shape[1]
    tm = _pick_tile(M, tile_m)
    return pl.pallas_call(
        functools.partial(_linear_kernel, act=act, mxu_dtype=mxu_dtype),
        out_shape=jax.ShapeDtypeStruct((M, C), jnp.float32),
        grid=(M // tm,),
        in_specs=[
            pl.BlockSpec((tm, K), lambda i: (i, 0)),
            pl.BlockSpec((K, C), lambda i: (0, 0)),
            pl.BlockSpec((1, C), lambda i: (0, 0)),
        ],
        out_specs=pl.BlockSpec((tm, C), lambda i: (i, 0)),
        compiler_params=pltpu.CompilerParams(
            dimension_semantics=("parallel",),
            vmem_limit_bytes=_vmem_limit_bytes()),
        cost_estimate=pl.CostEstimate(
            flops=2 * M * K * C,
            transcendentals=M * C if act == "gelu_new" else 0,
            bytes_accessed=4 * M * (K + C) + w.dtype.itemsize * K * C + 4 * C),
    )(x2d, w, b)


# ---------------------------------------------------------------------------
# Kernel 2: fused QKV projection (one wide (K, 3H) matmul, three lane-dense outputs)
# ---------------------------------------------------------------------------
def _qkv_kernel(x_ref, w_ref, b_ref, q_ref, k_ref, v_ref, *, hidden, mxu_dtype):
    x = x_ref[...].astype(mxu_dtype)
    y = jnp.dot(x, w_ref[...], preferred_element_type=jnp.float32) + b_ref[...]
    q_ref[...] = y[:, :hidden]
    k_ref[...] = y[:, hidden:2 * hidden]
    v_ref[...] = y[:, 2 * hidden:]


def qkv_pallas(x2d, wqkv, bqkv, *, hidden, mxu_dtype=jnp.bfloat16, tile_m=512):
    M, K = x2d.shape
    tm = _pick_tile(M, tile_m)
    out = jax.ShapeDtypeStruct((M, hidden), jnp.float32)
    ospec = pl.BlockSpec((tm, hidden), lambda i: (i, 0))
    return pl.pallas_call(
        functools.partial(_qkv_kernel, hidden=hidden, mxu_dtype=mxu_dtype),
        out_shape=(out, out, out),
        grid=(M // tm,),
        in_specs=[
            pl.BlockSpec((tm, K), lambda i: (i, 0)),
            pl.BlockSpec((K, 3 * hidden), lambda i: (0, 0)),
            pl.BlockSpec((1, 3 * hidden), lambda i: (0, 0)),
        ],
        out_specs=(ospec, ospec, ospec),
        compiler_params=pltpu.CompilerParams(
            dimension_semantics=("parallel",),
            vmem_limit_bytes=_vmem_limit_bytes()),
        cost_estimate=pl.CostEstimate(
            flops=2 * M * K * 3 * hidden,
            transcendentals=0,
            bytes_accessed=4 * M * (K + 3 * hidden)
            + wqkv.dtype.itemsize * K * 3 * hidden),
    )(x2d, wqkv, bqkv)


# ---------------------------------------------------------------------------
# Kernel 3: flash-style attention block (per batch / q-tile / kv-tile), with the
# output projection + residual + LayerNorm fused into the kv-finalize step.
# ---------------------------------------------------------------------------
def _attn_kernel(q_ref, k_ref, v_ref, h_ref, wo_ref, bo_ref, g_ref, bt_ref,
                 o_ref, m_sc, l_sc, acc_sc, *,
                 num_heads, head_dim, ln_eps, mxu_dtype, approx_recip):
    ki = pl.program_id(2)
    d = head_dim
    scale = 1.0 / math.sqrt(d)

    @pl.when(ki == 0)
    def _init():
        m_sc[...] = jnp.full(m_sc.shape, -jnp.inf, jnp.float32)
        l_sc[...] = jnp.zeros(l_sc.shape, jnp.float32)
        acc_sc[...] = jnp.zeros(acc_sc.shape, jnp.float32)

    q_all = q_ref[0]                                                 # (tq, H) f32
    k_all = k_ref[0]                                                 # (tk, H)
    v_all = v_ref[0]

    for hd in range(num_heads):                                      # unrolled
        q = q_all[:, hd * d:(hd + 1) * d].astype(mxu_dtype)
        k = k_all[:, hd * d:(hd + 1) * d].astype(mxu_dtype)
        v = v_all[:, hd * d:(hd + 1) * d].astype(mxu_dtype)
        # q @ k^T without materializing a transpose (contract the d axis).
        s = jax.lax.dot_general(q, k, (((1,), (1,)), ((), ())),
                                preferred_element_type=jnp.float32) * scale
        m_prev = m_sc[hd]                                            # (tq, 1)
        m_new = jnp.maximum(m_prev, jnp.max(s, axis=-1, keepdims=True))
        alpha = jnp.exp(m_prev - m_new)
        p = jnp.exp(s - m_new)
        l_sc[hd] = alpha * l_sc[hd] + jnp.sum(p, axis=-1, keepdims=True)
        acc_sc[hd] = alpha * acc_sc[hd] + jnp.dot(
            p.astype(mxu_dtype), v, preferred_element_type=jnp.float32)
        m_sc[hd] = m_new

    @pl.when(ki == pl.num_programs(2) - 1)
    def _finalize():
        parts = []
        for hd in range(num_heads):
            inv_l = pl.reciprocal(l_sc[hd], approx=approx_recip)
            parts.append(acc_sc[hd] * inv_l)
        ctx = jnp.concatenate(parts, axis=-1)                        # (tq, H)
        proj = jnp.dot(ctx.astype(mxu_dtype), wo_ref[...],
                       preferred_element_type=jnp.float32) + bo_ref[...]
        y = h_ref[0] + proj
        mu = jnp.mean(y, axis=-1, keepdims=True)
        var = jnp.mean((y - mu) ** 2, axis=-1, keepdims=True)
        o_ref[0] = (y - mu) * jax.lax.rsqrt(var + ln_eps) * g_ref[...] + bt_ref[...]


def attention_pallas(q, k, v, h, wo, bo, g, bt, *, num_heads, ln_eps,
                     mxu_dtype=jnp.bfloat16, tile_q=256, tile_k=256):
    B, N, H = h.shape
    d = H // num_heads
    tq = _pick_tile(N, tile_q)
    tk = _pick_tile(N, tile_k)
    approx = mxu_dtype == jnp.bfloat16
    qspec = pl.BlockSpec((1, tq, H), lambda b, qi, ki: (b, qi, 0))
    kspec = pl.BlockSpec((1, tk, H), lambda b, qi, ki: (b, ki, 0))
    wspec = pl.BlockSpec((H, H), lambda b, qi, ki: (0, 0))
    vecspec = pl.BlockSpec((1, H), lambda b, qi, ki: (0, 0))
    flops = 4 * B * num_heads * N * N * d + 2 * B * N * H * H
    return pl.pallas_call(
        functools.partial(_attn_kernel, num_heads=num_heads, head_dim=d,
                          ln_eps=ln_eps, mxu_dtype=mxu_dtype,
                          approx_recip=approx),
        out_shape=jax.ShapeDtypeStruct((B, N, H), jnp.float32),
        grid=(B, N // tq, N // tk),
        in_specs=[qspec, kspec, kspec, qspec, wspec, vecspec, vecspec, vecspec],
        out_specs=pl.BlockSpec((1, tq, H), lambda b, qi, ki: (b, qi, 0)),
        scratch_shapes=[pltpu.VMEM((num_heads, tq, 1), jnp.float32),
                        pltpu.VMEM((num_heads, tq, 1), jnp.float32),
                        pltpu.VMEM((num_heads, tq, d), jnp.float32)],
        compiler_params=pltpu.CompilerParams(
            dimension_semantics=("parallel", "parallel", "arbitrary"),
            vmem_limit_bytes=_vmem_limit_bytes()),
        cost_estimate=pl.CostEstimate(
            flops=flops,
            transcendentals=B * num_heads * N * N,
            bytes_accessed=4 * 5 * B * N * H + wo.dtype.itemsize * H * H),
    )(q, k, v, h, wo, bo, g, bt)


# ---------------------------------------------------------------------------
# Kernel 4: row-tiled FFN block:  LN(gelu_new(x @ W1 + b1) @ W2 + b2 + x)
# ---------------------------------------------------------------------------
def _ffn_kernel(x_ref, w1_ref, b1_ref, w2_ref, b2_ref, g_ref, bt_ref, o_ref,
                *, ln_eps, mxu_dtype):
    x = x_ref[...]                                                   # (tm, H) f32
    mid = _gelu_new(jnp.dot(x.astype(mxu_dtype), w1_ref[...],
                            preferred_element_type=jnp.float32) + b1_ref[...])
    y = jnp.dot(mid.astype(mxu_dtype), w2_ref[...],
                preferred_element_type=jnp.float32) + b2_ref[...] + x
    mu = jnp.mean(y, axis=-1, keepdims=True)
    var = jnp.mean((y - mu) ** 2, axis=-1, keepdims=True)
    o_ref[...] = (y - mu) * jax.lax.rsqrt(var + ln_eps) * g_ref[...] + bt_ref[...]


def ffn_pallas(x2d, w1, b1, w2, b2, g, bt, *, ln_eps, mxu_dtype=jnp.bfloat16,
               tile_m=256):
    M, H = x2d.shape
    inter = w1.shape[1]
    tm = _pick_tile(M, tile_m)
    return pl.pallas_call(
        functools.partial(_ffn_kernel, ln_eps=ln_eps, mxu_dtype=mxu_dtype),
        out_shape=jax.ShapeDtypeStruct((M, H), jnp.float32),
        grid=(M // tm,),
        in_specs=[
            pl.BlockSpec((tm, H), lambda i: (i, 0)),
            pl.BlockSpec((H, inter), lambda i: (0, 0)),
            pl.BlockSpec((1, inter), lambda i: (0, 0)),
            pl.BlockSpec((inter, H), lambda i: (0, 0)),
            pl.BlockSpec((1, H), lambda i: (0, 0)),
            pl.BlockSpec((1, H), lambda i: (0, 0)),
            pl.BlockSpec((1, H), lambda i: (0, 0)),
        ],
        out_specs=pl.BlockSpec((tm, H), lambda i: (i, 0)),
        compiler_params=pltpu.CompilerParams(
            dimension_semantics=("parallel",),
            vmem_limit_bytes=_vmem_limit_bytes()),
        cost_estimate=pl.CostEstimate(
            flops=4 * M * H * inter,
            transcendentals=M * inter,
            bytes_accessed=4 * 2 * M * H + w1.dtype.itemsize * 2 * H * inter),
    )(x2d, w1, b1, w2, b2, g, bt)


# ---------------------------------------------------------------------------
# Kernel 5: last decoder linear fused with the mean over the sequence
# (accumulating reduction over N tiles, init/finalize via pl.when).
# ---------------------------------------------------------------------------
def _dec_mean_kernel(x_ref, w_ref, b_ref, o_ref, acc_ref, *, inv_n, mxu_dtype):
    @pl.when(pl.program_id(1) == 0)
    def _init():
        acc_ref[...] = jnp.zeros(acc_ref.shape, jnp.float32)

    part = jnp.dot(x_ref[0].astype(mxu_dtype), w_ref[...],
                   preferred_element_type=jnp.float32)               # (tn, C)
    acc_ref[...] += jnp.sum(part, axis=0, keepdims=True)

    @pl.when(pl.program_id(1) == pl.num_programs(1) - 1)
    def _finalize():
        o_ref[0] = acc_ref[...] * inv_n + b_ref[...]


def decode_mean_pallas(h3, w, b, *, mxu_dtype=jnp.bfloat16, tile_n=512):
    B, N, H = h3.shape
    C = w.shape[1]
    tn = _pick_tile(N, tile_n)
    out = pl.pallas_call(
        functools.partial(_dec_mean_kernel, inv_n=1.0 / N, mxu_dtype=mxu_dtype),
        out_shape=jax.ShapeDtypeStruct((B, 1, C), jnp.float32),
        grid=(B, N // tn),
        in_specs=[
            pl.BlockSpec((1, tn, H), lambda bi, ti: (bi, ti, 0)),
            pl.BlockSpec((H, C), lambda bi, ti: (0, 0)),
            pl.BlockSpec((1, C), lambda bi, ti: (0, 0)),
        ],
        out_specs=pl.BlockSpec((1, 1, C), lambda bi, ti: (bi, 0, 0)),
        scratch_shapes=[pltpu.VMEM((1, C), jnp.float32)],
        compiler_params=pltpu.CompilerParams(
            dimension_semantics=("parallel", "arbitrary"),
            vmem_limit_bytes=_vmem_limit_bytes()),
        cost_estimate=pl.CostEstimate(
            flops=2 * B * N * H * C,
            transcendentals=0,
            bytes_accessed=4 * B * N * H + w.dtype.itemsize * H * C + 4 * B * C),
    )(h3, w, b)
    return out[:, 0, :]


# ---------------------------------------------------------------------------
# Kernel 6: final_embedder MLP on the pooled (B, n_out_nodes) features (tiny).
# ---------------------------------------------------------------------------
def _head_kernel(x_ref, w0_ref, b0_ref, w1_ref, b1_ref, w2_ref, b2_ref, o_ref,
                 *, mxu_dtype):
    y = jnp.dot(x_ref[...].astype(mxu_dtype), w0_ref[...],
                preferred_element_type=jnp.float32) + b0_ref[...]
    y = jnp.dot(y.astype(mxu_dtype), w1_ref[...],
                preferred_element_type=jnp.float32) + b1_ref[...]
    y = jnp.dot(y.astype(mxu_dtype), w2_ref[...],
                preferred_element_type=jnp.float32) + b2_ref[...]
    o_ref[...] = y


def head_pallas(x, w0, b0, w1, b1, w2, b2, *, mxu_dtype=jnp.bfloat16):
    B = x.shape[0]
    nc = w2.shape[1]
    return pl.pallas_call(
        functools.partial(_head_kernel, mxu_dtype=mxu_dtype),
        out_shape=jax.ShapeDtypeStruct((B, nc), jnp.float32),
        compiler_params=pltpu.CompilerParams(vmem_limit_bytes=_vmem_limit_bytes()),
    )(x, w0, b0, w1, b1, w2, b2)


# ---------------------------------------------------------------------------
# Host-side parameter plumbing: inference-mode BN folding, fused QKV weights.
# ---------------------------------------------------------------------------
def fold_bn_into_linear(w, b, bn, eps=1e-5):
    """Inference-mode BatchNorm applied *before* an (in,out) linear, folded in."""
    scale = bn["gamma"] / jnp.sqrt(bn["var"] + eps)
    shift = bn["beta"] - bn["mean"] * scale
    return scale[:, None] * w, shift @ w + b


def transformer_forward_pallas(x, p, *, cfg, mxu_dtype=jnp.bfloat16):
    H = cfg["hidden_size"]
    nh = cfg["num_attention_heads"]
    L = cfg["num_hidden_layers"]
    eps_ln = cfg["layer_norm_eps"]
    B, N, F = x.shape

    def row(v):
        return v.reshape(1, -1)

    def cast(w):
        return w.astype(mxu_dtype)

    # Fold inference-mode BatchNorms into the following Linear.
    w_emb, b_emb = fold_bn_into_linear(p["emb_w"], p["emb_b"], p["input_bn"])
    w_map, b_map = fold_bn_into_linear(p["map_w"], p["map_b"], p["embed_bn"])
    w_d1, b_d1 = fold_bn_into_linear(p["dec1_w"], p["dec1_b"], p["dec_bn0"])
    w_d2, b_d2 = fold_bn_into_linear(p["dec2_w"], p["dec2_b"], p["dec_bn1"])

    # Fused QKV projection weights (H, 3H); bf16 weights for the MXU fast path.
    wqkv = cast(jnp.concatenate([p["wq"], p["wk"], p["wv"]], axis=1))
    bqkv = row(jnp.concatenate([p["bq"], p["bk"], p["bv"]]))
    wo = cast(p["wo"])
    w1 = cast(p["ffn_w1"])
    w2 = cast(p["ffn_w2"])

    x2d = x.reshape(B * N, F)
    # input_bn + embedder + relu   (embed_bn folded into mapping-in below)
    h2d = linear_pallas(x2d, cast(w_emb), row(b_emb), act="relu",
                        mxu_dtype=mxu_dtype)
    # encoder: embedding_hidden_mapping_in (embed_bn folded in)
    h2d = linear_pallas(h2d, cast(w_map), row(b_map), act="none",
                        mxu_dtype=mxu_dtype)

    # ALBERT-style weight sharing: one layer applied num_hidden_layers times.
    for _ in range(L):
        q2d, k2d, v2d = qkv_pallas(h2d, wqkv, bqkv, hidden=H, mxu_dtype=mxu_dtype)
        h3 = attention_pallas(
            q2d.reshape(B, N, H), k2d.reshape(B, N, H), v2d.reshape(B, N, H),
            h2d.reshape(B, N, H), wo, row(p["bo"]),
            row(p["ln_attn_g"]), row(p["ln_attn_b"]),
            num_heads=nh, ln_eps=eps_ln, mxu_dtype=mxu_dtype)
        h2d = ffn_pallas(h3.reshape(B * N, H), w1, row(p["ffn_b1"]),
                         w2, row(p["ffn_b2"]),
                         row(p["ln_ffn_g"]), row(p["ln_ffn_b"]),
                         ln_eps=eps_ln, mxu_dtype=mxu_dtype)

    # decoders + gelu_new (decoder_bn folded into the next linear)
    h2d = linear_pallas(h2d, cast(p["dec0_w"]), row(p["dec0_b"]), act="gelu_new",
                        mxu_dtype=mxu_dtype)
    h2d = linear_pallas(h2d, cast(w_d1), row(b_d1), act="gelu_new",
                        mxu_dtype=mxu_dtype)
    # last decoder linear fused with the mean over the sequence
    pooled = decode_mean_pallas(h2d.reshape(B, N, H), cast(w_d2), row(b_d2),
                                mxu_dtype=mxu_dtype)
    # final_embedder MLP (softmax=False, sigmoid=False, pretrain=False)
    return head_pallas(pooled, cast(p["fin0_w"]), row(p["fin0_b"]),
                       cast(p["fin1_w"]), row(p["fin1_b"]),
                       cast(p["fin2_w"]), row(p["fin2_b"]), mxu_dtype=mxu_dtype)


# ---------------------------------------------------------------------------
# Parameters (deterministic) and a pure-JAX reference mirroring the PyTorch
# forward (eval-mode BatchNorm) for correctness checking.
# ---------------------------------------------------------------------------
def make_params(key, cfg):
    F, E, H = cfg["feature_size"], cfg["embedding_size"], cfg["hidden_size"]
    inter, NO, NC = cfg["intermediate_size"], cfg["n_out_nodes"], cfg["nclasses"]
    keys = iter(jax.random.split(key, 64))

    def lin(fan_in, fan_out):
        kw, kb = jax.random.split(next(keys))
        w = jax.random.normal(kw, (fan_in, fan_out), jnp.float32) / jnp.sqrt(fan_in)
        b = 0.1 * jax.random.normal(kb, (fan_out,), jnp.float32)
        return w, b

    def bn(c):
        k1, k2, k3, k4 = jax.random.split(next(keys), 4)
        return dict(gamma=1.0 + 0.1 * jax.random.normal(k1, (c,), jnp.float32),
                    beta=0.1 * jax.random.normal(k2, (c,), jnp.float32),
                    mean=0.1 * jax.random.normal(k3, (c,), jnp.float32),
                    var=0.8 + 0.4 * jax.random.uniform(k4, (c,), jnp.float32))

    def ln(c):
        k1, k2 = jax.random.split(next(keys))
        return (1.0 + 0.1 * jax.random.normal(k1, (c,), jnp.float32),
                0.1 * jax.random.normal(k2, (c,), jnp.float32))

    p = {}
    p["input_bn"] = bn(F)
    p["emb_w"], p["emb_b"] = lin(F, E)
    p["embed_bn"] = bn(E)
    p["map_w"], p["map_b"] = lin(E, H)
    p["wq"], p["bq"] = lin(H, H)
    p["wk"], p["bk"] = lin(H, H)
    p["wv"], p["bv"] = lin(H, H)
    p["wo"], p["bo"] = lin(H, H)
    p["ln_attn_g"], p["ln_attn_b"] = ln(H)
    p["ffn_w1"], p["ffn_b1"] = lin(H, inter)
    p["ffn_w2"], p["ffn_b2"] = lin(inter, H)
    p["ln_ffn_g"], p["ln_ffn_b"] = ln(H)
    p["dec0_w"], p["dec0_b"] = lin(H, H)
    p["dec1_w"], p["dec1_b"] = lin(H, H)
    p["dec2_w"], p["dec2_b"] = lin(H, NO)
    p["dec_bn0"] = bn(H)
    p["dec_bn1"] = bn(H)
    p["fin0_w"], p["fin0_b"] = lin(NO, NO // 2)
    p["fin1_w"], p["fin1_b"] = lin(NO // 2, NO // 4)
    p["fin2_w"], p["fin2_b"] = lin(NO // 4, NC)
    return p


def reference_forward(x, p, cfg):
    HIGH = jax.lax.Precision.HIGHEST
    mm = lambda a, b: jnp.matmul(a, b, precision=HIGH)
    nh = cfg["num_attention_heads"]
    H = cfg["hidden_size"]
    d = H // nh
    L = cfg["num_hidden_layers"]
    eps_bn, eps_ln = 1e-5, cfg["layer_norm_eps"]

    def bn(t, q):
        return (t - q["mean"]) / jnp.sqrt(q["var"] + eps_bn) * q["gamma"] + q["beta"]

    def ln(t, g, b):
        mu = jnp.mean(t, -1, keepdims=True)
        v = jnp.mean((t - mu) ** 2, -1, keepdims=True)
        return (t - mu) / jnp.sqrt(v + eps_ln) * g + b

    B, N, _ = x.shape
    h = bn(x, p["input_bn"])
    h = jnp.maximum(mm(h, p["emb_w"]) + p["emb_b"], 0.0)
    h = bn(h, p["embed_bn"])
    h = mm(h, p["map_w"]) + p["map_b"]
    for _ in range(L):
        def split(t):
            return t.reshape(B, N, nh, d).transpose(0, 2, 1, 3)
        q = split(mm(h, p["wq"]) + p["bq"])
        k = split(mm(h, p["wk"]) + p["bk"])
        v = split(mm(h, p["wv"]) + p["bv"])
        s = jnp.einsum("bhqd,bhkd->bhqk", q, k, precision=HIGH) / jnp.sqrt(
            jnp.float32(d))
        a = jax.nn.softmax(s, axis=-1)
        ctx = jnp.einsum("bhqk,bhkd->bhqd", a, v,
                         precision=HIGH).transpose(0, 2, 1, 3).reshape(B, N, H)
        attn_out = ln(h + mm(ctx, p["wo"]) + p["bo"],
                      p["ln_attn_g"], p["ln_attn_b"])
        f = mm(_gelu_new(mm(attn_out, p["ffn_w1"]) + p["ffn_b1"]),
               p["ffn_w2"]) + p["ffn_b2"]
        h = ln(f + attn_out, p["ln_ffn_g"], p["ln_ffn_b"])
    h = _gelu_new(mm(h, p["dec0_w"]) + p["dec0_b"])
    h = bn(h, p["dec_bn0"])
    h = _gelu_new(mm(h, p["dec1_w"]) + p["dec1_b"])
    h = bn(h, p["dec_bn1"])
    h = mm(h, p["dec2_w"]) + p["dec2_b"]
    h = jnp.mean(h, axis=1)
    h = mm(h, p["fin0_w"]) + p["fin0_b"]
    h = mm(h, p["fin1_w"]) + p["fin1_b"]
    h = mm(h, p["fin2_w"]) + p["fin2_b"]
    return h


if __name__ == "__main__":
    cfg = dict(feature_size=8, embedding_size=16, hidden_size=32,
               num_attention_heads=4, intermediate_size=64,
               num_hidden_layers=2, n_out_nodes=32, nclasses=4,
               layer_norm_eps=1e-12)
    B, N = 2, 16

    key = jax.random.PRNGKey(0)
    kx, kp = jax.random.split(key)
    x = jax.random.normal(kx, (B, N, cfg["feature_size"]), jnp.float32)
    params = make_params(kp, cfg)

    ref = reference_forward(x, params, cfg)

    # Exact-semantics check: f32 MXU operands.
    fwd_f32 = jax.jit(functools.partial(transformer_forward_pallas, cfg=cfg,
                                        mxu_dtype=jnp.float32))
    out_f32 = jax.block_until_ready(fwd_f32(x, params))
    assert out_f32.shape == (B, cfg["nclasses"]), out_f32.shape
    err_f32 = float(jnp.max(jnp.abs(out_f32 - ref)))
    assert jnp.allclose(out_f32, ref, rtol=3e-3, atol=3e-3), err_f32

    # Fast path: bf16 MXU operands, f32 accumulation / softmax / LayerNorm stats.
    fwd_bf16 = jax.jit(functools.partial(transformer_forward_pallas, cfg=cfg,
                                         mxu_dtype=jnp.bfloat16))
    out_bf16 = jax.block_until_ready(fwd_bf16(x, params))
    err_bf16 = float(jnp.max(jnp.abs(out_bf16 - ref)))
    assert jnp.allclose(out_bf16, ref, rtol=1e-1, atol=1e-1), err_bf16

    print("KERNEL_OK")
</pallas_src>

<mosaic_0001>
module attributes {stable_mosaic.version = 11 : i64} {
  func.func @_linear_kernel(%arg0: i32, %arg1: memref<32x8xf32, #tpu.memory_space<vmem>>, %arg2: memref<8x16xf32, #tpu.memory_space<vmem>>, %arg3: memref<1x16xf32, #tpu.memory_space<vmem>>, %arg4: memref<32x16xf32, #tpu.memory_space<vmem>>) attributes {dimension_semantics = [#tpu.dimension_semantics<parallel>], iteration_bounds = array<i64: 1>, scalar_prefetch = 0 : i64, scratch_operands = 0 : i64, tpu.core_type = #tpu.core_type<tc>, window_params = [{transform_indices = @transform_0, window_bounds = array<i64: 32, 8>}, {pipeline_mode = #tpu.pipeline_mode<synchronous>, transform_indices = @transform_1, window_bounds = array<i64: 8, 16>}, {pipeline_mode = #tpu.pipeline_mode<synchronous>, transform_indices = @transform_2, window_bounds = array<i64: 1, 16>}, {transform_indices = @transform_3, window_bounds = array<i64: 32, 16>}]} {
    %c0 = arith.constant 0 : index
    %c0_0 = arith.constant 0 : index
    %0 = vector.load %arg1[%c0, %c0_0] : memref<32x8xf32, #tpu.memory_space<vmem>>, vector<32x8xf32>
    %c0_1 = arith.constant 0 : index
    %c0_2 = arith.constant 0 : index
    %1 = vector.load %arg2[%c0_1, %c0_2] : memref<8x16xf32, #tpu.memory_space<vmem>>, vector<8x16xf32>
    %cst = arith.constant dense<0.000000e+00> : vector<32x16xf32>
    %2 = tpu.matmul %0, %1, %cst {dimension_numbers = #tpu.dot_dimension_numbers<[1], [0], [0], [1], [0, 0, 1, 1], [], []>} : vector<32x8xf32>, vector<8x16xf32>, vector<32x16xf32> -> vector<32x16xf32>
    %c0_3 = arith.constant 0 : index
    %c0_4 = arith.constant 0 : index
    %3 = vector.load %arg3[%c0_3, %c0_4] : memref<1x16xf32, #tpu.memory_space<vmem>>, vector<1x16xf32>
    %4 = vector.broadcast %3 : vector<1x16xf32> to vector<32x16xf32>
    %5 = arith.addf %2, %4 : vector<32x16xf32>
    %cst_5 = arith.constant 0.000000e+00 : f32
    %6 = vector.broadcast %cst_5 : f32 to vector<32x16xf32>
    %7 = arith.maximumf %5, %6 : vector<32x16xf32>
    %c0_6 = arith.constant 0 : index
    %c0_7 = arith.constant 0 : index
    %8 = vector.load %arg4[%c0_6, %c0_7] : memref<32x16xf32, #tpu.memory_space<vmem>>, vector<32x16xf32>
    tpu.vector_store %arg4[%c0_6, %c0_7], %7 {strides = array<i32>} : memref<32x16xf32, #tpu.memory_space<vmem>>, vector<32x16xf32>,
    return
  }
  func.func @transform_0(%arg0: i32) -> (i32, i32) {
    %c0_i32 = arith.constant 0 : i32
    %c0_i32_0 = arith.constant 0 : i32
    return %arg0, %c0_i32 : i32, i32
  }
  func.func @transform_1(%arg0: i32) -> (i32, i32) {
    %c0_i32 = arith.constant 0 : i32
    %c0_i32_0 = arith.constant 0 : i32
    %c0_i32_1 = arith.constant 0 : i32
    return %c0_i32, %c0_i32_0 : i32, i32
  }
  func.func @transform_2(%arg0: i32) -> (i32, i32) {
    %c0_i32 = arith.constant 0 : i32
    %c0_i32_0 = arith.constant 0 : i32
    %c0_i32_1 = arith.constant 0 : i32
    return %c0_i32, %c0_i32_0 : i32, i32
  }
  func.func @transform_3(%arg0: i32) -> (i32, i32) {
    %c0_i32 = arith.constant 0 : i32
    %c0_i32_0 = arith.constant 0 : i32
    return %arg0, %c0_i32 : i32, i32
  }
}

module attributes {stable_mosaic.version = 11 : i64} {
  func.func @_linear_kernel(%arg0: i32, %arg1: memref<32x16xf32, #tpu.memory_space<vmem>>, %arg2: memref<16x32xf32, #tpu.memory_space<vmem>>, %arg3: memref<1x32xf32, #tpu.memory_space<vmem>>, %arg4: memref<32x32xf32, #tpu.memory_space<vmem>>) attributes {dimension_semantics = [#tpu.dimension_semantics<parallel>], iteration_bounds = array<i64: 1>, scalar_prefetch = 0 : i64, scratch_operands = 0 : i64, tpu.core_type = #tpu.core_type<tc>, window_params = [{transform_indices = @transform_0, window_bounds = array<i64: 32, 16>}, {pipeline_mode = #tpu.pipeline_mode<synchronous>, transform_indices = @transform_1, window_bounds = array<i64: 16, 32>}, {pipeline_mode = #tpu.pipeline_mode<synchronous>, transform_indices = @transform_2, window_bounds = array<i64: 1, 32>}, {transform_indices = @transform_3, window_bounds = array<i64: 32, 32>}]} {
    %c0 = arith.constant 0 : index
    %c0_0 = arith.constant 0 : index
    %0 = vector.load %arg1[%c0, %c0_0] : memref<32x16xf32, #tpu.memory_space<vmem>>, vector<32x16xf32>
    %c0_1 = arith.constant 0 : index
    %c0_2 = arith.constant 0 : index
    %1 = vector.load %arg2[%c0_1, %c0_2] : memref<16x32xf32, #tpu.memory_space<vmem>>, vector<16x32xf32>
    %cst = arith.constant dense<0.000000e+00> : vector<32x32xf32>
    %2 = tpu.matmul %0, %1, %cst {dimension_numbers = #tpu.dot_dimension_numbers<[1], [0], [0], [1], [0, 0, 1, 1], [], []>} : vector<32x16xf32>, vector<16x32xf32>, vector<32x32xf32> -> vector<32x32xf32>
    %c0_3 = arith.constant 0 : index
    %c0_4 = arith.constant 0 : index
    %3 = vector.load %arg3[%c0_3, %c0_4] : memref<1x32xf32, #tpu.memory_space<vmem>>, vector<1x32xf32>
    %4 = vector.broadcast %3 : vector<1x32xf32> to vector<32x32xf32>
    %5 = arith.addf %2, %4 : vector<32x32xf32>
    %c0_5 = arith.constant 0 : index
    %c0_6 = arith.constant 0 : index
    %6 = vector.load %arg4[%c0_5, %c0_6] : memref<32x32xf32, #tpu.memory_space<vmem>>, vector<32x32xf32>
    tpu.vector_store %arg4[%c0_5, %c0_6], %5 {strides = array<i32>} : memref<32x32xf32, #tpu.memory_space<vmem>>, vector<32x32xf32>,
    return
  }
  func.func @transform_0(%arg0: i32) -> (i32, i32) {
    %c0_i32 = arith.constant 0 : i32
    %c0_i32_0 = arith.constant 0 : i32
    return %arg0, %c0_i32 : i32, i32
  }
  func.func @transform_1(%arg0: i32) -> (i32, i32) {
    %c0_i32 = arith.constant 0 : i32
    %c0_i32_0 = arith.constant 0 : i32
    %c0_i32_1 = arith.constant 0 : i32
    return %c0_i32, %c0_i32_0 : i32, i32
  }
  func.func @transform_2(%arg0: i32) -> (i32, i32) {
    %c0_i32 = arith.constant 0 : i32
    %c0_i32_0 = arith.constant 0 : i32
    %c0_i32_1 = arith.constant 0 : i32
    return %c0_i32, %c0_i32_0 : i32, i32
  }
  func.func @transform_3(%arg0: i32) -> (i32, i32) {
    %c0_i32 = arith.constant 0 : i32
    %c0_i32_0 = arith.constant 0 : i32
    return %arg0, %c0_i32 : i32, i32
  }
}

module attributes {stable_mosaic.version = 11 : i64} {
  func.func @_qkv_kernel(%arg0: i32, %arg1: memref<32x32xf32, #tpu.memory_space<vmem>>, %arg2: memref<32x96xf32, #tpu.memory_space<vmem>>, %arg3: memref<1x96xf32, #tpu.memory_space<vmem>>, %arg4: memref<32x32xf32, #tpu.memory_space<vmem>>, %arg5: memref<32x32xf32, #tpu.memory_space<vmem>>, %arg6: memref<32x32xf32, #tpu.memory_space<vmem>>) attributes {dimension_semantics = [#tpu.dimension_semantics<parallel>], iteration_bounds = array<i64: 1>, scalar_prefetch = 0 : i64, scratch_operands = 0 : i64, tpu.core_type = #tpu.core_type<tc>, window_params = [{transform_indices = @transform_0, window_bounds = array<i64: 32, 32>}, {pipeline_mode = #tpu.pipeline_mode<synchronous>, transform_indices = @transform_1, window_bounds = array<i64: 32, 96>}, {pipeline_mode = #tpu.pipeline_mode<synchronous>, transform_indices = @transform_2, window_bounds = array<i64: 1, 96>}, {transform_indices = @transform_3, window_bounds = array<i64: 32, 32>}, {transform_indices = @transform_4, window_bounds = array<i64: 32, 32>}, {transform_indices = @transform_5, window_bounds = array<i64: 32, 32>}]} {
    %c0 = arith.constant 0 : index
    %c0_0 = arith.constant 0 : index
    %0 = vector.load %arg1[%c0, %c0_0] : memref<32x32xf32, #tpu.memory_space<vmem>>, vector<32x32xf32>
    %c0_1 = arith.constant 0 : index
    %c0_2 = arith.constant 0 : index
    %1 = vector.load %arg2[%c0_1, %c0_2] : memref<32x96xf32, #tpu.memory_space<vmem>>, vector<32x96xf32>
    %cst = arith.constant dense<0.000000e+00> : vector<32x96xf32>
    %2 = tpu.matmul %0, %1, %cst {dimension_numbers = #tpu.dot_dimension_numbers<[1], [0], [0], [1], [0, 0, 1, 1], [], []>} : vector<32x32xf32>, vector<32x96xf32>, vector<32x96xf32> -> vector<32x96xf32>
    %c0_3 = arith.constant 0 : index
    %c0_4 = arith.constant 0 : index
    %3 = vector.load %arg3[%c0_3, %c0_4] : memref<1x96xf32, #tpu.memory_space<vmem>>, vector<1x96xf32>
    %4 = vector.broadcast %3 : vector<1x96xf32> to vector<32x96xf32>
    %5 = arith.addf %2, %4 : vector<32x96xf32>
    %6 = vector.extract_strided_slice %5 {offsets = [0, 0], sizes = [32, 32], strides = [1, 1]} : vector<32x96xf32> to vector<32x32xf32>
    %c0_5 = arith.constant 0 : index
    %c0_6 = arith.constant 0 : index
    %7 = vector.load %arg4[%c0_5, %c0_6] : memref<32x32xf32, #tpu.memory_space<vmem>>, vector<32x32xf32>
    tpu.vector_store %arg4[%c0_5, %c0_6], %6 {strides = array<i32>} : memref<32x32xf32, #tpu.memory_space<vmem>>, vector<32x32xf32>,
    %8 = vector.extract_strided_slice %5 {offsets = [0, 32], sizes = [32, 32], strides = [1, 1]} : vector<32x96xf32> to vector<32x32xf32>
    %c0_7 = arith.constant 0 : index
    %c0_8 = arith.constant 0 : index
    %9 = vector.load %arg5[%c0_7, %c0_8] : memref<32x32xf32, #tpu.memory_space<vmem>>, vector<32x32xf32>
    tpu.vector_store %arg5[%c0_7, %c0_8], %8 {strides = array<i32>} : memref<32x32xf32, #tpu.memory_space<vmem>>, vector<32x32xf32>,
    %10 = vector.extract_strided_slice %5 {offsets = [0, 64], sizes = [32, 32], strides = [1, 1]} : vector<32x96xf32> to vector<32x32xf32>
    %c0_9 = arith.constant 0 : index
    %c0_10 = arith.constant 0 : index
    %11 = vector.load %arg6[%c0_9, %c0_10] : memref<32x32xf32, #tpu.memory_space<vmem>>, vector<32x32xf32>
    tpu.vector_store %arg6[%c0_9, %c0_10], %10 {strides = array<i32>} : memref<32x32xf32, #tpu.memory_space<vmem>>, vector<32x32xf32>,
    return
  }
  func.func @transform_0(%arg0: i32) -> (i32, i32) {
    %c0_i32 = arith.constant 0 : i32
    %c0_i32_0 = arith.constant 0 : i32
    return %arg0, %c0_i32 : i32, i32
  }
  func.func @transform_1(%arg0: i32) -> (i32, i32) {
    %c0_i32 = arith.constant 0 : i32
    %c0_i32_0 = arith.constant 0 : i32
    %c0_i32_1 = arith.constant 0 : i32
    return %c0_i32, %c0_i32_0 : i32, i32
  }
  func.func @transform_2(%arg0: i32) -> (i32, i32) {
    %c0_i32 = arith.constant 0 : i32
    %c0_i32_0 = arith.constant 0 : i32
    %c0_i32_1 = arith.constant 0 : i32
    return %c0_i32, %c0_i32_0 : i32, i32
  }
  func.func @transform_3(%arg0: i32) -> (i32, i32) {
    %c0_i32 = arith.constant 0 : i32
    %c0_i32_0 = arith.constant 0 : i32
    return %arg0, %c0_i32 : i32, i32
  }
  func.func @transform_4(%arg0: i32) -> (i32, i32) {
    %c0_i32 = arith.constant 0 : i32
    %c0_i32_0 = arith.constant 0 : i32
    return %arg0, %c0_i32 : i32, i32
  }
  func.func @transform_5(%arg0: i32) -> (i32, i32) {
    %c0_i32 = arith.constant 0 : i32
    %c0_i32_0 = arith.constant 0 : i32
    return %arg0, %c0_i32 : i32, i32
  }
}

module attributes {stable_mosaic.version = 11 : i64} {
  func.func @_attn_kernel(%arg0: i32, %arg1: i32, %arg2: i32, %arg3: memref<1x16x32xf32, #tpu.memory_space<vmem>>, %arg4: memref<1x16x32xf32, #tpu.memory_space<vmem>>, %arg5: memref<1x16x32xf32, #tpu.memory_space<vmem>>, %arg6: memref<1x16x32xf32, #tpu.memory_space<vmem>>, %arg7: memref<32x32xf32, #tpu.memory_space<vmem>>, %arg8: memref<1x32xf32, #tpu.memory_space<vmem>>, %arg9: memref<1x32xf32, #tpu.memory_space<vmem>>, %arg10: memref<1x32xf32, #tpu.memory_space<vmem>>, %arg11: memref<1x16x32xf32, #tpu.memory_space<vmem>>, %arg12: memref<4x16x1xf32, #tpu.memory_space<vmem>>, %arg13: memref<4x16x1xf32, #tpu.memory_space<vmem>>, %arg14: memref<4x16x8xf32, #tpu.memory_space<vmem>>) attributes {dimension_semantics = [#tpu.dimension_semantics<parallel>, #tpu.dimension_semantics<parallel>, #tpu.dimension_semantics<arbitrary>], iteration_bounds = array<i64: 2, 1, 1>, scalar_prefetch = 0 : i64, scratch_operands = 3 : i64, tpu.core_type = #tpu.core_type<tc>, window_params = [{transform_indices = @transform_0, window_bounds = array<i64: 1, 16, 32>}, {transform_indices = @transform_1, window_bounds = array<i64: 1, 16, 32>}, {transform_indices = @transform_2, window_bounds = array<i64: 1, 16, 32>}, {transform_indices = @transform_3, window_bounds = array<i64: 1, 16, 32>}, {pipeline_mode = #tpu.pipeline_mode<synchronous>, transform_indices = @transform_4, window_bounds = array<i64: 32, 32>}, {pipeline_mode = #tpu.pipeline_mode<synchronous>, transform_indices = @transform_5, window_bounds = array<i64: 1, 32>}, {pipeline_mode = #tpu.pipeline_mode<synchronous>, transform_indices = @transform_6, window_bounds = array<i64: 1, 32>}, {pipeline_mode = #tpu.pipeline_mode<synchronous>, transform_indices = @transform_7, window_bounds = array<i64: 1, 32>}, {transform_indices = @transform_8, window_bounds = array<i64: 1, 16, 32>}]} {
    %c0_i32 = arith.constant 0 : i32
    %0 = arith.cmpi eq, %arg2, %c0_i32 : i32
    %1 = arith.extui %0 : i1 to i32
    %c0_i32_0 = arith.constant 0 : i32
    %2 = arith.cmpi ne, %1, %c0_i32_0 : i32
    scf.if %2 {
      %cst_99 = arith.constant 0xFF800000 : f32
      %160 = vector.broadcast %cst_99 : f32 to vector<4x16x1xf32>
      %c0_100 = arith.constant 0 : index
      %c0_101 = arith.constant 0 : index
      %c0_102 = arith.constant 0 : index
      %161 = vector.load %arg12[%c0_100, %c0_101, %c0_102] : memref<4x16x1xf32, #tpu.memory_space<vmem>>, vector<4x16x1xf32>
      tpu.vector_store %arg12[%c0_100, %c0_101, %c0_102], %160 {strides = array<i32>} : memref<4x16x1xf32, #tpu.memory_space<vmem>>, vector<4x16x1xf32>,
      %cst_103 = arith.constant 0.000000e+00 : f32
      %162 = vector.broadcast %cst_103 : f32 to vector<4x16x1xf32>
      %c0_104 = arith.constant 0 : index
      %c0_105 = arith.constant 0 : index
      %c0_106 = arith.constant 0 : index
      %163 = vector.load %arg13[%c0_104, %c0_105, %c0_106] : memref<4x16x1xf32, #tpu.memory_space<vmem>>, vector<4x16x1xf32>
      tpu.vector_store %arg13[%c0_104, %c0_105, %c0_106], %162 {strides = array<i32>} : memref<4x16x1xf32, #tpu.memory_space<vmem>>, vector<4x16x1xf32>,
      %cst_107 = arith.constant 0.000000e+00 : f32
      %164 = vector.broadcast %cst_107 : f32 to vector<4x16x8xf32>
      %c0_108 = arith.constant 0 : index
      %c0_109 = arith.constant 0 : index
      %c0_110 = arith.constant 0 : index
      %165 = vector.load %arg14[%c0_108, %c0_109, %c0_110] : memref<4x16x8xf32, #tpu.memory_space<vmem>>, vector<4x16x8xf32>
      tpu.vector_store %arg14[%c0_108, %c0_109, %c0_110], %164 {strides = array<i32>} : memref<4x16x8xf32, #tpu.memory_space<vmem>>, vector<4x16x8xf32>,
    } else {
    }
    %c0 = arith.constant 0 : index
    %c0_1 = arith.constant 0 : index
    %c0_2 = arith.constant 0 : index
    %3 = vector.load %arg3[%c0, %c0_1, %c0_2] : memref<1x16x32xf32, #tpu.memory_space<vmem>>, vector<1x16x32xf32>
    %4 = vector.shape_cast %3 : vector<1x16x32xf32> to vector<16x32xf32>
    %c0_3 = arith.constant 0 : index
    %c0_4 = arith.constant 0 : index
    %c0_5 = arith.constant 0 : index
    %5 = vector.load %arg4[%c0_3, %c0_4, %c0_5] : memref<1x16x32xf32, #tpu.memory_space<vmem>>, vector<1x16x32xf32>
    %6 = vector.shape_cast %5 : vector<1x16x32xf32> to vector<16x32xf32>
    %c0_6 = arith.constant 0 : index
    %c0_7 = arith.constant 0 : index
    %c0_8 = arith.constant 0 : index
    %7 = vector.load %arg5[%c0_6, %c0_7, %c0_8] : memref<1x16x32xf32, #tpu.memory_space<vmem>>, vector<1x16x32xf32>
    %8 = vector.shape_cast %7 : vector<1x16x32xf32> to vector<16x32xf32>
    %9 = vector.extract_strided_slice %4 {offsets = [0, 0], sizes = [16, 8], strides = [1, 1]} : vector<16x32xf32> to vector<16x8xf32>
    %10 = vector.extract_strided_slice %6 {offsets = [0, 0], sizes = [16, 8], strides = [1, 1]} : vector<16x32xf32> to vector<16x8xf32>
    %11 = vector.extract_strided_slice %8 {offsets = [0, 0], sizes = [16, 8], strides = [1, 1]} : vector<16x32xf32> to vector<16x8xf32>
    %cst = arith.constant dense<0.000000e+00> : vector<16x16xf32>
    %12 = tpu.matmul %9, %10, %cst {dimension_numbers = #tpu.dot_dimension_numbers<[1], [1], [0], [0], [0, 0, 1, 0], [], []>} : vector<16x8xf32>, vector<16x8xf32>, vector<16x16xf32> -> vector<16x16xf32>
    %cst_9 = arith.constant 0.353553385 : f32
    %13 = vector.broadcast %cst_9 : f32 to vector<16x16xf32>
    %14 = arith.mulf %12, %13 : vector<16x16xf32>
    %c0_10 = arith.constant 0 : index
    %c0_11 = arith.constant 0 : index
    %c0_12 = arith.constant 0 : index
    %15 = vector.load %arg12[%c0_10, %c0_11, %c0_12] : memref<4x16x1xf32, #tpu.memory_space<vmem>>, vector<1x16x1xf32>
    %16 = vector.shape_cast %15 : vector<1x16x1xf32> to vector<16x1xf32>
    %cst_13 = arith.constant dense<0xFF800000> : vector<16xf32>
    %17 = vector.multi_reduction <maximumf>, %14, %cst_13 [1] : vector<16x16xf32> to vector<16xf32>
    %18 = vector.shape_cast %17 : vector<16xf32> to vector<16x1xf32>
    %19 = arith.maximumf %16, %18 : vector<16x1xf32>
    %20 = arith.subf %16, %19 : vector<16x1xf32>
    %21 = math.exp %20 : vector<16x1xf32>
    %22 = vector.broadcast %19 : vector<16x1xf32> to vector<16x16xf32>
    %23 = arith.subf %14, %22 : vector<16x16xf32>
    %24 = math.exp %23 : vector<16x16xf32>
    %c0_14 = arith.constant 0 : index
    %c0_15 = arith.constant 0 : index
    %c0_16 = arith.constant 0 : index
    %25 = vector.load %arg13[%c0_14, %c0_15, %c0_16] : memref<4x16x1xf32, #tpu.memory_space<vmem>>, vector<1x16x1xf32>
    %26 = vector.shape_cast %25 : vector<1x16x1xf32> to vector<16x1xf32>
    %27 = arith.mulf %21, %26 : vector<16x1xf32>
    %cst_17 = arith.constant dense<0.000000e+00> : vector<16xf32>
    %28 = vector.multi_reduction <add>, %24, %cst_17 [1] : vector<16x16xf32> to vector<16xf32>
    %29 = vector.shape_cast %28 : vector<16xf32> to vector<16x1xf32>
    %30 = arith.addf %27, %29 : vector<16x1xf32>
    %c0_18 = arith.constant 0 : index
    %c0_19 = arith.constant 0 : index
    %c0_20 = arith.constant 0 : index
    %31 = vector.load %arg13[%c0_18, %c0_19, %c0_20] : memref<4x16x1xf32, #tpu.memory_space<vmem>>, vector<1x16x1xf32>
    %32 = vector.shape_cast %31 : vector<1x16x1xf32> to vector<16x1xf32>
    %33 = vector.shape_cast %30 : vector<16x1xf32> to vector<1x16x1xf32>
    tpu.vector_store %arg13[%c0_18, %c0_19, %c0_20], %33 {strides = array<i32>} : memref<4x16x1xf32, #tpu.memory_space<vmem>>, vector<1x16x1xf32>,
    %c0_21 = arith.constant 0 : index
    %c0_22 = arith.constant 0 : index
    %c0_23 = arith.constant 0 : index
    %34 = vector.load %arg14[%c0_21, %c0_22, %c0_23] : memref<4x16x8xf32, #tpu.memory_space<vmem>>, vector<1x16x8xf32>
    %35 = vector.shape_cast %34 : vector<1x16x8xf32> to vector<16x8xf32>
    %36 = vector.broadcast %21 : vector<16x1xf32> to vector<16x8xf32>
    %37 = arith.mulf %36, %35 : vector<16x8xf32>
    %cst_24 = arith.constant dense<0.000000e+00> : vector<16x8xf32>
    %38 = tpu.matmul %24, %11, %cst_24 {dimension_numbers = #tpu.dot_dimension_numbers<[1], [0], [0], [1], [0, 0, 1, 1], [], []>} : vector<16x16xf32>, vector<16x8xf32>, vector<16x8xf32> -> vector<16x8xf32>
    %39 = arith.addf %37, %38 : vector<16x8xf32>
    %c0_25 = arith.constant 0 : index
    %c0_26 = arith.constant 0 : index
    %c0_27 = arith.constant 0 : index
    %40 = vector.load %arg14[%c0_25, %c0_26, %c0_27] : memref<4x16x8xf32, #tpu.memory_space<vmem>>, vector<1x16x8xf32>
    %41 = vector.shape_cast %40 : vector<1x16x8xf32> to vector<16x8xf32>
    %42 = vector.shape_cast %39 : vector<16x8xf32> to vector<1x16x8xf32>
    tpu.vector_store %arg14[%c0_25, %c0_26, %c0_27], %42 {strides = array<i32>} : memref<4x16x8xf32, #tpu.memory_space<vmem>>, vector<1x16x8xf32>,
    %c0_28 = arith.constant 0 : index
    %c0_29 = arith.constant 0 : index
    %c0_30 = arith.constant 0 : index
    %43 = vector.load %arg12[%c0_28, %c0_29, %c0_30] : memref<4x16x1xf32, #tpu.memory_space<vmem>>, vector<1x16x1xf32>
    %44 = vector.shape_cast %43 : vector<1x16x1xf32> to vector<16x1xf32>
    %45 = vector.shape_cast %19 : vector<16x1xf32> to vector<1x16x1xf32>
    tpu.vector_store %arg12[%c0_28, %c0_29, %c0_30], %45 {strides = array<i32>} : memref<4x16x1xf32, #tpu.memory_space<vmem>>, vector<1x16x1xf32>,
    %46 = vector.extract_strided_slice %4 {offsets = [0, 8], sizes = [16, 8], strides = [1, 1]} : vector<16x32xf32> to vector<16x8xf32>
    %47 = vector.extract_strided_slice %6 {offsets = [0, 8], sizes = [16, 8], strides = [1, 1]} : vector<16x32xf32> to vector<16x8xf32>
    %48 = vector.extract_strided_slice %8 {offsets = [0, 8], sizes = [16, 8], strides = [1, 1]} : vector<16x32xf32> to vector<16x8xf32>
    %cst_31 = arith.constant dense<0.000000e+00> : vector<16x16xf32>
    %49 = tpu.matmul %46, %47, %cst_31 {dimension_numbers = #tpu.dot_dimension_numbers<[1], [1], [0], [0], [0, 0, 1, 0], [], []>} : vector<16x8xf32>, vector<16x8xf32>, vector<16x16xf32> -> vector<16x16xf32>
    %cst_32 = arith.constant 0.353553385 : f32
    %50 = vector.broadcast %cst_32 : f32 to vector<16x16xf32>
    %51 = arith.mulf %49, %50 : vector<16x16xf32>
    %c1 = arith.constant 1 : index
    %c0_33 = arith.constant 0 : index
    %c0_34 = arith.constant 0 : index
    %52 = vector.load %arg12[%c1, %c0_33, %c0_34] : memref<4x16x1xf32, #tpu.memory_space<vmem>>, vector<1x16x1xf32>
    %53 = vector.shape_cast %52 : vector<1x16x1xf32> to vector<16x1xf32>
    %cst_35 = arith.constant dense<0xFF800000> : vector<16xf32>
    %54 = vector.multi_reduction <maximumf>, %51, %cst_35 [1] : vector<16x16xf32> to vector<16xf32>
    %55 = vector.shape_cast %54 : vector<16xf32> to vector<16x1xf32>
    %56 = arith.maximumf %53, %55 : vector<16x1xf32>
    %57 = arith.subf %53, %56 : vector<16x1xf32>
    %58 = math.exp %57 : vector<16x1xf32>
    %59 = vector.broadcast %56 : vector<16x1xf32> to vector<16x16xf32>
    %60 = arith.subf %51, %59 : vector<16x16xf32>
    %61 = math.exp %60 : vector<16x16xf32>
    %c1_36 = arith.constant 1 : index
    %c0_37 = arith.constant 0 : index
    %c0_38 = arith.constant 0 : index
    %62 = vector.load %arg13[%c1_36, %c0_37, %c0_38] : memref<4x16x1xf32, #tpu.memory_space<vmem>>, vector<1x16x1xf32>
    %63 = vector.shape_cast %62 : vector<1x16x1xf32> to vector<16x1xf32>
    %64 = arith.mulf %58, %63 : vector<16x1xf32>
    %cst_39 = arith.constant dense<0.000000e+00> : vector<16xf32>
    %65 = vector.multi_reduction <add>, %61, %cst_39 [1] : vector<16x16xf32> to vector<16xf32>
    %66 = vector.shape_cast %65 : vector<16xf32> to vector<16x1xf32>
    %67 = arith.addf %64, %66 : vector<16x1xf32>
    %c1_40 = arith.constant 1 : index
    %c0_41 = arith.constant 0 : index
    %c0_42 = arith.constant 0 : index
    %68 = vector.load %arg13[%c1_40, %c0_41, %c0_42] : memref<4x16x1xf32, #tpu.memory_space<vmem>>, vector<1x16x1xf32>
    %69 = vector.shape_cast %68 : vector<1x16x1xf32> to vector<16x1xf32>
    %70 = vector.shape_cast %67 : vector<16x1xf32> to vector<1x16x1xf32>
    tpu.vector_store %arg13[%c1_40, %c0_41, %c0_42], %70 {strides = array<i32>} : memref<4x16x1xf32, #tpu.memory_space<vmem>>, vector<1x16x1xf32>,
    %c1_43 = arith.constant 1 : index
    %c0_44 = arith.constant 0 : index
    %c0_45 = arith.constant 0 : index
    %71 = vector.load %arg14[%c1_43, %c0_44, %c0_45] : memref<4x16x8xf32, #tpu.memory_space<vmem>>, vector<1x16x8xf32>
    %72 = vector.shape_cast %71 : vector<1x16x8xf32> to vector<16x8xf32>
    %73 = vector.broadcast %58 : vector<16x1xf32> to vector<16x8xf32>
    %74 = arith.mulf %73, %72 : vector<16x8xf32>
    %cst_46 = arith.constant dense<0.000000e+00> : vector<16x8xf32>
    %75 = tpu.matmul %61, %48, %cst_46 {dimension_numbers = #tpu.dot_dimension_numbers<[1], [0], [0], [1], [0, 0, 1, 1], [], []>} : vector<16x16xf32>, vector<16x8xf32>, vector<16x8xf32> -> vector<16x8xf32>
    %76 = arith.addf %74, %75 : vector<16x8xf32>
    %c1_47 = arith.constant 1 : index
    %c0_48 = arith.constant 0 : index
    %c0_49 = arith.constant 0 : index
    %77 = vector.load %arg14[%c1_47, %c0_48, %c0_49] : memref<4x16x8xf32, #tpu.memory_space<vmem>>, vector<1x16x8xf32>
    %78 = vector.shape_cast %77 : vector<1x16x8xf32> to vector<16x8xf32>
    %79 = vector.shape_cast %76 : vector<16x8xf32> to vector<1x16x8xf32>
    tpu.vector_store %arg14[%c1_47, %c0_48, %c0_49], %79 {strides = array<i32>} : memref<4x16x8xf32, #tpu.memory_space<vmem>>, vector<1x16x8xf32>,
    %c1_50 = arith.constant 1 : index
    %c0_51 = arith.constant 0 : index
    %c0_52 = arith.constant 0 : index
    %80 = vector.load %arg12[%c1_50, %c0_51, %c0_52] : memref<4x16x1xf32, #tpu.memory_space<vmem>>, vector<1x16x1xf32>
    %81 = vector.shape_cast %80 : vector<1x16x1xf32> to vector<16x1xf32>
    %82 = vector.shape_cast %56 : vector<16x1xf32> to vector<1x16x1xf32>
    tpu.vector_store %arg12[%c1_50, %c0_51, %c0_52], %82 {strides = array<i32>} : memref<4x16x1xf32, #tpu.memory_space<vmem>>, vector<1x16x1xf32>,
    %83 = vector.extract_strided_slice %4 {offsets = [0, 16], sizes = [16, 8], strides = [1, 1]} : vector<16x32xf32> to vector<16x8xf32>
    %84 = vector.extract_strided_slice %6 {offsets = [0, 16], sizes = [16, 8], strides = [1, 1]} : vector<16x32xf32> to vector<16x8xf32>
    %85 = vector.extract_strided_slice %8 {offsets = [0, 16], sizes = [16, 8], strides = [1, 1]} : vector<16x32xf32> to vector<16x8xf32>
    %cst_53 = arith.constant dense<0.000000e+00> : vector<16x16xf32>
    %86 = tpu.matmul %83, %84, %cst_53 {dimension_numbers = #tpu.dot_dimension_numbers<[1], [1], [0], [0], [0, 0, 1, 0], [], []>} : vector<16x8xf32>, vector<16x8xf32>, vector<16x16xf32> -> vector<16x16xf32>
    %cst_54 = arith.constant 0.353553385 : f32
    %87 = vector.broadcast %cst_54 : f32 to vector<16x16xf32>
    %88 = arith.mulf %86, %87 : vector<16x16xf32>
    %c2 = arith.constant 2 : index
    %c0_55 = arith.constant 0 : index
    %c0_56 = arith.constant 0 : index
    %89 = vector.load %arg12[%c2, %c0_55, %c0_56] : memref<4x16x1xf32, #tpu.memory_space<vmem>>, vector<1x16x1xf32>
    %90 = vector.shape_cast %89 : vector<1x16x1xf32> to vector<16x1xf32>
    %cst_57 = arith.constant dense<0xFF800000> : vector<16xf32>
    %91 = vector.multi_reduction <maximumf>, %88, %cst_57 [1] : vector<16x16xf32> to vector<16xf32>
    %92 = vector.shape_cast %91 : vector<16xf32> to vector<16x1xf32>
    %93 = arith.maximumf %90, %92 : vector<16x1xf32>
    %94 = arith.subf %90, %93 : vector<16x1xf32>
    %95 = math.exp %94 : vector<16x1xf32>
    %96 = vector.broadcast %93 : vector<16x1xf32> to vector<16x16xf32>
    %97 = arith.subf %88, %96 : vector<16x16xf32>
    %98 = math.exp %97 : vector<16x16xf32>
    %c2_58 = arith.constant 2 : index
    %c0_59 = arith.constant 0 : index
    %c0_60 = arith.constant 0 : index
    %99 = vector.load %arg13[%c2_58, %c0_59, %c0_60] : memref<4x16x1xf32, #tpu.memory_space<vmem>>, vector<1x16x1xf32>
    %100 = vector.shape_cast %99 : vector<1x16x1xf32> to vector<16x1xf32>
    %101 = arith.mulf %95, %100 : vector<16x1xf32>
    %cst_61 = arith.constant dense<0.000000e+00> : vector<16xf32>
    %102 = vector.multi_reduction <add>, %98, %cst_61 [1] : vector<16x16xf32> to vector<16xf32>
    %103 = vector.shape_cast %102 : vector<16xf32> to vector<16x1xf32>
    %104 = arith.addf %101, %103 : vector<16x1xf32>
    %c2_62 = arith.constant 2 : index
    %c0_63 = arith.constant 0 : index
    %c0_64 = arith.constant 0 : index
    %105 = vector.load %arg13[%c2_62, %c0_63, %c0_64] : memref<4x16x1xf32, #tpu.memory_space<vmem>>, vector<1x16x1xf32>
    %106 = vector.shape_cast %105 : vector<1x16x1xf32> to vector<16x1xf32>
    %107 = vector.shape_cast %104 : vector<16x1xf32> to vector<1x16x1xf32>
    tpu.vector_store %arg13[%c2_62, %c0_63, %c0_64], %107 {strides = array<i32>} : memref<4x16x1xf32, #tpu.memory_space<vmem>>, vector<1x16x1xf32>,
    %c2_65 = arith.constant 2 : index
    %c0_66 = arith.constant 0 : index
    %c0_67 = arith.constant 0 : index
    %108 = vector.load %arg14[%c2_65, %c0_66, %c0_67] : memref<4x16x8xf32, #tpu.memory_space<vmem>>, vector<1x16x8xf32>
    %109 = vector.shape_cast %108 : vector<1x16x8xf32> to vector<16x8xf32>
    %110 = vector.broadcast %95 : vector<16x1xf32> to vector<16x8xf32>
    %111 = arith.mulf %110, %109 : vector<16x8xf32>
    %cst_68 = arith.constant dense<0.000000e+00> : vector<16x8xf32>
    %112 = tpu.matmul %98, %85, %cst_68 {dimension_numbers = #tpu.dot_dimension_numbers<[1], [0], [0], [1], [0, 0, 1, 1], [], []>} : vector<16x16xf32>, vector<16x8xf32>, vector<16x8xf32> -> vector<16x8xf32>
    %113 = arith.addf %111, %112 : vector<16x8xf32>
    %c2_69 = arith.constant 2 : index
    %c0_70 = arith.constant 0 : index
    %c0_71 = arith.constant 0 : index
    %114 = vector.load %arg14[%c2_69, %c0_70, %c0_71] : memref<4x16x8xf32, #tpu.memory_space<vmem>>, vector<1x16x8xf32>
    %115 = vector.shape_cast %114 : vector<1x16x8xf32> to vector<16x8xf32>
    %116 = vector.shape_cast %113 : vector<16x8xf32> to vector<1x16x8xf32>
    tpu.vector_store %arg14[%c2_69, %c0_70, %c0_71], %116 {strides = array<i32>} : memref<4x16x8xf32, #tpu.memory_space<vmem>>, vector<1x16x8xf32>,
    %c2_72 = arith.constant 2 : index
    %c0_73 = arith.constant 0 : index
    %c0_74 = arith.constant 0 : index
    %117 = vector.load %arg12[%c2_72, %c0_73, %c0_74] : memref<4x16x1xf32, #tpu.memory_space<vmem>>, vector<1x16x1xf32>
    %118 = vector.shape_cast %117 : vector<1x16x1xf32> to vector<16x1xf32>
    %119 = vector.shape_cast %93 : vector<16x1xf32> to vector<1x16x1xf32>
    tpu.vector_store %arg12[%c2_72, %c0_73, %c0_74], %119 {strides = array<i32>} : memref<4x16x1xf32, #tpu.memory_space<vmem>>, vector<1x16x1xf32>,
    %120 = vector.extract_strided_slice %4 {offsets = [0, 24], sizes = [16, 8], strides = [1, 1]} : vector<16x32xf32> to vector<16x8xf32>
    %121 = vector.extract_strided_slice %6 {offsets = [0, 24], sizes = [16, 8], strides = [1, 1]} : vector<16x32xf32> to vector<16x8xf32>
    %122 = vector.extract_strided_slice %8 {offsets = [0, 24], sizes = [16, 8], strides = [1, 1]} : vector<16x32xf32> to vector<16x8xf32>
    %cst_75 = arith.constant dense<0.000000e+00> : vector<16x16xf32>
    %123 = tpu.matmul %120, %121, %cst_75 {dimension_numbers = #tpu.dot_dimension_numbers<[1], [1], [0], [0], [0, 0, 1, 0], [], []>} : vector<16x8xf32>, vector<16x8xf32>, vector<16x16xf32> -> vector<16x16xf32>
    %cst_76 = arith.constant 0.353553385 : f32
    %124 = vector.broadcast %cst_76 : f32 to vector<16x16xf32>
    %125 = arith.mulf %123, %124 : vector<16x16xf32>
    %c3 = arith.constant 3 : index
    %c0_77 = arith.constant 0 : index
    %c0_78 = arith.constant 0 : index
    %126 = vector.load %arg12[%c3, %c0_77, %c0_78] : memref<4x16x1xf32, #tpu.memory_space<vmem>>, vector<1x16x1xf32>
    %127 = vector.shape_cast %126 : vector<1x16x1xf32> to vector<16x1xf32>
    %cst_79 = arith.constant dense<0xFF800000> : vector<16xf32>
    %128 = vector.multi_reduction <maximumf>, %125, %cst_79 [1] : vector<16x16xf32> to vector<16xf32>
    %129 = vector.shape_cast %128 : vector<16xf32> to vector<16x1xf32>
    %130 = arith.maximumf %127, %129 : vector<16x1xf32>
    %131 = arith.subf %127, %130 : vector<16x1xf32>
    %132 = math.exp %131 : vector<16x1xf32>
    %133 = vector.broadcast %130 : vector<16x1xf32> to vector<16x16xf32>
    %134 = arith.subf %125, %133 : vector<16x16xf32>
    %135 = math.exp %134 : vector<16x16xf32>
    %c3_80 = arith.constant 3 : index
    %c0_81 = arith.constant 0 : index
    %c0_82 = arith.constant 0 : index
    %136 = vector.load %arg13[%c3_80, %c0_81, %c0_82] : memref<4x16x1xf32, #tpu.memory_space<vmem>>, vector<1x16x1xf32>
    %137 = vector.shape_cast %136 : vector<1x16x1xf32> to vector<16x1xf32>
    %138 = arith.mulf %132, %137 : vector<16x1xf32>
    %cst_83 = arith.constant dense<0.000000e+00> : vector<16xf32>
    %139 = vector.multi_reduction <add>, %135, %cst_83 [1] : vector<16x16xf32> to vector<16xf32>
    %140 = vector.shape_cast %139 : vector<16xf32> to vector<16x1xf32>
    %141 = arith.addf %138, %140 : vector<16x1xf32>
    %c3_84 = arith.constant 3 : index
    %c0_85 = arith.constant 0 : index
    %c0_86 = arith.constant 0 : index
    %142 = vector.load %arg13[%c3_84, %c0_85, %c0_86] : memref<4x16x1xf32, #tpu.memory_space<vmem>>, vector<1x16x1xf32>
    %143 = vector.shape_cast %142 : vector<1x16x1xf32> to vector<16x1xf32>
    %144 = vector.shape_cast %141 : vector<16x1xf32> to vector<1x16x1xf32>
    tpu.vector_store %arg13[%c3_84, %c0_85, %c0_86], %144 {strides = array<i32>} : memref<4x16x1xf32, #tpu.memory_space<vmem>>, vector<1x16x1xf32>,
    %c3_87 = arith.constant 3 : index
    %c0_88 = arith.constant 0 : index
    %c0_89 = arith.constant 0 : index
    %145 = vector.load %arg14[%c3_87, %c0_88, %c0_89] : memref<4x16x8xf32, #tpu.memory_space<vmem>>, vector<1x16x8xf32>
    %146 = vector.shape_cast %145 : vector<1x16x8xf32> to vector<16x8xf32>
    %147 = vector.broadcast %132 : vector<16x1xf32> to vector<16x8xf32>
    %148 = arith.mulf %147, %146 : vector<16x8xf32>
    %cst_90 = arith.constant dense<0.000000e+00> : vector<16x8xf32>
    %149 = tpu.matmul %135, %122, %cst_90 {dimension_numbers = #tpu.dot_dimension_numbers<[1], [0], [0], [1], [0, 0, 1, 1], [], []>} : vector<16x16xf32>, vector<16x8xf32>, vector<16x8xf32> -> vector<16x8xf32>
    %150 = arith.addf %148, %149 : vector<16x8xf32>
    %c3_91 = arith.constant 3 : index
    %c0_92 = arith.constant 0 : index
    %c0_93 = arith.constant 0 : index
    %151 = vector.load %arg14[%c3_91, %c0_92, %c0_93] : memref<4x16x8xf32, #tpu.memory_space<vmem>>, vector<1x16x8xf32>
    %152 = vector.shape_cast %151 : vector<1x16x8xf32> to vector<16x8xf32>
    %153 = vector.shape_cast %150 : vector<16x8xf32> to vector<1x16x8xf32>
    tpu.vector_store %arg14[%c3_91, %c0_92, %c0_93], %153 {strides = array<i32>} : memref<4x16x8xf32, #tpu.memory_space<vmem>>, vector<1x16x8xf32>,
    %c3_94 = arith.constant 3 : index
    %c0_95 = arith.constant 0 : index
    %c0_96 = arith.constant 0 : index
    %154 = vector.load %arg12[%c3_94, %c0_95, %c0_96] : memref<4x16x1xf32, #tpu.memory_space<vmem>>, vector<1x16x1xf32>
    %155 = vector.shape_cast %154 : vector<1x16x1xf32> to vector<16x1xf32>
    %156 = vector.shape_cast %130 : vector<16x1xf32> to vector<1x16x1xf32>
    tpu.vector_store %arg12[%c3_94, %c0_95, %c0_96], %156 {strides = array<i32>} : memref<4x16x1xf32, #tpu.memory_space<vmem>>, vector<1x16x1xf32>,
    %c0_i32_97 = arith.constant 0 : i32
    %157 = arith.cmpi eq, %arg2, %c0_i32_97 : i32
    %158 = arith.extui %157 : i1 to i32
    %c0_i32_98 = arith.constant 0 : i32
    %159 = arith.cmpi ne, %158, %c0_i32_98 : i32
    scf.if %159 {
      %c0_99 = arith.constant 0 : index
      %c0_100 = arith.constant 0 : index
      %c0_101 = arith.constant 0 : index
      %160 = vector.load %arg13[%c0_99, %c0_100, %c0_101] : memref<4x16x1xf32, #tpu.memory_space<vmem>>, vector<1x16x1xf32>
      %161 = vector.shape_cast %160 : vector<1x16x1xf32> to vector<16x1xf32>
      %162 = tpu.reciprocal %161 : vector<16x1xf32> -> vector<16x1xf32>
      %c0_102 = arith.constant 0 : index
      %c0_103 = arith.constant 0 : index
      %c0_104 = arith.constant 0 : index
      %163 = vector.load %arg14[%c0_102, %c0_103, %c0_104] : memref<4x16x8xf32, #tpu.memory_space<vmem>>, vector<1x16x8xf32>
      %164 = vector.shape_cast %163 : vector<1x16x8xf32> to vector<16x8xf32>
      %165 = vector.broadcast %162 : vector<16x1xf32> to vector<16x8xf32>
      %166 = arith.mulf %164, %165 : vector<16x8xf32>
      %c1_105 = arith.constant 1 : index
      %c0_106 = arith.constant 0 : index
      %c0_107 = arith.constant 0 : index
      %167 = vector.load %arg13[%c1_105, %c0_106, %c0_107] : memref<4x16x1xf32, #tpu.memory_space<vmem>>, vector<1x16x1xf32>
      %168 = vector.shape_cast %167 : vector<1x16x1xf32> to vector<16x1xf32>
      %169 = tpu.reciprocal %168 : vector<16x1xf32> -> vector<16x1xf32>
      %c1_108 = arith.constant 1 : index
      %c0_109 = arith.constant 0 : index
      %c0_110 = arith.constant 0 : index
      %170 = vector.load %arg14[%c1_108, %c0_109, %c0_110] : memref<4x16x8xf32, #tpu.memory_space<vmem>>, vector<1x16x8xf32>
      %171 = vector.shape_cast %170 : vector<1x16x8xf32> to vector<16x8xf32>
      %172 = vector.broadcast %169 : vector<16x1xf32> to vector<16x8xf32>
      %173 = arith.mulf %171, %172 : vector<16x8xf32>
      %c2_111 = arith.constant 2 : index
      %c0_112 = arith.constant 0 : index
      %c0_113 = arith.constant 0 : index
      %174 = vector.load %arg13[%c2_111, %c0_112, %c0_113] : memref<4x16x1xf32, #tpu.memory_space<vmem>>, vector<1x16x1xf32>
      %175 = vector.shape_cast %174 : vector<1x16x1xf32> to vector<16x1xf32>
      %176 = tpu.reciprocal %175 : vector<16x1xf32> -> vector<16x1xf32>
      %c2_114 = arith.constant 2 : index
      %c0_115 = arith.constant 0 : index
      %c0_116 = arith.constant 0 : index
      %177 = vector.load %arg14[%c2_114, %c0_115, %c0_116] : memref<4x16x8xf32, #tpu.memory_space<vmem>>, vector<1x16x8xf32>
      %178 = vector.shape_cast %177 : vector<1x16x8xf32> to vector<16x8xf32>
      %179 = vector.broadcast %176 : vector<16x1xf32> to vector<16x8xf32>
      %180 = arith.mulf %178, %179 : vector<16x8xf32>
      %c3_117 = arith.constant 3 : index
      %c0_118 = arith.constant 0 : index
      %c0_119 = arith.constant 0 : index
      %181 = vector.load %arg13[%c3_117, %c0_118, %c0_119] : memref<4x16x1xf32, #tpu.memory_space<vmem>>, vector<1x16x1xf32>
      %182 = vector.shape_cast %181 : vector<1x16x1xf32> to vector<16x1xf32>
      %183 = tpu.reciprocal %182 : vector<16x1xf32> -> vector<16x1xf32>
      %c3_120 = arith.constant 3 : index
      %c0_121 = arith.constant 0 : index
      %c0_122 = arith.constant 0 : index
      %184 = vector.load %arg14[%c3_120, %c0_121, %c0_122] : memref<4x16x8xf32, #tpu.memory_space<vmem>>, vector<1x16x8xf32>
      %185 = vector.shape_cast %184 : vector<1x16x8xf32> to vector<16x8xf32>
      %186 = vector.broadcast %183 : vector<16x1xf32> to vector<16x8xf32>
      %187 = arith.mulf %185, %186 : vector<16x8xf32>
      %188 = tpu.concatenate %166, %173, %180, %187 in 1 : vector<16x8xf32>, vector<16x8xf32>, vector<16x8xf32>, vector<16x8xf32> -> vector<16x32xf32>
      %c0_123 = arith.constant 0 : index
      %c0_124 = arith.constant 0 : index
      %189 = vector.load %arg7[%c0_123, %c0_124] : memref<32x32xf32, #tpu.memory_space<vmem>>, vector<32x32xf32>
      %cst_125 = arith.constant dense<0.000000e+00> : vector<16x32xf32>
      %190 = tpu.matmul %188, %189, %cst_125 {dimension_numbers = #tpu.dot_dimension_numbers<[1], [0], [0], [1], [0, 0, 1, 1], [], []>} : vector<16x32xf32>, vector<32x32xf32>, vector<16x32xf32> -> vector<16x32xf32>
      %c0_126 = arith.constant 0 : index
      %c0_127 = arith.constant 0 : index
      %191 = vector.load %arg8[%c0_126, %c0_127] : memref<1x32xf32, #tpu.memory_space<vmem>>, vector<1x32xf32>
      %192 = vector.broadcast %191 : vector<1x32xf32> to vector<16x32xf32>
      %193 = arith.addf %190, %192 : vector<16x32xf32>
      %c0_128 = arith.constant 0 : index
      %c0_129 = arith.constant 0 : index
      %c0_130 = arith.constant 0 : index
      %194 = vector.load %arg6[%c0_128, %c0_129, %c0_130] : memref<1x16x32xf32, #tpu.memory_space<vmem>>, vector<1x16x32xf32>
      %195 = vector.shape_cast %194 : vector<1x16x32xf32> to vector<16x32xf32>
      %196 = arith.addf %195, %193 : vector<16x32xf32>
      %cst_131 = arith.constant dense<0.000000e+00> : vector<16xf32>
      %197 = vector.multi_reduction <add>, %196, %cst_131 [1] : vector<16x32xf32> to vector<16xf32>
      %198 = vector.shape_cast %197 : vector<16xf32> to vector<16x1xf32>
      %cst_132 = arith.constant 3.200000e+01 : f32
      %199 = vector.broadcast %cst_132 : f32 to vector<16x1xf32>
      %200 = arith.divf %198, %199 : vector<16x1xf32>
      %201 = vector.broadcast %200 : vector<16x1xf32> to vector<16x32xf32>
      %202 = arith.subf %196, %201 : vector<16x32xf32>
      %203 = arith.mulf %202, %202 : vector<16x32xf32>
      %cst_133 = arith.constant dense<0.000000e+00> : vector<16xf32>
      %204 = vector.multi_reduction <add>, %203, %cst_133 [1] : vector<16x32xf32> to vector<16xf32>
      %205 = vector.shape_cast %204 : vector<16xf32> to vector<16x1xf32>
      %cst_134 = arith.constant 3.200000e+01 : f32
      %206 = vector.broadcast %cst_134 : f32 to vector<16x1xf32>
      %207 = arith.divf %205, %206 : vector<16x1xf32>
      %208 = vector.broadcast %200 : vector<16x1xf32> to vector<16x32xf32>
      %209 = arith.subf %196, %208 : vector<16x32xf32>
      %cst_135 = arith.constant 9.99999996E-13 : f32
      %210 = vector.broadcast %cst_135 : f32 to vector<16x1xf32>
      %211 = arith.addf %207, %210 : vector<16x1xf32>
      %212 = math.rsqrt %211 : vector<16x1xf32>
      %213 = vector.broadcast %212 : vector<16x1xf32> to vector<16x32xf32>
      %214 = arith.mulf %209, %213 : vector<16x32xf32>
      %c0_136 = arith.constant 0 : index
      %c0_137 = arith.constant 0 : index
      %215 = vector.load %arg9[%c0_136, %c0_137] : memref<1x32xf32, #tpu.memory_space<vmem>>, vector<1x32xf32>
      %216 = vector.broadcast %215 : vector<1x32xf32> to vector<16x32xf32>
      %217 = arith.mulf %214, %216 : vector<16x32xf32>
      %c0_138 = arith.constant 0 : index
      %c0_139 = arith.constant 0 : index
      %218 = vector.load %arg10[%c0_138, %c0_139] : memref<1x32xf32, #tpu.memory_space<vmem>>, vector<1x32xf32>
      %219 = vector.broadcast %218 : vector<1x32xf32> to vector<16x32xf32>
      %220 = arith.addf %217, %219 : vector<16x32xf32>
      %c0_140 = arith.constant 0 : index
      %c0_141 = arith.constant 0 : index
      %c0_142 = arith.constant 0 : index
      %221 = vector.load %arg11[%c0_140, %c0_141, %c0_142] : memref<1x16x32xf32, #tpu.memory_space<vmem>>, vector<1x16x32xf32>
      %222 = vector.shape_cast %221 : vector<1x16x32xf32> to vector<16x32xf32>
      %223 = vector.shape_cast %220 : vector<16x32xf32> to vector<1x16x32xf32>
      tpu.vector_store %arg11[%c0_140, %c0_141, %c0_142], %223 {strides = array<i32>} : memref<1x16x32xf32, #tpu.memory_space<vmem>>, vector<1x16x32xf32>,
    } else {
    }
    return
  }
  func.func @transform_0(%arg0: i32, %arg1: i32, %arg2: i32) -> (i32, i32, i32) {
    %c0_i32 = arith.constant 0 : i32
    %c0_i32_0 = arith.constant 0 : i32
    return %arg0, %arg1, %c0_i32 : i32, i32, i32
  }
  func.func @transform_1(%arg0: i32, %arg1: i32, %arg2: i32) -> (i32, i32, i32) {
    %c0_i32 = arith.constant 0 : i32
    %c0_i32_0 = arith.constant 0 : i32
    return %arg0, %arg2, %c0_i32 : i32, i32, i32
  }
  func.func @transform_2(%arg0: i32, %arg1: i32, %arg2: i32) -> (i32, i32, i32) {
    %c0_i32 = arith.constant 0 : i32
    %c0_i32_0 = arith.constant 0 : i32
    return %arg0, %arg2, %c0_i32 : i32, i32, i32
  }
  func.func @transform_3(%arg0: i32, %arg1: i32, %arg2: i32) -> (i32, i32, i32) {
    %c0_i32 = arith.constant 0 : i32
    %c0_i32_0 = arith.constant 0 : i32
    return %arg0, %arg1, %c0_i32 : i32, i32, i32
  }
  func.func @transform_4(%arg0: i32, %arg1: i32, %arg2: i32) -> (i32, i32) {
    %c0_i32 = arith.constant 0 : i32
    %c0_i32_0 = arith.constant 0 : i32
    %c0_i32_1 = arith.constant 0 : i32
    return %c0_i32, %c0_i32_0 : i32, i32
  }
  func.func @transform_5(%arg0: i32, %arg1: i32, %arg2: i32) -> (i32, i32) {
    %c0_i32 = arith.constant 0 : i32
    %c0_i32_0 = arith.constant 0 : i32
    %c0_i32_1 = arith.constant 0 : i32
    return %c0_i32, %c0_i32_0 : i32, i32
  }
  func.func @transform_6(%arg0: i32, %arg1: i32, %arg2: i32) -> (i32, i32) {
    %c0_i32 = arith.constant 0 : i32
    %c0_i32_0 = arith.constant 0 : i32
    %c0_i32_1 = arith.constant 0 : i32
    return %c0_i32, %c0_i32_0 : i32, i32
  }
  func.func @transform_7(%arg0: i32, %arg1: i32, %arg2: i32) -> (i32, i32) {
    %c0_i32 = arith.constant 0 : i32
    %c0_i32_0 = arith.constant 0 : i32
    %c0_i32_1 = arith.constant 0 : i32
    return %c0_i32, %c0_i32_0 : i32, i32
  }
  func.func @transform_8(%arg0: i32, %arg1: i32, %arg2: i32) -> (i32, i32, i32) {
    %c0_i32 = arith.constant 0 : i32
    %c0_i32_0 = arith.constant 0 : i32
    return %arg0, %arg1, %c0_i32 : i32, i32, i32
  }
}

module attributes {stable_mosaic.version = 11 : i64} {
  func.func @_ffn_kernel(%arg0: i32, %arg1: memref<32x32xf32, #tpu.memory_space<vmem>>, %arg2: memref<32x64xf32, #tpu.memory_space<vmem>>, %arg3: memref<1x64xf32, #tpu.memory_space<vmem>>, %arg4: memref<64x32xf32, #tpu.memory_space<vmem>>, %arg5: memref<1x32xf32, #tpu.memory_space<vmem>>, %arg6: memref<1x32xf32, #tpu.memory_space<vmem>>, %arg7: memref<1x32xf32, #tpu.memory_space<vmem>>, %arg8: memref<32x32xf32, #tpu.memory_space<vmem>>) attributes {dimension_semantics = [#tpu.dimension_semantics<parallel>], iteration_bounds = array<i64: 1>, scalar_prefetch = 0 : i64, scratch_operands = 0 : i64, tpu.core_type = #tpu.core_type<tc>, window_params = [{transform_indices = @transform_0, window_bounds = array<i64: 32, 32>}, {pipeline_mode = #tpu.pipeline_mode<synchronous>, transform_indices = @transform_1, window_bounds = array<i64: 32, 64>}, {pipeline_mode = #tpu.pipeline_mode<synchronous>, transform_indices = @transform_2, window_bounds = array<i64: 1, 64>}, {pipeline_mode = #tpu.pipeline_mode<synchronous>, transform_indices = @transform_3, window_bounds = array<i64: 64, 32>}, {pipeline_mode = #tpu.pipeline_mode<synchronous>, transform_indices = @transform_4, window_bounds = array<i64: 1, 32>}, {pipeline_mode = #tpu.pipeline_mode<synchronous>, transform_indices = @transform_5, window_bounds = array<i64: 1, 32>}, {pipeline_mode = #tpu.pipeline_mode<synchronous>, transform_indices = @transform_6, window_bounds = array<i64: 1, 32>}, {transform_indices = @transform_7, window_bounds = array<i64: 32, 32>}]} {
    %c0 = arith.constant 0 : index
    %c0_0 = arith.constant 0 : index
    %0 = vector.load %arg1[%c0, %c0_0] : memref<32x32xf32, #tpu.memory_space<vmem>>, vector<32x32xf32>
    %c0_1 = arith.constant 0 : index
    %c0_2 = arith.constant 0 : index
    %1 = vector.load %arg2[%c0_1, %c0_2] : memref<32x64xf32, #tpu.memory_space<vmem>>, vector<32x64xf32>
    %cst = arith.constant dense<0.000000e+00> : vector<32x64xf32>
    %2 = tpu.matmul %0, %1, %cst {dimension_numbers = #tpu.dot_dimension_numbers<[1], [0], [0], [1], [0, 0, 1, 1], [], []>} : vector<32x32xf32>, vector<32x64xf32>, vector<32x64xf32> -> vector<32x64xf32>
    %c0_3 = arith.constant 0 : index
    %c0_4 = arith.constant 0 : index
    %3 = vector.load %arg3[%c0_3, %c0_4] : memref<1x64xf32, #tpu.memory_space<vmem>>, vector<1x64xf32>
    %4 = vector.broadcast %3 : vector<1x64xf32> to vector<32x64xf32>
    %5 = arith.addf %2, %4 : vector<32x64xf32>
    %cst_5 = arith.constant 5.000000e-01 : f32
    %6 = vector.broadcast %cst_5 : f32 to vector<32x64xf32>
    %7 = arith.mulf %6, %5 : vector<32x64xf32>
    %cst_6 = arith.constant 4.471500e-02 : f32
    %8 = vector.broadcast %cst_6 : f32 to vector<32x64xf32>
    %9 = arith.mulf %8, %5 : vector<32x64xf32>
    %10 = arith.mulf %9, %5 : vector<32x64xf32>
    %11 = arith.mulf %10, %5 : vector<32x64xf32>
    %12 = arith.addf %5, %11 : vector<32x64xf32>
    %cst_7 = arith.constant 0.797884583 : f32
    %13 = vector.broadcast %cst_7 : f32 to vector<32x64xf32>
    %14 = arith.mulf %13, %12 : vector<32x64xf32>
    %15 = math.tanh %14 : vector<32x64xf32>
    %cst_8 = arith.constant 1.000000e+00 : f32
    %16 = vector.broadcast %cst_8 : f32 to vector<32x64xf32>
    %17 = arith.addf %16, %15 : vector<32x64xf32>
    %18 = arith.mulf %7, %17 : vector<32x64xf32>
    %c0_9 = arith.constant 0 : index
    %c0_10 = arith.constant 0 : index
    %19 = vector.load %arg4[%c0_9, %c0_10] : memref<64x32xf32, #tpu.memory_space<vmem>>, vector<64x32xf32>
    %cst_11 = arith.constant dense<0.000000e+00> : vector<32x32xf32>
    %20 = tpu.matmul %18, %19, %cst_11 {dimension_numbers = #tpu.dot_dimension_numbers<[1], [0], [0], [1], [0, 0, 1, 1], [], []>} : vector<32x64xf32>, vector<64x32xf32>, vector<32x32xf32> -> vector<32x32xf32>
    %c0_12 = arith.constant 0 : index
    %c0_13 = arith.constant 0 : index
    %21 = vector.load %arg5[%c0_12, %c0_13] : memref<1x32xf32, #tpu.memory_space<vmem>>, vector<1x32xf32>
    %22 = vector.broadcast %21 : vector<1x32xf32> to vector<32x32xf32>
    %23 = arith.addf %20, %22 : vector<32x32xf32>
    %24 = arith.addf %23, %0 : vector<32x32xf32>
    %cst_14 = arith.constant dense<0.000000e+00> : vector<32xf32>
    %25 = vector.multi_reduction <add>, %24, %cst_14 [1] : vector<32x32xf32> to vector<32xf32>
    %26 = vector.shape_cast %25 : vector<32xf32> to vector<32x1xf32>
    %cst_15 = arith.constant 3.200000e+01 : f32
    %27 = vector.broadcast %cst_15 : f32 to vector<32x1xf32>
    %28 = arith.divf %26, %27 : vector<32x1xf32>
    %29 = vector.broadcast %28 : vector<32x1xf32> to vector<32x32xf32>
    %30 = arith.subf %24, %29 : vector<32x32xf32>
    %31 = arith.mulf %30, %30 : vector<32x32xf32>
    %cst_16 = arith.constant dense<0.000000e+00> : vector<32xf32>
    %32 = vector.multi_reduction <add>, %31, %cst_16 [1] : vector<32x32xf32> to vector<32xf32>
    %33 = vector.shape_cast %32 : vector<32xf32> to vector<32x1xf32>
    %cst_17 = arith.constant 3.200000e+01 : f32
    %34 = vector.broadcast %cst_17 : f32 to vector<32x1xf32>
    %35 = arith.divf %33, %34 : vector<32x1xf32>
    %36 = vector.broadcast %28 : vector<32x1xf32> to vector<32x32xf32>
    %37 = arith.subf %24, %36 : vector<32x32xf32>
    %cst_18 = arith.constant 9.99999996E-13 : f32
    %38 = vector.broadcast %cst_18 : f32 to vector<32x1xf32>
    %39 = arith.addf %35, %38 : vector<32x1xf32>
    %40 = math.rsqrt %39 : vector<32x1xf32>
    %41 = vector.broadcast %40 : vector<32x1xf32> to vector<32x32xf32>
    %42 = arith.mulf %37, %41 : vector<32x32xf32>
    %c0_19 = arith.constant 0 : index
    %c0_20 = arith.constant 0 : index
    %43 = vector.load %arg6[%c0_19, %c0_20] : memref<1x32xf32, #tpu.memory_space<vmem>>, vector<1x32xf32>
    %44 = vector.broadcast %43 : vector<1x32xf32> to vector<32x32xf32>
    %45 = arith.mulf %42, %44 : vector<32x32xf32>
    %c0_21 = arith.constant 0 : index
    %c0_22 = arith.constant 0 : index
    %46 = vector.load %arg7[%c0_21, %c0_22] : memref<1x32xf32, #tpu.memory_space<vmem>>, vector<1x32xf32>
    %47 = vector.broadcast %46 : vector<1x32xf32> to vector<32x32xf32>
    %48 = arith.addf %45, %47 : vector<32x32xf32>
    %c0_23 = arith.constant 0 : index
    %c0_24 = arith.constant 0 : index
    %49 = vector.load %arg8[%c0_23, %c0_24] : memref<32x32xf32, #tpu.memory_space<vmem>>, vector<32x32xf32>
    tpu.vector_store %arg8[%c0_23, %c0_24], %48 {strides = array<i32>} : memref<32x32xf32, #tpu.memory_space<vmem>>, vector<32x32xf32>,
    return
  }
  func.func @transform_0(%arg0: i32) -> (i32, i32) {
    %c0_i32 = arith.constant 0 : i32
    %c0_i32_0 = arith.constant 0 : i32
    return %arg0, %c0_i32 : i32, i32
  }
  func.func @transform_1(%arg0: i32) -> (i32, i32) {
    %c0_i32 = arith.constant 0 : i32
    %c0_i32_0 = arith.constant 0 : i32
    %c0_i32_1 = arith.constant 0 : i32
    return %c0_i32, %c0_i32_0 : i32, i32
  }
  func.func @transform_2(%arg0: i32) -> (i32, i32) {
    %c0_i32 = arith.constant 0 : i32
    %c0_i32_0 = arith.constant 0 : i32
    %c0_i32_1 = arith.constant 0 : i32
    return %c0_i32, %c0_i32_0 : i32, i32
  }
  func.func @transform_3(%arg0: i32) -> (i32, i32) {
    %c0_i32 = arith.constant 0 : i32
    %c0_i32_0 = arith.constant 0 : i32
    %c0_i32_1 = arith.constant 0 : i32
    return %c0_i32, %c0_i32_0 : i32, i32
  }
  func.func @transform_4(%arg0: i32) -> (i32, i32) {
    %c0_i32 = arith.constant 0 : i32
    %c0_i32_0 = arith.constant 0 : i32
    %c0_i32_1 = arith.constant 0 : i32
    return %c0_i32, %c0_i32_0 : i32, i32
  }
  func.func @transform_5(%arg0: i32) -> (i32, i32) {
    %c0_i32 = arith.constant 0 : i32
    %c0_i32_0 = arith.constant 0 : i32
    %c0_i32_1 = arith.constant 0 : i32
    return %c0_i32, %c0_i32_0 : i32, i32
  }
  func.func @transform_6(%arg0: i32) -> (i32, i32) {
    %c0_i32 = arith.constant 0 : i32
    %c0_i32_0 = arith.constant 0 : i32
    %c0_i32_1 = arith.constant 0 : i32
    return %c0_i32, %c0_i32_0 : i32, i32
  }
  func.func @transform_7(%arg0: i32) -> (i32, i32) {
    %c0_i32 = arith.constant 0 : i32
    %c0_i32_0 = arith.constant 0 : i32
    return %arg0, %c0_i32 : i32, i32
  }
}

module attributes {stable_mosaic.version = 11 : i64} {
  func.func @_linear_kernel(%arg0: i32, %arg1: memref<32x32xf32, #tpu.memory_space<vmem>>, %arg2: memref<32x32xf32, #tpu.memory_space<vmem>>, %arg3: memref<1x32xf32, #tpu.memory_space<vmem>>, %arg4: memref<32x32xf32, #tpu.memory_space<vmem>>) attributes {dimension_semantics = [#tpu.dimension_semantics<parallel>], iteration_bounds = array<i64: 1>, scalar_prefetch = 0 : i64, scratch_operands = 0 : i64, tpu.core_type = #tpu.core_type<tc>, window_params = [{transform_indices = @transform_0, window_bounds = array<i64: 32, 32>}, {pipeline_mode = #tpu.pipeline_mode<synchronous>, transform_indices = @transform_1, window_bounds = array<i64: 32, 32>}, {pipeline_mode = #tpu.pipeline_mode<synchronous>, transform_indices = @transform_2, window_bounds = array<i64: 1, 32>}, {transform_indices = @transform_3, window_bounds = array<i64: 32, 32>}]} {
    %c0 = arith.constant 0 : index
    %c0_0 = arith.constant 0 : index
    %0 = vector.load %arg1[%c0, %c0_0] : memref<32x32xf32, #tpu.memory_space<vmem>>, vector<32x32xf32>
    %c0_1 = arith.constant 0 : index
    %c0_2 = arith.constant 0 : index
    %1 = vector.load %arg2[%c0_1, %c0_2] : memref<32x32xf32, #tpu.memory_space<vmem>>, vector<32x32xf32>
    %cst = arith.constant dense<0.000000e+00> : vector<32x32xf32>
    %2 = tpu.matmul %0, %1, %cst {dimension_numbers = #tpu.dot_dimension_numbers<[1], [0], [0], [1], [0, 0, 1, 1], [], []>} : vector<32x32xf32>, vector<32x32xf32>, vector<32x32xf32> -> vector<32x32xf32>
    %c0_3 = arith.constant 0 : index
    %c0_4 = arith.constant 0 : index
    %3 = vector.load %arg3[%c0_3, %c0_4] : memref<1x32xf32, #tpu.memory_space<vmem>>, vector<1x32xf32>
    %4 = vector.broadcast %3 : vector<1x32xf32> to vector<32x32xf32>
    %5 = arith.addf %2, %4 : vector<32x32xf32>
    %cst_5 = arith.constant 5.000000e-01 : f32
    %6 = vector.broadcast %cst_5 : f32 to vector<32x32xf32>
    %7 = arith.mulf %6, %5 : vector<32x32xf32>
    %cst_6 = arith.constant 4.471500e-02 : f32
    %8 = vector.broadcast %cst_6 : f32 to vector<32x32xf32>
    %9 = arith.mulf %8, %5 : vector<32x32xf32>
    %10 = arith.mulf %9, %5 : vector<32x32xf32>
    %11 = arith.mulf %10, %5 : vector<32x32xf32>
    %12 = arith.addf %5, %11 : vector<32x32xf32>
    %cst_7 = arith.constant 0.797884583 : f32
    %13 = vector.broadcast %cst_7 : f32 to vector<32x32xf32>
    %14 = arith.mulf %13, %12 : vector<32x32xf32>
    %15 = math.tanh %14 : vector<32x32xf32>
    %cst_8 = arith.constant 1.000000e+00 : f32
    %16 = vector.broadcast %cst_8 : f32 to vector<32x32xf32>
    %17 = arith.addf %16, %15 : vector<32x32xf32>
    %18 = arith.mulf %7, %17 : vector<32x32xf32>
    %c0_9 = arith.constant 0 : index
    %c0_10 = arith.constant 0 : index
    %19 = vector.load %arg4[%c0_9, %c0_10] : memref<32x32xf32, #tpu.memory_space<vmem>>, vector<32x32xf32>
    tpu.vector_store %arg4[%c0_9, %c0_10], %18 {strides = array<i32>} : memref<32x32xf32, #tpu.memory_space<vmem>>, vector<32x32xf32>,
    return
  }
  func.func @transform_0(%arg0: i32) -> (i32, i32) {
    %c0_i32 = arith.constant 0 : i32
    %c0_i32_0 = arith.constant 0 : i32
    return %arg0, %c0_i32 : i32, i32
  }
  func.func @transform_1(%arg0: i32) -> (i32, i32) {
    %c0_i32 = arith.constant 0 : i32
    %c0_i32_0 = arith.constant 0 : i32
    %c0_i32_1 = arith.constant 0 : i32
    return %c0_i32, %c0_i32_0 : i32, i32
  }
  func.func @transform_2(%arg0: i32) -> (i32, i32) {
    %c0_i32 = arith.constant 0 : i32
    %c0_i32_0 = arith.constant 0 : i32
    %c0_i32_1 = arith.constant 0 : i32
    return %c0_i32, %c0_i32_0 : i32, i32
  }
  func.func @transform_3(%arg0: i32) -> (i32, i32) {
    %c0_i32 = arith.constant 0 : i32
    %c0_i32_0 = arith.constant 0 : i32
    return %arg0, %c0_i32 : i32, i32
  }
}

module attributes {stable_mosaic.version = 11 : i64} {
  func.func @_dec_mean_kernel(%arg0: i32, %arg1: i32, %arg2: memref<1x16x32xf32, #tpu.memory_space<vmem>>, %arg3: memref<32x32xf32, #tpu.memory_space<vmem>>, %arg4: memref<1x32xf32, #tpu.memory_space<vmem>>, %arg5: memref<1x1x32xf32, #tpu.memory_space<vmem>>, %arg6: memref<1x32xf32, #tpu.memory_space<vmem>>) attributes {dimension_semantics = [#tpu.dimension_semantics<parallel>, #tpu.dimension_semantics<arbitrary>], iteration_bounds = array<i64: 2, 1>, scalar_prefetch = 0 : i64, scratch_operands = 1 : i64, tpu.core_type = #tpu.core_type<tc>, window_params = [{transform_indices = @transform_0, window_bounds = array<i64: 1, 16, 32>}, {pipeline_mode = #tpu.pipeline_mode<synchronous>, transform_indices = @transform_1, window_bounds = array<i64: 32, 32>}, {pipeline_mode = #tpu.pipeline_mode<synchronous>, transform_indices = @transform_2, window_bounds = array<i64: 1, 32>}, {transform_indices = @transform_3, window_bounds = array<i64: 1, 1, 32>}]} {
    %c0_i32 = arith.constant 0 : i32
    %0 = arith.cmpi eq, %arg1, %c0_i32 : i32
    %1 = arith.extui %0 : i1 to i32
    %c0_i32_0 = arith.constant 0 : i32
    %2 = arith.cmpi ne, %1, %c0_i32_0 : i32
    scf.if %2 {
      %cst_12 = arith.constant 0.000000e+00 : f32
      %15 = vector.broadcast %cst_12 : f32 to vector<1x32xf32>
      %c0_13 = arith.constant 0 : index
      %c0_14 = arith.constant 0 : index
      %16 = vector.load %arg6[%c0_13, %c0_14] : memref<1x32xf32, #tpu.memory_space<vmem>>, vector<1x32xf32>
      tpu.vector_store %arg6[%c0_13, %c0_14], %15 {strides = array<i32>} : memref<1x32xf32, #tpu.memory_space<vmem>>, vector<1x32xf32>,
    } else {
    }
    %c0 = arith.constant 0 : index
    %c0_1 = arith.constant 0 : index
    %c0_2 = arith.constant 0 : index
    %3 = vector.load %arg2[%c0, %c0_1, %c0_2] : memref<1x16x32xf32, #tpu.memory_space<vmem>>, vector<1x16x32xf32>
    %4 = vector.shape_cast %3 : vector<1x16x32xf32> to vector<16x32xf32>
    %c0_3 = arith.constant 0 : index
    %c0_4 = arith.constant 0 : index
    %5 = vector.load %arg3[%c0_3, %c0_4] : memref<32x32xf32, #tpu.memory_space<vmem>>, vector<32x32xf32>
    %cst = arith.constant dense<0.000000e+00> : vector<16x32xf32>
    %6 = tpu.matmul %4, %5, %cst {dimension_numbers = #tpu.dot_dimension_numbers<[1], [0], [0], [1], [0, 0, 1, 1], [], []>} : vector<16x32xf32>, vector<32x32xf32>, vector<16x32xf32> -> vector<16x32xf32>
    %c0_5 = arith.constant 0 : index
    %c0_6 = arith.constant 0 : index
    %7 = vector.load %arg6[%c0_5, %c0_6] : memref<1x32xf32, #tpu.memory_space<vmem>>, vector<1x32xf32>
    %cst_7 = arith.constant dense<0.000000e+00> : vector<32xf32>
    %8 = vector.multi_reduction <add>, %6, %cst_7 [0] : vector<16x32xf32> to vector<32xf32>
    %9 = vector.shape_cast %8 : vector<32xf32> to vector<1x32xf32>
    %10 = arith.addf %7, %9 : vector<1x32xf32>
    %c0_8 = arith.constant 0 : index
    %c0_9 = arith.constant 0 : index
    %11 = vector.load %arg6[%c0_8, %c0_9] : memref<1x32xf32, #tpu.memory_space<vmem>>, vector<1x32xf32>
    tpu.vector_store %arg6[%c0_8, %c0_9], %10 {strides = array<i32>} : memref<1x32xf32, #tpu.memory_space<vmem>>, vector<1x32xf32>,
    %c0_i32_10 = arith.constant 0 : i32
    %12 = arith.cmpi eq, %arg1, %c0_i32_10 : i32
    %13 = arith.extui %12 : i1 to i32
    %c0_i32_11 = arith.constant 0 : i32
    %14 = arith.cmpi ne, %13, %c0_i32_11 : i32
    scf.if %14 {
      %c0_12 = arith.constant 0 : index
      %c0_13 = arith.constant 0 : index
      %15 = vector.load %arg6[%c0_12, %c0_13] : memref<1x32xf32, #tpu.memory_space<vmem>>, vector<1x32xf32>
      %cst_14 = arith.constant 6.250000e-02 : f32
      %16 = vector.broadcast %cst_14 : f32 to vector<1x32xf32>
      %17 = arith.mulf %15, %16 : vector<1x32xf32>
      %c0_15 = arith.constant 0 : index
      %c0_16 = arith.constant 0 : index
      %18 = vector.load %arg4[%c0_15, %c0_16] : memref<1x32xf32, #tpu.memory_space<vmem>>, vector<1x32xf32>
      %19 = arith.addf %17, %18 : vector<1x32xf32>
      %c0_17 = arith.constant 0 : index
      %c0_18 = arith.constant 0 : index
      %c0_19 = arith.constant 0 : index
      %20 = vector.load %arg5[%c0_17, %c0_18, %c0_19] : memref<1x1x32xf32, #tpu.memory_space<vmem>>, vector<1x1x32xf32>
      %21 = vector.shape_cast %20 : vector<1x1x32xf32> to vector<1x32xf32>
      %22 = vector.shape_cast %19 : vector<1x32xf32> to vector<1x1x32xf32>
      tpu.vector_store %arg5[%c0_17, %c0_18, %c0_19], %22 {strides = array<i32>} : memref<1x1x32xf32, #tpu.memory_space<vmem>>, vector<1x1x32xf32>,
    } else {
    }
    return
  }
  func.func @transform_0(%arg0: i32, %arg1: i32) -> (i32, i32, i32) {
    %c0_i32 = arith.constant 0 : i32
    %c0_i32_0 = arith.constant 0 : i32
    return %arg0, %arg1, %c0_i32 : i32, i32, i32
  }
  func.func @transform_1(%arg0: i32, %arg1: i32) -> (i32, i32) {
    %c0_i32 = arith.constant 0 : i32
    %c0_i32_0 = arith.constant 0 : i32
    %c0_i32_1 = arith.constant 0 : i32
    return %c0_i32, %c0_i32_0 : i32, i32
  }
  func.func @transform_2(%arg0: i32, %arg1: i32) -> (i32, i32) {
    %c0_i32 = arith.constant 0 : i32
    %c0_i32_0 = arith.constant 0 : i32
    %c0_i32_1 = arith.constant 0 : i32
    return %c0_i32, %c0_i32_0 : i32, i32
  }
  func.func @transform_3(%arg0: i32, %arg1: i32) -> (i32, i32, i32) {
    %c0_i32 = arith.constant 0 : i32
    %c0_i32_0 = arith.constant 0 : i32
    %c0_i32_1 = arith.constant 0 : i32
    return %arg0, %c0_i32, %c0_i32_0 : i32, i32, i32
  }
}

module attributes {stable_mosaic.version = 11 : i64} {
  func.func @_head_kernel(%arg0: memref<2x32xf32, #tpu.memory_space<vmem>>, %arg1: memref<32x16xf32, #tpu.memory_space<vmem>>, %arg2: memref<1x16xf32, #tpu.memory_space<vmem>>, %arg3: memref<16x8xf32, #tpu.memory_space<vmem>>, %arg4: memref<1x8xf32, #tpu.memory_space<vmem>>, %arg5: memref<8x4xf32, #tpu.memory_space<vmem>>, %arg6: memref<1x4xf32, #tpu.memory_space<vmem>>, %arg7: memref<2x4xf32, #tpu.memory_space<vmem>>) attributes {dimension_semantics = [], scalar_prefetch = 0 : i64, scratch_operands = 0 : i64, tpu.core_type = #tpu.core_type<tc>} {
    %c0 = arith.constant 0 : index
    %c0_0 = arith.constant 0 : index
    %0 = vector.load %arg0[%c0, %c0_0] : memref<2x32xf32, #tpu.memory_space<vmem>>, vector<2x32xf32>
    %c0_1 = arith.constant 0 : index
    %c0_2 = arith.constant 0 : index
    %1 = vector.load %arg1[%c0_1, %c0_2] : memref<32x16xf32, #tpu.memory_space<vmem>>, vector<32x16xf32>
    %cst = arith.constant dense<0.000000e+00> : vector<2x16xf32>
    %2 = tpu.matmul %0, %1, %cst {dimension_numbers = #tpu.dot_dimension_numbers<[1], [0], [0], [1], [0, 0, 1, 1], [], []>} : vector<2x32xf32>, vector<32x16xf32>, vector<2x16xf32> -> vector<2x16xf32>
    %c0_3 = arith.constant 0 : index
    %c0_4 = arith.constant 0 : index
    %3 = vector.load %arg2[%c0_3, %c0_4] : memref<1x16xf32, #tpu.memory_space<vmem>>, vector<1x16xf32>
    %4 = vector.broadcast %3 : vector<1x16xf32> to vector<2x16xf32>
    %5 = arith.addf %2, %4 : vector<2x16xf32>
    %c0_5 = arith.constant 0 : index
    %c0_6 = arith.constant 0 : index
    %6 = vector.load %arg3[%c0_5, %c0_6] : memref<16x8xf32, #tpu.memory_space<vmem>>, vector<16x8xf32>
    %cst_7 = arith.constant dense<0.000000e+00> : vector<2x8xf32>
    %7 = tpu.matmul %5, %6, %cst_7 {dimension_numbers = #tpu.dot_dimension_numbers<[1], [0], [0], [1], [0, 0, 1, 1], [], []>} : vector<2x16xf32>, vector<16x8xf32>, vector<2x8xf32> -> vector<2x8xf32>
    %c0_8 = arith.constant 0 : index
    %c0_9 = arith.constant 0 : index
    %8 = vector.load %arg4[%c0_8, %c0_9] : memref<1x8xf32, #tpu.memory_space<vmem>>, vector<1x8xf32>
    %9 = vector.broadcast %8 : vector<1x8xf32> to vector<2x8xf32>
    %10 = arith.addf %7, %9 : vector<2x8xf32>
    %c0_10 = arith.constant 0 : index
    %c0_11 = arith.constant 0 : index
    %11 = vector.load %arg5[%c0_10, %c0_11] : memref<8x4xf32, #tpu.memory_space<vmem>>, vector<8x4xf32>
    %cst_12 = arith.constant dense<0.000000e+00> : vector<2x4xf32>
    %12 = tpu.matmul %10, %11, %cst_12 {dimension_numbers = #tpu.dot_dimension_numbers<[1], [0], [0], [1], [0, 0, 1, 1], [], []>} : vector<2x8xf32>, vector<8x4xf32>, vector<2x4xf32> -> vector<2x4xf32>
    %c0_13 = arith.constant 0 : index
    %c0_14 = arith.constant 0 : index
    %13 = vector.load %arg6[%c0_13, %c0_14] : memref<1x4xf32, #tpu.memory_space<vmem>>, vector<1x4xf32>
    %14 = vector.broadcast %13 : vector<1x4xf32> to vector<2x4xf32>
    %15 = arith.addf %12, %14 : vector<2x4xf32>
    %c0_15 = arith.constant 0 : index
    %c0_16 = arith.constant 0 : index
    %16 = vector.load %arg7[%c0_15, %c0_16] : memref<2x4xf32, #tpu.memory_space<vmem>>, vector<2x4xf32>
    tpu.vector_store %arg7[%c0_15, %c0_16], %15 {strides = array<i32>} : memref<2x4xf32, #tpu.memory_space<vmem>>, vector<2x4xf32>,
    return
  }
}

</mosaic_0001>

<llo_original>
// kernel: transformer_forward_pallas.12
$region0: #{transformer_forward_pallas.12}
  #allocation0 [shape = 'u32[]', space=smem, size = 0x4, offset = 0x4, fixed_abs, tag = 'smem constant byte address 0x4 - core index']
  #allocation1 [shape = 'u32[144,128]{1,0:T(1,128)}', space=vmem, size = 0x12000, scoped, tag = 'internal scratch']
  %s0 = inlined_call_operand.hbm [shape: f32[32,8], index: 0, kind: input, shape index: {}]
  %s1 = inlined_call_operand.hbm [shape: f32[8,16], index: 1, kind: input, shape index: {}]
  %s2 = inlined_call_operand.hbm [shape: f32[1,16], index: 2, kind: input, shape index: {}]
  %s3 = inlined_call_operand.hbm [shape: f32[32,16], index: 3, kind: output, shape index: {}]
  %s4 = sld [smem:[#allocation0]]
  $region34: #{transformer_forward_pallas.12} parent=0
    _
  %s6 = ssub.s32 1, %s4
  %s7 = scalar_select 0, %s6, %s4
  $region1: #{transformer_forward_pallas.12} parent=0
    #allocation2 [shape = 'u8[16384]{0}', space=vmem, size = 0x4000, scoped, tag = 'input window, operand 0, single buffered']
    #allocation3 [shape = 's32[1]{0}', space=sflag, size = 0x4, scoped, tag = 'scoped memory for transformer_forward_pallas.12']
    #allocation4 [shape = 's32[1]{0}', space=sflag, size = 0x4, scoped, tag = 'scoped memory for transformer_forward_pallas.12']
    #allocation5 [shape = 'u8[4096]{0}', space=vmem, size = 0x1000, scoped, tag = 'input window, operand 1, single buffered']
    #allocation6 [shape = 's32[1]{0}', space=sflag, size = 0x4, scoped, tag = 'scoped memory for transformer_forward_pallas.12']
    #allocation7 [shape = 'u8[512]{0}', space=vmem, size = 0x400, scoped, tag = 'input window, operand 2, single buffered']
    #allocation8 [shape = 'u8[16384]{0}', space=vmem, size = 0x4000, scoped, tag = 'output window, operand 0, single buffered']
    %8 = vsyncpa [#allocation3], 0
    %9 = vsyncpa [#allocation6], 0
    %10 = vsyncpa [#allocation4], 0
    // Predicated region
    $region2: #{transformer_forward_pallas.12} parent=1 // pred_check
      _
    $region3: #{transformer_forward_pallas.12} parent=1 // pred_check_branch
      %12 = sbr.rel (0) target = $region5
    $region4: #{transformer_forward_pallas.12} parent=1 // pred_region
      %s14 = ssub.s32 512, 512
      %15 = vsyncadd [#allocation3], %s14
      %s16 = sshll.u32 [#allocation2], 4
      %s17 = int_to_ptr.vmem [resolvable:$true] %s16
      %22 = dma.hbm_to_vmem [thread:$0]  %s0, 512, %s17, [#allocation3], 128, 128, 8
    $region5: #{transformer_forward_pallas.12} parent=1 // pred_fallthru
      _
    // Predicated region
    $region6: #{transformer_forward_pallas.12} parent=1 // pred_check
      _
    $region7: #{transformer_forward_pallas.12} parent=1 // pred_check_branch
      %24 = sbr.rel (0) target = $region9
    $region8: #{transformer_forward_pallas.12} parent=1 // pred_region
      %s26 = ssub.s32 128, 128
      %27 = vsyncadd [#allocation6], %s26
      %s29 = sshll.u32 [#allocation5], 4
      %s30 = int_to_ptr.vmem [resolvable:$true] %s29
      %32 = dma.hbm_to_vmem [thread:$0]  %s1, 128, %s30, [#allocation6]
    $region9: #{transformer_forward_pallas.12} parent=1 // pred_fallthru
      _
    // Predicated region
    $region10: #{transformer_forward_pallas.12} parent=1 // pred_check
      _
    $region11: #{transformer_forward_pallas.12} parent=1 // pred_check_branch
      %34 = sbr.rel (0) target = $region13
    $region12: #{transformer_forward_pallas.12} parent=1 // pred_region
      %s36 = ssub.s32 16, 16
      %37 = vsyncadd [#allocation6], %s36
      %s39 = sshll.u32 [#allocation7], 4
      %s40 = int_to_ptr.vmem [resolvable:$true] %s39
      %42 = dma.hbm_to_vmem [thread:$0]  %s2, 16, %s40, [#allocation6]
    $region13: #{transformer_forward_pallas.12} parent=1 // pred_fallthru
      _
    // Predicated region
    $region14: #{transformer_forward_pallas.12} parent=1 // pred_check
      _
    $region15: #{transformer_forward_pallas.12} parent=1 // pred_check_branch
      %44 = sbr.rel (0) target = $region17
    $region16: #{transformer_forward_pallas.12} parent=1 // pred_region
      %45 = dma.done [#allocation3], 512
    $region17: #{transformer_forward_pallas.12} parent=1 // pred_fallthru
      _
    // Predicated region
    $region18: #{transformer_forward_pallas.12} parent=1 // pred_check
      _
    $region19: #{transformer_forward_pallas.12} parent=1 // pred_check_branch
      %47 = sbr.rel (0) target = $region21
    $region20: #{transformer_forward_pallas.12} parent=1 // pred_region
      %48 = dma.done [#allocation6], 128
    $region21: #{transformer_forward_pallas.12} parent=1 // pred_fallthru
      _
    // Predicated region
    $region22: #{transformer_forward_pallas.12} parent=1 // pred_check
      _
    $region23: #{transformer_forward_pallas.12} parent=1 // pred_check_branch
      %50 = sbr.rel (0) target = $region25
    $region24: #{transformer_forward_pallas.12} parent=1 // pred_region
      %51 = dma.done [#allocation6], 16
    $region25: #{transformer_forward_pallas.12} parent=1 // pred_fallthru
      _
    %v52 = vld [vmem:[#allocation2] sm:$0xff]
    %v53 = vld [vmem:[#allocation2 + $0x8] sm:$0xff]
    %v54 = vld [vmem:[#allocation2 + $0x10] sm:$0xff]
    %v55 = vld [vmem:[#allocation2 + $0x18] sm:$0xff]
    %v56 = vld [vmem:[#allocation5] sm:$0xff]
    %v57 = vld [vmem:[#allocation7] sm:$0x1]
    %v59 = vlaneseq
    %v60 = vshrl.u32 %v59, 7
    %v61 = vsub.s32 0, %v60
    %v62 = vrot.slane %v57, %v61
    %vm64 = vcmask 64512
    %v66 = vsel %vm64, %v52, 0
    %v69 = vsel %vm64, %v53, 0
    %v72 = vsel %vm64, %v54, 0
    %v75 = vsel %vm64, %v55, 0
    %77 = vmatprep.subr.mxu0 0.0
    %78 = vmatpush1.msra.mxu0 %v56
    %79 = vmatprep.subr.mxu0 0.0
    %80 = vmatpush1.msra.mxu0 0.0
    %81 = vmatprep.subr.mxu0 0.0
    %82 = vmatpush1.msra.mxu0 0.0
    %83 = vmatprep.subr.mxu0 0.0
    %84 = vmatpush1.msra.mxu0 0.0
    %85 = vmatprep.subr.mxu0 0.0
    %86 = vmatpush1.msra.mxu0 0.0
    %87 = vmatprep.subr.mxu0 0.0
    %88 = vmatpush1.msra.mxu0 0.0
    %89 = vmatprep.subr.mxu0 0.0
    %90 = vmatpush1.msra.mxu0 0.0
    %91 = vmatprep.subr.mxu0 0.0
    %92 = vmatpush1.msra.mxu0 0.0
    %93 = vmatprep.subr.mxu0 0.0
    %94 = vmatpush1.msra.mxu0 0.0
    %95 = vmatprep.subr.mxu0 0.0
    %96 = vmatpush1.msra.mxu0 0.0
    %97 = vmatprep.subr.mxu0 0.0
    %98 = vmatpush1.msra.mxu0 0.0
    %99 = vmatprep.subr.mxu0 0.0
    %100 = vmatpush1.msra.mxu0 0.0
    %101 = vmatprep.subr.mxu0 0.0
    %102 = vmatpush1.msra.mxu0 0.0
    %103 = vmatprep.subr.mxu0 0.0
    %104 = vmatpush1.msra.mxu0 0.0
    %105 = vmatprep.subr.mxu0 0.0
    %106 = vmatpush1.msra.mxu0 0.0
    %107 = vmatprep.subr.mxu0 0.0
    %108 = vmatpush1.msra.mxu0 0.0
    %109 = vmatprep.subr.mxu0 0.0
    %110 = vmatpush1.msra.mxu0 0.0
    %111 = vmatprep.subr.mxu0 0.0
    %112 = vmatpush1.msra.mxu0 0.0
    %113 = vmatprep.subr.mxu0 0.0
    %114 = vmatpush1.msra.mxu0 0.0
    %115 = vmatprep.subr.mxu0 0.0
    %116 = vmatpush1.msra.mxu0 0.0
    %117 = vmatprep.subr.mxu0 0.0
    %118 = vmatpush1.msra.mxu0 0.0
    %119 = vmatprep.subr.mxu0 0.0
    %120 = vmatpush1.msra.mxu0 0.0
    %121 = vmatprep.subr.mxu0 0.0
    %122 = vmatpush1.msra.mxu0 0.0
    %123 = vmatprep.subr.mxu0 0.0
    %124 = vmatpush1.msra.mxu0 0.0
    %125 = vmatprep.subr.mxu0 0.0
    %126 = vmatpush1.msra.mxu0 0.0
    %127 = vmatprep.subr.mxu0 0.0
    %128 = vmatpush1.msra.mxu0 0.0
    %129 = vmatprep.subr.mxu0 0.0
    %130 = vmatpush1.msra.mxu0 0.0
    %131 = vmatprep.subr.mxu0 0.0
    %132 = vmatpush1.msra.mxu0 0.0
    %133 = vmatprep.subr.mxu0 0.0
    %134 = vmatpush1.msra.mxu0 0.0
    %135 = vmatprep.subr.mxu0 0.0
    %136 = vmatpush1.msra.mxu0 0.0
    %137 = vmatprep.subr.mxu0 0.0
    %138 = vmatpush1.msra.mxu0 0.0
    %139 = vmatprep.subr.mxu0 0.0
    %140 = vmatpush1.msra.mxu0 0.0
    %141 = vmatprep.mubr.f32.mxu0 0.0
    %142 = vmatmul.mubr.f32.gmra.mrb[0].mxu0 %v66
    %v143 = vpop.f32.mrb[0].mxu0
    %v144 = vadd.f32 %v62, %v143
    %v145 = vpop.f32.mrb[0].mxu0
    %146 = vmatprep.mubr.f32.mxu0 0.0
    %147 = vmatmul.mubr.f32.gmra.mrb[0].mxu0 %v69
    %v148 = vpop.f32.mrb[0].mxu0
    %v149 = vadd.f32 %v62, %v148
    %v150 = vpop.f32.mrb[0].mxu0
    %151 = vmatprep.mubr.f32.mxu0 0.0
    %152 = vmatmul.mubr.f32.gmra.mrb[0].mxu0 %v72
    %v153 = vpop.f32.mrb[0].mxu0
    %v154 = vadd.f32 %v62, %v153
    %v155 = vpop.f32.mrb[0].mxu0
    %156 = vmatprep.mubr.f32.mxu0 0.0
    %157 = vmatmul.mubr.f32.gmra.mrb[0].mxu0 %v75
    %v158 = vpop.f32.mrb[0].mxu0
    %v159 = vadd.f32 %v62, %v158
    %v160 = vpop.f32.mrb[0].mxu0
    %161 = vdwg.mxu0
    %v162 = vmax.f32 %v144, 0.0
    %v163 = vmax.f32 %v149, 0.0
    %v164 = vmax.f32 %v154, 0.0
    %v165 = vmax.f32 %v159, 0.0
    %vm166 = vcmask 130048
    %167 = vst.msk [vmem:[#allocation8] sm:$0xff] %vm166, %v162
    %168 = vst.msk [vmem:[#allocation8 + $0x8] sm:$0xff] %vm166, %v163
    %169 = vst.msk [vmem:[#allocation8 + $0x10] sm:$0xff] %vm166, %v164
    %170 = vst.msk [vmem:[#allocation8 + $0x18] sm:$0xff] %vm166, %v165
    // Predicated region
    $region26: #{transformer_forward_pallas.12} parent=1 // pred_check
      _
    $region27: #{transformer_forward_pallas.12} parent=1 // pred_check_branch
      %172 = sbr.rel (0) target = $region29
    $region28: #{transformer_forward_pallas.12} parent=1 // pred_region
      %s174 = ssub.s32 512, 512
      %175 = vsyncadd [#allocation4], %s174
      %s176 = sshll.u32 [#allocation8], 4
      %s177 = int_to_ptr.vmem [resolvable:$true] %s176
      %182 = dma.vmem_to_hbm [thread:$0]  %s177, 512, %s3, [#allocation4], 128, 128, 8
    $region29: #{transformer_forward_pallas.12} parent=1 // pred_fallthru
      _
    // Predicated region
    $region30: #{transformer_forward_pallas.12} parent=1 // pred_check
      _
    $region31: #{transformer_forward_pallas.12} parent=1 // pred_check_branch
      %184 = sbr.rel (0) target = $region33
    $region32: #{transformer_forward_pallas.12} parent=1 // pred_region
      %185 = dma.done [#allocation4], 512
    $region33: #{transformer_forward_pallas.12} parent=1 // pred_fallthru
      _
    %186 = vsyncpa [#allocation3], 1
    %187 = vsyncpa [#allocation6], 1
    %188 = vsyncpa [#allocation4], 1

// kernel: transformer_forward_pallas.13
$region0: #{transformer_forward_pallas.13}
  #allocation0 [shape = 'u32[]', space=smem, size = 0x4, offset = 0x4, fixed_abs, tag = 'smem constant byte address 0x4 - core index']
  #allocation1 [shape = 'u32[144,128]{1,0:T(1,128)}', space=vmem, size = 0x12000, scoped, tag = 'internal scratch']
  %s0 = inlined_call_operand.hbm [shape: f32[32,16], index: 0, kind: input, shape index: {}]
  %s1 = inlined_call_operand.hbm [shape: f32[16,32], index: 1, kind: input, shape index: {}]
  %s2 = inlined_call_operand.hbm [shape: f32[1,32], index: 2, kind: input, shape index: {}]
  %s3 = inlined_call_operand.hbm [shape: f32[32,32], index: 3, kind: output, shape index: {}]
  %s4 = sld [smem:[#allocation0]]
  $region34: #{transformer_forward_pallas.13} parent=0
    _
  %s6 = ssub.s32 1, %s4
  %s7 = scalar_select 0, %s6, %s4
  $region1: #{transformer_forward_pallas.13} parent=0
    #allocation2 [shape = 'u8[16384]{0}', space=vmem, size = 0x4000, scoped, tag = 'input window, operand 0, single buffered']
    #allocation3 [shape = 's32[1]{0}', space=sflag, size = 0x4, scoped, tag = 'scoped memory for transformer_forward_pallas.13']
    #allocation4 [shape = 's32[1]{0}', space=sflag, size = 0x4, scoped, tag = 'scoped memory for transformer_forward_pallas.13']
    #allocation5 [shape = 'u8[8192]{0}', space=vmem, size = 0x2000, scoped, tag = 'input window, operand 1, single buffered']
    #allocation6 [shape = 's32[1]{0}', space=sflag, size = 0x4, scoped, tag = 'scoped memory for transformer_forward_pallas.13']
    #allocation7 [shape = 'u8[512]{0}', space=vmem, size = 0x400, scoped, tag = 'input window, operand 2, single buffered']
    #allocation8 [shape = 'u8[16384]{0}', space=vmem, size = 0x4000, scoped, tag = 'output window, operand 0, single buffered']
    %8 = vsyncpa [#allocation3], 0
    %9 = vsyncpa [#allocation6], 0
    %10 = vsyncpa [#allocation4], 0
    // Predicated region
    $region2: #{transformer_forward_pallas.13} parent=1 // pred_check
      _
    $region3: #{transformer_forward_pallas.13} parent=1 // pred_check_branch
      %12 = sbr.rel (0) target = $region5
    $region4: #{transformer_forward_pallas.13} parent=1 // pred_region
      %s14 = ssub.s32 512, 512
      %15 = vsyncadd [#allocation3], %s14
      %s16 = sshll.u32 [#allocation2], 4
      %s17 = int_to_ptr.vmem [resolvable:$true] %s16
      %22 = dma.hbm_to_vmem [thread:$0]  %s0, 512, %s17, [#allocation3], 128, 128, 8
    $region5: #{transformer_forward_pallas.13} parent=1 // pred_fallthru
      _
    // Predicated region
    $region6: #{transformer_forward_pallas.13} parent=1 // pred_check
      _
    $region7: #{transformer_forward_pallas.13} parent=1 // pred_check_branch
      %24 = sbr.rel (0) target = $region9
    $region8: #{transformer_forward_pallas.13} parent=1 // pred_region
      %s26 = ssub.s32 256, 256
      %27 = vsyncadd [#allocation6], %s26
      %s28 = sshll.u32 [#allocation5], 4
      %s29 = int_to_ptr.vmem [resolvable:$true] %s28
      %34 = dma.hbm_to_vmem [thread:$0]  %s1, 256, %s29, [#allocation6], 128, 128, 8
    $region9: #{transformer_forward_pallas.13} parent=1 // pred_fallthru
      _
    // Predicated region
    $region10: #{transformer_forward_pallas.13} parent=1 // pred_check
      _
    $region11: #{transformer_forward_pallas.13} parent=1 // pred_check_branch
      %36 = sbr.rel (0) target = $region13
    $region12: #{transformer_forward_pallas.13} parent=1 // pred_region
      %s38 = ssub.s32 16, 16
      %39 = vsyncadd [#allocation6], %s38
      %s41 = sshll.u32 [#allocation7], 4
      %s42 = int_to_ptr.vmem [resolvable:$true] %s41
      %44 = dma.hbm_to_vmem [thread:$0]  %s2, 16, %s42, [#allocation6]
    $region13: #{transformer_forward_pallas.13} parent=1 // pred_fallthru
      _
    // Predicated region
    $region14: #{transformer_forward_pallas.13} parent=1 // pred_check
      _
    $region15: #{transformer_forward_pallas.13} parent=1 // pred_check_branch
      %46 = sbr.rel (0) target = $region17
    $region16: #{transformer_forward_pallas.13} parent=1 // pred_region
      %47 = dma.done [#allocation3], 512
    $region17: #{transformer_forward_pallas.13} parent=1 // pred_fallthru
      _
    // Predicated region
    $region18: #{transformer_forward_pallas.13} parent=1 // pred_check
      _
    $region19: #{transformer_forward_pallas.13} parent=1 // pred_check_branch
      %49 = sbr.rel (0) target = $region21
    $region20: #{transformer_forward_pallas.13} parent=1 // pred_region
      %50 = dma.done [#allocation6], 256
    $region21: #{transformer_forward_pallas.13} parent=1 // pred_fallthru
      _
    // Predicated region
    $region22: #{transformer_forward_pallas.13} parent=1 // pred_check
      _
    $region23: #{transformer_forward_pallas.13} parent=1 // pred_check_branch
      %52 = sbr.rel (0) target = $region25
    $region24: #{transformer_forward_pallas.13} parent=1 // pred_region
      %53 = dma.done [#allocation6], 16
    $region25: #{transformer_forward_pallas.13} parent=1 // pred_fallthru
      _
    %v54 = vld [vmem:[#allocation2] sm:$0xff]
    %v55 = vld [vmem:[#allocation2 + $0x8] sm:$0xff]
    %v56 = vld [vmem:[#allocation2 + $0x10] sm:$0xff]
    %v57 = vld [vmem:[#allocation2 + $0x18] sm:$0xff]
    %v58 = vld [vmem:[#allocation5] sm:$0xff]
    %v59 = vld [vmem:[#allocation5 + $0x8] sm:$0xff]
    %v60 = vld [vmem:[#allocation7] sm:$0x1]
    %v62 = vlaneseq
    %v63 = vshrl.u32 %v62, 7
    %v64 = vsub.s32 0, %v63
    %v65 = vrot.slane %v60, %v64
    %vm67 = vcmask 130048
    %v69 = vsel %vm67, %v54, 0
    %v72 = vsel %vm67, %v55, 0
    %v75 = vsel %vm67, %v56, 0
    %v78 = vsel %vm67, %v57, 0
    %80 = vmatprep.subr.mxu0 0.0
    %81 = vmatpush1.msra.mxu0 %v58
    %82 = vmatprep.subr.mxu0 0.0
    %83 = vmatpush1.msra.mxu0 %v59
    %84 = vmatprep.subr.mxu0 0.0
    %85 = vmatpush1.msra.mxu0 0.0
    %86 = vmatprep.subr.mxu0 0.0
    %87 = vmatpush1.msra.mxu0 0.0
    %88 = vmatprep.subr.mxu0 0.0
    %89 = vmatpush1.msra.mxu0 0.0
    %90 = vmatprep.subr.mxu0 0.0
    %91 = vmatpush1.msra.mxu0 0.0
    %92 = vmatprep.subr.mxu0 0.0
    %93 = vmatpush1.msra.mxu0 0.0
    %94 = vmatprep.subr.mxu0 0.0
    %95 = vmatpush1.msra.mxu0 0.0
    %96 = vmatprep.subr.mxu0 0.0
    %97 = vmatpush1.msra.mxu0 0.0
    %98 = vmatprep.subr.mxu0 0.0
    %99 = vmatpush1.msra.mxu0 0.0
    %100 = vmatprep.subr.mxu0 0.0
    %101 = vmatpush1.msra.mxu0 0.0
    %102 = vmatprep.subr.mxu0 0.0
    %103 = vmatpush1.msra.mxu0 0.0
    %104 = vmatprep.subr.mxu0 0.0
    %105 = vmatpush1.msra.mxu0 0.0
    %106 = vmatprep.subr.mxu0 0.0
    %107 = vmatpush1.msra.mxu0 0.0
    %108 = vmatprep.subr.mxu0 0.0
    %109 = vmatpush1.msra.mxu0 0.0
    %110 = vmatprep.subr.mxu0 0.0
    %111 = vmatpush1.msra.mxu0 0.0
    %112 = vmatprep.subr.mxu0 0.0
    %113 = vmatpush1.msra.mxu0 0.0
    %114 = vmatprep.subr.mxu0 0.0
    %115 = vmatpush1.msra.mxu0 0.0
    %116 = vmatprep.subr.mxu0 0.0
    %117 = vmatpush1.msra.mxu0 0.0
    %118 = vmatprep.subr.mxu0 0.0
    %119 = vmatpush1.msra.mxu0 0.0
    %120 = vmatprep.subr.mxu0 0.0
    %121 = vmatpush1.msra.mxu0 0.0
    %122 = vmatprep.subr.mxu0 0.0
    %123 = vmatpush1.msra.mxu0 0.0
    %124 = vmatprep.subr.mxu0 0.0
    %125 = vmatpush1.msra.mxu0 0.0
    %126 = vmatprep.subr.mxu0 0.0
    %127 = vmatpush1.msra.mxu0 0.0
    %128 = vmatprep.subr.mxu0 0.0
    %129 = vmatpush1.msra.mxu0 0.0
    %130 = vmatprep.subr.mxu0 0.0
    %131 = vmatpush1.msra.mxu0 0.0
    %132 = vmatprep.subr.mxu0 0.0
    %133 = vmatpush1.msra.mxu0 0.0
    %134 = vmatprep.subr.mxu0 0.0
    %135 = vmatpush1.msra.mxu0 0.0
    %136 = vmatprep.subr.mxu0 0.0
    %137 = vmatpush1.msra.mxu0 0.0
    %138 = vmatprep.subr.mxu0 0.0
    %139 = vmatpush1.msra.mxu0 0.0
    %140 = vmatprep.subr.mxu0 0.0
    %141 = vmatpush1.msra.mxu0 0.0
    %142 = vmatprep.subr.mxu0 0.0
    %143 = vmatpush1.msra.mxu0 0.0
    %144 = vmatprep.mubr.f32.mxu0 0.0
    %145 = vmatmul.mubr.f32.gmra.mrb[0].mxu0 %v69
    %v146 = vpop.f32.mrb[0].mxu0
    %v147 = vadd.f32 %v65, %v146
    %v148 = vpop.f32.mrb[0].mxu0
    %149 = vmatprep.mubr.f32.mxu0 0.0
    %150 = vmatmul.mubr.f32.gmra.mrb[0].mxu0 %v72
    %v151 = vpop.f32.mrb[0].mxu0
    %v152 = vadd.f32 %v65, %v151
    %v153 = vpop.f32.mrb[0].mxu0
    %154 = vmatprep.mubr.f32.mxu0 0.0
    %155 = vmatmul.mubr.f32.gmra.mrb[0].mxu0 %v75
    %v156 = vpop.f32.mrb[0].mxu0
    %v157 = vadd.f32 %v65, %v156
    %v158 = vpop.f32.mrb[0].mxu0
    %159 = vmatprep.mubr.f32.mxu0 0.0
    %160 = vmatmul.mubr.f32.gmra.mrb[0].mxu0 %v78
    %v161 = vpop.f32.mrb[0].mxu0
    %v162 = vadd.f32 %v65, %v161
    %v163 = vpop.f32.mrb[0].mxu0
    %164 = vdwg.mxu0
    %vm165 = vcmask 261120
    %166 = vst.msk [vmem:[#allocation8] sm:$0xff] %vm165, %v147
    %167 = vst.msk [vmem:[#allocation8 + $0x8] sm:$0xff] %vm165, %v152
    %168 = vst.msk [vmem:[#allocation8 + $0x10] sm:$0xff] %vm165, %v157
    %169 = vst.msk [vmem:[#allocation8 + $0x18] sm:$0xff] %vm165, %v162
    // Predicated region
    $region26: #{transformer_forward_pallas.13} parent=1 // pred_check
      _
    $region27: #{transformer_forward_pallas.13} parent=1 // pred_check_branch
      %171 = sbr.rel (0) target = $region29
    $region28: #{transformer_forward_pallas.13} parent=1 // pred_region
      %s173 = ssub.s32 512, 512
      %174 = vsyncadd [#allocation4], %s173
      %s175 = sshll.u32 [#allocation8], 4
      %s176 = int_to_ptr.vmem [resolvable:$true] %s175
      %181 = dma.vmem_to_hbm [thread:$0]  %s176, 512, %s3, [#allocation4], 128, 128, 8
    $region29: #{transformer_forward_pallas.13} parent=1 // pred_fallthru
      _
    // Predicated region
    $region30: #{transformer_forward_pallas.13} parent=1 // pred_check
      _
    $region31: #{transformer_forward_pallas.13} parent=1 // pred_check_branch
      %183 = sbr.rel (0) target = $region33
    $region32: #{transformer_forward_pallas.13} parent=1 // pred_region
      %184 = dma.done [#allocation4], 512
    $region33: #{transformer_forward_pallas.13} parent=1 // pred_fallthru
      _
    %185 = vsyncpa [#allocation3], 1
    %186 = vsyncpa [#allocation6], 1
    %187 = vsyncpa [#allocation4], 1

// kernel: transformer_forward_pallas.14
$region0: #{transformer_forward_pallas.14}
  #allocation0 [shape = 'u32[]', space=smem, size = 0x4, offset = 0x4, fixed_abs, tag = 'smem constant byte address 0x4 - core index']
  #allocation1 [shape = 'u32[144,128]{1,0:T(1,128)}', space=vmem, size = 0x12000, scoped, tag = 'internal scratch']
  %s0 = inlined_call_operand.hbm [shape: f32[32,32], index: 0, kind: input, shape index: {}]
  %s1 = inlined_call_operand.hbm [shape: f32[32,96], index: 1, kind: input, shape index: {}]
  %s2 = inlined_call_operand.hbm [shape: f32[1,96], index: 2, kind: input, shape index: {}]
  %s3 = inlined_call_operand.hbm [shape: f32[32,32], index: 3, kind: output, shape index: {0}]
  %s4 = inlined_call_operand.hbm [shape: f32[32,32], index: 4, kind: output, shape index: {1}]
  %s5 = inlined_call_operand.hbm [shape: f32[32,32], index: 5, kind: output, shape index: {2}]
  %6 = xla_tuple %s3, %s4, %s5
  %s7 = sld [smem:[#allocation0]]
  $region50: #{transformer_forward_pallas.14} parent=0
    _
  %s9 = ssub.s32 1, %s7
  %s10 = scalar_select 0, %s9, %s7
  $region1: #{transformer_forward_pallas.14} parent=0
    #allocation2 [shape = 'u8[16384]{0}', space=vmem, size = 0x4000, scoped, tag = 'input window, operand 0, single buffered']
    #allocation3 [shape = 's32[1]{0}', space=sflag, size = 0x4, scoped, tag = 'scoped memory for transformer_forward_pallas.14']
    #allocation4 [shape = 's32[1]{0}', space=sflag, size = 0x4, scoped, tag = 'scoped memory for transformer_forward_pallas.14']
    #allocation5 [shape = 'u8[16384]{0}', space=vmem, size = 0x4000, scoped, tag = 'input window, operand 1, single buffered']
    #allocation6 [shape = 's32[1]{0}', space=sflag, size = 0x4, scoped, tag = 'scoped memory for transformer_forward_pallas.14']
    #allocation7 [shape = 'u8[512]{0}', space=vmem, size = 0x400, scoped, tag = 'input window, operand 2, single buffered']
    #allocation8 [shape = 'u8[16384]{0}', space=vmem, size = 0x4000, scoped, tag = 'output window, operand 0, single buffered']
    #allocation9 [shape = 'u8[16384]{0}', space=vmem, size = 0x4000, scoped, tag = 'output window, operand 1, single buffered']
    #allocation10 [shape = 's32[1]{0}', space=sflag, size = 0x4, scoped, tag = 'scoped memory for transformer_forward_pallas.14']
    #allocation11 [shape = 'u8[16384]{0}', space=vmem, size = 0x4000, scoped, tag = 'output window, operand 2, single buffered']
    %11 = vsyncpa [#allocation3], 0
    %12 = vsyncpa [#allocation6], 0
    %13 = vsyncpa [#allocation4], 0
    %14 = vsyncpa [#allocation10], 0
    // Predicated region
    $region2: #{transformer_forward_pallas.14} parent=1 // pred_check
      _
    $region3: #{transformer_forward_pallas.14} parent=1 // pred_check_branch
      %16 = sbr.rel (0) target = $region5
    $region4: #{transformer_forward_pallas.14} parent=1 // pred_region
      %s18 = ssub.s32 512, 512
      %19 = vsyncadd [#allocation3], %s18
      %s20 = sshll.u32 [#allocation2], 4
      %s21 = int_to_ptr.vmem [resolvable:$true] %s20
      %26 = dma.hbm_to_vmem [thread:$0]  %s0, 512, %s21, [#allocation3], 128, 128, 8
    $region5: #{transformer_forward_pallas.14} parent=1 // pred_fallthru
      _
    // Predicated region
    $region6: #{transformer_forward_pallas.14} parent=1 // pred_check
      _
    $region7: #{transformer_forward_pallas.14} parent=1 // pred_check_branch
      %28 = sbr.rel (0) target = $region9
    $region8: #{transformer_forward_pallas.14} parent=1 // pred_region
      %s30 = ssub.s32 512, 512
      %31 = vsyncadd [#allocation6], %s30
      %s32 = sshll.u32 [#allocation5], 4
      %s33 = int_to_ptr.vmem [resolvable:$true] %s32
      %38 = dma.hbm_to_vmem [thread:$0]  %s1, 512, %s33, [#allocation6], 128, 128, 8
    $region9: #{transformer_forward_pallas.14} parent=1 // pred_fallthru
      _
    // Predicated region
    $region10: #{transformer_forward_pallas.14} parent=1 // pred_check
      _
    $region11: #{transformer_forward_pallas.14} parent=1 // pred_check_branch
      %40 = sbr.rel (0) target = $region13
    $region12: #{transformer_forward_pallas.14} parent=1 // pred_region
      %s42 = ssub.s32 16, 16
      %43 = vsyncadd [#allocation6], %s42
      %s45 = sshll.u32 [#allocation7], 4
      %s46 = int_to_ptr.vmem [resolvable:$true] %s45
      %48 = dma.hbm_to_vmem [thread:$0]  %s2, 16, %s46, [#allocation6]
    $region13: #{transformer_forward_pallas.14} parent=1 // pred_fallthru
      _
    // Predicated region
    $region14: #{transformer_forward_pallas.14} parent=1 // pred_check
      _
    $region15: #{transformer_forward_pallas.14} parent=1 // pred_check_branch
      %50 = sbr.rel (0) target = $region17
    $region16: #{transformer_forward_pallas.14} parent=1 // pred_region
      %51 = dma.done [#allocation3], 512
    $region17: #{transformer_forward_pallas.14} parent=1 // pred_fallthru
      _
    // Predicated region
    $region18: #{transformer_forward_pallas.14} parent=1 // pred_check
      _
    $region19: #{transformer_forward_pallas.14} parent=1 // pred_check_branch
      %53 = sbr.rel (0) target = $region21
    $region20: #{transformer_forward_pallas.14} parent=1 // pred_region
      %54 = dma.done [#allocation6], 512
    $region21: #{transformer_forward_pallas.14} parent=1 // pred_fallthru
      _
    // Predicated region
    $region22: #{transformer_forward_pallas.14} parent=1 // pred_check
      _
    $region23: #{transformer_forward_pallas.14} parent=1 // pred_check_branch
      %56 = sbr.rel (0) target = $region25
    $region24: #{transformer_forward_pallas.14} parent=1 // pred_region
      %57 = dma.done [#allocation6], 16
    $region25: #{transformer_forward_pallas.14} parent=1 // pred_fallthru
      _
    %v58 = vld [vmem:[#allocation2] sm:$0xff]
    %v59 = vld [vmem:[#allocation2 + $0x8] sm:$0xff]
    %v60 = vld [vmem:[#allocation2 + $0x10] sm:$0xff]
    %v61 = vld [vmem:[#allocation2 + $0x18] sm:$0xff]
    %v62 = vld [vmem:[#allocation5] sm:$0xff]
    %v63 = vld [vmem:[#allocation5 + $0x8] sm:$0xff]
    %v64 = vld [vmem:[#allocation5 + $0x10] sm:$0xff]
    %v65 = vld [vmem:[#allocation5 + $0x18] sm:$0xff]
    %v66 = vld [vmem:[#allocation7] sm:$0x1]
    %v68 = vlaneseq
    %v69 = vshrl.u32 %v68, 7
    %v70 = vsub.s32 0, %v69
    %v71 = vrot.slane %v66, %v70
    %vm73 = vcmask 261120
    %v75 = vsel %vm73, %v58, 0
    %v78 = vsel %vm73, %v59, 0
    %v81 = vsel %vm73, %v60, 0
    %v84 = vsel %vm73, %v61, 0
    %86 = vmatprep.subr.mxu0 0.0
    %87 = vmatpush1.msra.mxu0 %v62
    %88 = vmatprep.subr.mxu0 0.0
    %89 = vmatpush1.msra.mxu0 %v63
    %90 = vmatprep.subr.mxu0 0.0
    %91 = vmatpush1.msra.mxu0 %v64
    %92 = vmatprep.subr.mxu0 0.0
    %93 = vmatpush1.msra.mxu0 %v65
    %94 = vmatprep.subr.mxu0 0.0
    %95 = vmatpush1.msra.mxu0 0.0
    %96 = vmatprep.subr.mxu0 0.0
    %97 = vmatpush1.msra.mxu0 0.0
    %98 = vmatprep.subr.mxu0 0.0
    %99 = vmatpush1.msra.mxu0 0.0
    %100 = vmatprep.subr.mxu0 0.0
    %101 = vmatpush1.msra.mxu0 0.0
    %102 = vmatprep.subr.mxu0 0.0
    %103 = vmatpush1.msra.mxu0 0.0
    %104 = vmatprep.subr.mxu0 0.0
    %105 = vmatpush1.msra.mxu0 0.0
    %106 = vmatprep.subr.mxu0 0.0
    %107 = vmatpush1.msra.mxu0 0.0
    %108 = vmatprep.subr.mxu0 0.0
    %109 = vmatpush1.msra.mxu0 0.0
    %110 = vmatprep.subr.mxu0 0.0
    %111 = vmatpush1.msra.mxu0 0.0
    %112 = vmatprep.subr.mxu0 0.0
    %113 = vmatpush1.msra.mxu0 0.0
    %114 = vmatprep.subr.mxu0 0.0
    %115 = vmatpush1.msra.mxu0 0.0
    %116 = vmatprep.subr.mxu0 0.0
    %117 = vmatpush1.msra.mxu0 0.0
    %118 = vmatprep.subr.mxu0 0.0
    %119 = vmatpush1.msra.mxu0 0.0
    %120 = vmatprep.subr.mxu0 0.0
    %121 = vmatpush1.msra.mxu0 0.0
    %122 = vmatprep.subr.mxu0 0.0
    %123 = vmatpush1.msra.mxu0 0.0
    %124 = vmatprep.subr.mxu0 0.0
    %125 = vmatpush1.msra.mxu0 0.0
    %126 = vmatprep.subr.mxu0 0.0
    %127 = vmatpush1.msra.mxu0 0.0
    %128 = vmatprep.subr.mxu0 0.0
    %129 = vmatpush1.msra.mxu0 0.0
    %130 = vmatprep.subr.mxu0 0.0
    %131 = vmatpush1.msra.mxu0 0.0
    %132 = vmatprep.subr.mxu0 0.0
    %133 = vmatpush1.msra.mxu0 0.0
    %134 = vmatprep.subr.mxu0 0.0
    %135 = vmatpush1.msra.mxu0 0.0
    %136 = vmatprep.subr.mxu0 0.0
    %137 = vmatpush1.msra.mxu0 0.0
    %138 = vmatprep.subr.mxu0 0.0
    %139 = vmatpush1.msra.mxu0 0.0
    %140 = vmatprep.subr.mxu0 0.0
    %141 = vmatpush1.msra.mxu0 0.0
    %142 = vmatprep.subr.mxu0 0.0
    %143 = vmatpush1.msra.mxu0 0.0
    %144 = vmatprep.subr.mxu0 0.0
    %145 = vmatpush1.msra.mxu0 0.0
    %146 = vmatprep.subr.mxu0 0.0
    %147 = vmatpush1.msra.mxu0 0.0
    %148 = vmatprep.subr.mxu0 0.0
    %149 = vmatpush1.msra.mxu0 0.0
    %150 = vmatprep.mubr.f32.mxu0 0.0
    %151 = vmatmul.mubr.f32.gmra.mrb[0].mxu0 %v75
    %v152 = vpop.f32.mrb[0].mxu0
    %v153 = vadd.f32 %v71, %v152
    %v154 = vpop.f32.mrb[0].mxu0
    %155 = vmatprep.mubr.f32.mxu0 0.0
    %156 = vmatmul.mubr.f32.gmra.mrb[0].mxu0 %v78
    %v157 = vpop.f32.mrb[0].mxu0
    %v158 = vadd.f32 %v71, %v157
    %v159 = vpop.f32.mrb[0].mxu0
    %160 = vmatprep.mubr.f32.mxu0 0.0
    %161 = vmatmul.mubr.f32.gmra.mrb[0].mxu0 %v81
    %v162 = vpop.f32.mrb[0].mxu0
    %v163 = vadd.f32 %v71, %v162
    %v164 = vpop.f32.mrb[0].mxu0
    %165 = vmatprep.mubr.f32.mxu0 0.0
    %166 = vmatmul.mubr.f32.gmra.mrb[0].mxu0 %v84
    %v167 = vpop.f32.mrb[0].mxu0
    %v168 = vadd.f32 %v71, %v167
    %v169 = vpop.f32.mrb[0].mxu0
    %170 = vdwg.mxu0
    %171 = vst.msk [vmem:[#allocation8] sm:$0xff] %vm73, %v153
    %172 = vst.msk [vmem:[#allocation8 + $0x8] sm:$0xff] %vm73, %v158
    %173 = vst.msk [vmem:[#allocation8 + $0x10] sm:$0xff] %vm73, %v163
    %174 = vst.msk [vmem:[#allocation8 + $0x18] sm:$0xff] %vm73, %v168
    %179 = vrot.lane.b32.xlu0 %v153, 96
    %v180 = vpop.permute.xlu0 %179
    %181 = vrot.lane.b32.xlu0 %v158, 96
    %v182 = vpop.permute.xlu0 %181
    %183 = vrot.lane.b32.xlu0 %v163, 96
    %v184 = vpop.permute.xlu0 %183
    %185 = vrot.lane.b32.xlu0 %v168, 96
    %v186 = vpop.permute.xlu0 %185
    %191 = vst.msk [vmem:[#allocation9] sm:$0xff] %vm73, %v180
    %192 = vst.msk [vmem:[#allocation9 + $0x8] sm:$0xff] %vm73, %v182
    %193 = vst.msk [vmem:[#allocation9 + $0x10] sm:$0xff] %vm73, %v184
    %194 = vst.msk [vmem:[#allocation9 + $0x18] sm:$0xff] %vm73, %v186
    %195 = vrot.lane.b32.xlu0 %v153, 64
    %v196 = vpop.permute.xlu0 %195
    %197 = vrot.lane.b32.xlu0 %v158, 64
    %v198 = vpop.permute.xlu0 %197
    %199 = vrot.lane.b32.xlu0 %v163, 64
    %v200 = vpop.permute.xlu0 %199
    %201 = vrot.lane.b32.xlu0 %v168, 64
    %v202 = vpop.permute.xlu0 %201
    %207 = vst.msk [vmem:[#allocation11] sm:$0xff] %vm73, %v196
    %208 = vst.msk [vmem:[#allocation11 + $0x8] sm:$0xff] %vm73, %v198
    %209 = vst.msk [vmem:[#allocation11 + $0x10] sm:$0xff] %vm73, %v200
    %210 = vst.msk [vmem:[#allocation11 + $0x18] sm:$0xff] %vm73, %v202
    // Predicated region
    $region26: #{transformer_forward_pallas.14} parent=1 // pred_check
      _
    $region27: #{transformer_forward_pallas.14} parent=1 // pred_check_branch
      %212 = sbr.rel (0) target = $region29
    $region28: #{transformer_forward_pallas.14} parent=1 // pred_region
      %s214 = ssub.s32 512, 512
      %215 = vsyncadd [#allocation4], %s214
      %s216 = sshll.u32 [#allocation8], 4
      %s217 = int_to_ptr.vmem [resolvable:$true] %s216
      %222 = dma.vmem_to_hbm [thread:$0]  %s217, 512, %s3, [#allocation4], 128, 128, 8
    $region29: #{transformer_forward_pallas.14} parent=1 // pred_fallthru
      _
    // Predicated region
    $region30: #{transformer_forward_pallas.14} parent=1 // pred_check
      _
    $region31: #{transformer_forward_pallas.14} parent=1 // pred_check_branch
      %224 = sbr.rel (0) target = $region33
    $region32: #{transformer_forward_pallas.14} parent=1 // pred_region
      %s226 = ssub.s32 512, 512
      %227 = vsyncadd [#allocation10], %s226
      %s228 = sshll.u32 [#allocation9], 4
      %s229 = int_to_ptr.vmem [resolvable:$true] %s228
      %234 = dma.vmem_to_hbm [thread:$0]  %s229, 512, %s4, [#allocation10], 128, 128, 8
    $region33: #{transformer_forward_pallas.14} parent=1 // pred_fallthru
      _
    // Predicated region
    $region34: #{transformer_forward_pallas.14} parent=1 // pred_check
      _
    $region35: #{transformer_forward_pallas.14} parent=1 // pred_check_branch
      %236 = sbr.rel (0) target = $region37
    $region36: #{transformer_forward_pallas.14} parent=1 // pred_region
      %s238 = ssub.s32 512, 512
      %239 = vsyncadd [#allocation10], %s238
      %s240 = sshll.u32 [#allocation11], 4
      %s241 = int_to_ptr.vmem [resolvable:$true] %s240
      %246 = dma.vmem_to_hbm [thread:$0]  %s241, 512, %s5, [#allocation10], 128, 128, 8
    $region37: #{transformer_forward_pallas.14} parent=1 // pred_fallthru
      _
    // Predicated region
    $region38: #{transformer_forward_pallas.14} parent=1 // pred_check
      _
    $region39: #{transformer_forward_pallas.14} parent=1 // pred_check_branch
      %248 = sbr.rel (0) target = $region41
    $region40: #{transformer_forward_pallas.14} parent=1 // pred_region
      %249 = dma.done [#allocation4], 512
    $region41: #{transformer_forward_pallas.14} parent=1 // pred_fallthru
      _
    // Predicated region
    $region42: #{transformer_forward_pallas.14} parent=1 // pred_check
      _
    $region43: #{transformer_forward_pallas.14} parent=1 // pred_check_branch
      %251 = sbr.rel (0) target = $region45
    $region44: #{transformer_forward_pallas.14} parent=1 // pred_region
      %252 = dma.done [#allocation10], 512
    $region45: #{transformer_forward_pallas.14} parent=1 // pred_fallthru
      _
    // Predicated region
    $region46: #{transformer_forward_pallas.14} parent=1 // pred_check
      _
    $region47: #{transformer_forward_pallas.14} parent=1 // pred_check_branch
      %254 = sbr.rel (0) target = $region49
    $region48: #{transformer_forward_pallas.14} parent=1 // pred_region
      %255 = dma.done [#allocation10], 512
    $region49: #{transformer_forward_pallas.14} parent=1 // pred_fallthru
      _
    %256 = vsyncpa [#allocation3], 1
    %257 = vsyncpa [#allocation6], 1
    %258 = vsyncpa [#allocation4], 1
    %259 = vsyncpa [#allocation10], 1

// kernel: transformer_forward_pallas.20
$region0: #{transformer_forward_pallas.20}
  #allocation0 [shape = 'u32[]', space=smem, size = 0x4, offset = 0x4, fixed_abs, tag = 'smem constant byte address 0x4 - core index']
  #allocation1 [shape = 'u32[144,128]{1,0:T(1,128)}', space=vmem, size = 0x12000, scoped, tag = 'internal scratch']
  %s0 = inlined_call_operand.hbm [shape: f32[32,32], index: 0, kind: input, shape index: {}]
  %s1 = inlined_call_operand.hbm [shape: f32[32,32], index: 1, kind: input, shape index: {}]
  %s2 = inlined_call_operand.hbm [shape: f32[1,32], index: 2, kind: input, shape index: {}]
  %s3 = inlined_call_operand.hbm [shape: f32[32,32], index: 3, kind: output, shape index: {}]
  %s4 = sld [smem:[#allocation0]]
  $region34: #{transformer_forward_pallas.20} parent=0
    _
  %s6 = ssub.s32 1, %s4
  %s7 = scalar_select 0, %s6, %s4
  $region1: #{transformer_forward_pallas.20} parent=0
    #allocation2 [shape = 'u8[16384]{0}', space=vmem, size = 0x4000, scoped, tag = 'input window, operand 0, single buffered']
    #allocation3 [shape = 's32[1]{0}', space=sflag, size = 0x4, scoped, tag = 'scoped memory for transformer_forward_pallas.20']
    #allocation4 [shape = 's32[1]{0}', space=sflag, size = 0x4, scoped, tag = 'scoped memory for transformer_forward_pallas.20']
    #allocation5 [shape = 'u8[16384]{0}', space=vmem, size = 0x4000, scoped, tag = 'input window, operand 1, single buffered']
    #allocation6 [shape = 's32[1]{0}', space=sflag, size = 0x4, scoped, tag = 'scoped memory for transformer_forward_pallas.20']
    #allocation7 [shape = 'u8[512]{0}', space=vmem, size = 0x400, scoped, tag = 'input window, operand 2, single buffered']
    #allocation8 [shape = 'u8[16384]{0}', space=vmem, size = 0x4000, scoped, tag = 'output window, operand 0, single buffered']
    %8 = vsyncpa [#allocation3], 0
    %9 = vsyncpa [#allocation6], 0
    %10 = vsyncpa [#allocation4], 0
    // Predicated region
    $region2: #{transformer_forward_pallas.20} parent=1 // pred_check
      _
    $region3: #{transformer_forward_pallas.20} parent=1 // pred_check_branch
      %12 = sbr.rel (0) target = $region5
    $region4: #{transformer_forward_pallas.20} parent=1 // pred_region
      %s14 = ssub.s32 512, 512
      %15 = vsyncadd [#allocation3], %s14
      %s16 = sshll.u32 [#allocation2], 4
      %s17 = int_to_ptr.vmem [resolvable:$true] %s16
      %22 = dma.hbm_to_vmem [thread:$0]  %s0, 512, %s17, [#allocation3], 128, 128, 8
    $region5: #{transformer_forward_pallas.20} parent=1 // pred_fallthru
      _
    // Predicated region
    $region6: #{transformer_forward_pallas.20} parent=1 // pred_check
      _
    $region7: #{transformer_forward_pallas.20} parent=1 // pred_check_branch
      %24 = sbr.rel (0) target = $region9
    $region8: #{transformer_forward_pallas.20} parent=1 // pred_region
      %s26 = ssub.s32 512, 512
      %27 = vsyncadd [#allocation6], %s26
      %s28 = sshll.u32 [#allocation5], 4
      %s29 = int_to_ptr.vmem [resolvable:$true] %s28
      %34 = dma.hbm_to_vmem [thread:$0]  %s1, 512, %s29, [#allocation6], 128, 128, 8
    $region9: #{transformer_forward_pallas.20} parent=1 // pred_fallthru
      _
    // Predicated region
    $region10: #{transformer_forward_pallas.20} parent=1 // pred_check
      _
    $region11: #{transformer_forward_pallas.20} parent=1 // pred_check_branch
      %36 = sbr.rel (0) target = $region13
    $region12: #{transformer_forward_pallas.20} parent=1 // pred_region
      %s38 = ssub.s32 16, 16
      %39 = vsyncadd [#allocation6], %s38
      %s41 = sshll.u32 [#allocation7], 4
      %s42 = int_to_ptr.vmem [resolvable:$true] %s41
      %44 = dma.hbm_to_vmem [thread:$0]  %s2, 16, %s42, [#allocation6]
    $region13: #{transformer_forward_pallas.20} parent=1 // pred_fallthru
      _
    // Predicated region
    $region14: #{transformer_forward_pallas.20} parent=1 // pred_check
      _
    $region15: #{transformer_forward_pallas.20} parent=1 // pred_check_branch
      %46 = sbr.rel (0) target = $region17
    $region16: #{transformer_forward_pallas.20} parent=1 // pred_region
      %47 = dma.done [#allocation3], 512
    $region17: #{transformer_forward_pallas.20} parent=1 // pred_fallthru
      _
    // Predicated region
    $region18: #{transformer_forward_pallas.20} parent=1 // pred_check
      _
    $region19: #{transformer_forward_pallas.20} parent=1 // pred_check_branch
      %49 = sbr.rel (0) target = $region21
    $region20: #{transformer_forward_pallas.20} parent=1 // pred_region
      %50 = dma.done [#allocation6], 512
    $region21: #{transformer_forward_pallas.20} parent=1 // pred_fallthru
      _
    // Predicated region
    $region22: #{transformer_forward_pallas.20} parent=1 // pred_check
      _
    $region23: #{transformer_forward_pallas.20} parent=1 // pred_check_branch
      %52 = sbr.rel (0) target = $region25
    $region24: #{transformer_forward_pallas.20} parent=1 // pred_region
      %53 = dma.done [#allocation6], 16
    $region25: #{transformer_forward_pallas.20} parent=1 // pred_fallthru
      _
    %v54 = vld [vmem:[#allocation2] sm:$0xff]
    %v55 = vld [vmem:[#allocation2 + $0x8] sm:$0xff]
    %v56 = vld [vmem:[#allocation2 + $0x10] sm:$0xff]
    %v57 = vld [vmem:[#allocation2 + $0x18] sm:$0xff]
    %v58 = vld [vmem:[#allocation5] sm:$0xff]
    %v59 = vld [vmem:[#allocation5 + $0x8] sm:$0xff]
    %v60 = vld [vmem:[#allocation5 + $0x10] sm:$0xff]
    %v61 = vld [vmem:[#allocation5 + $0x18] sm:$0xff]
    %v62 = vld [vmem:[#allocation7] sm:$0x1]
    %v64 = vlaneseq
    %v65 = vshrl.u32 %v64, 7
    %v66 = vsub.s32 0, %v65
    %v67 = vrot.slane %v62, %v66
    %vm69 = vcmask 261120
    %v71 = vsel %vm69, %v54, 0
    %v74 = vsel %vm69, %v55, 0
    %v77 = vsel %vm69, %v56, 0
    %v80 = vsel %vm69, %v57, 0
    %82 = vmatprep.subr.mxu0 0.0
    %83 = vmatpush1.msra.mxu0 %v58
    %84 = vmatprep.subr.mxu0 0.0
    %85 = vmatpush1.msra.mxu0 %v59
    %86 = vmatprep.subr.mxu0 0.0
    %87 = vmatpush1.msra.mxu0 %v60
    %88 = vmatprep.subr.mxu0 0.0
    %89 = vmatpush1.msra.mxu0 %v61
    %90 = vmatprep.subr.mxu0 0.0
    %91 = vmatpush1.msra.mxu0 0.0
    %92 = vmatprep.subr.mxu0 0.0
    %93 = vmatpush1.msra.mxu0 0.0
    %94 = vmatprep.subr.mxu0 0.0
    %95 = vmatpush1.msra.mxu0 0.0
    %96 = vmatprep.subr.mxu0 0.0
    %97 = vmatpush1.msra.mxu0 0.0
    %98 = vmatprep.subr.mxu0 0.0
    %99 = vmatpush1.msra.mxu0 0.0
    %100 = vmatprep.subr.mxu0 0.0
    %101 = vmatpush1.msra.mxu0 0.0
    %102 = vmatprep.subr.mxu0 0.0
    %103 = vmatpush1.msra.mxu0 0.0
    %104 = vmatprep.subr.mxu0 0.0
    %105 = vmatpush1.msra.mxu0 0.0
    %106 = vmatprep.subr.mxu0 0.0
    %107 = vmatpush1.msra.mxu0 0.0
    %108 = vmatprep.subr.mxu0 0.0
    %109 = vmatpush1.msra.mxu0 0.0
    %110 = vmatprep.subr.mxu0 0.0
    %111 = vmatpush1.msra.mxu0 0.0
    %112 = vmatprep.subr.mxu0 0.0
    %113 = vmatpush1.msra.mxu0 0.0
    %114 = vmatprep.subr.mxu0 0.0
    %115 = vmatpush1.msra.mxu0 0.0
    %116 = vmatprep.subr.mxu0 0.0
    %117 = vmatpush1.msra.mxu0 0.0
    %118 = vmatprep.subr.mxu0 0.0
    %119 = vmatpush1.msra.mxu0 0.0
    %120 = vmatprep.subr.mxu0 0.0
    %121 = vmatpush1.msra.mxu0 0.0
    %122 = vmatprep.subr.mxu0 0.0
    %123 = vmatpush1.msra.mxu0 0.0
    %124 = vmatprep.subr.mxu0 0.0
    %125 = vmatpush1.msra.mxu0 0.0
    %126 = vmatprep.subr.mxu0 0.0
    %127 = vmatpush1.msra.mxu0 0.0
    %128 = vmatprep.subr.mxu0 0.0
    %129 = vmatpush1.msra.mxu0 0.0
    %130 = vmatprep.subr.mxu0 0.0
    %131 = vmatpush1.msra.mxu0 0.0
    %132 = vmatprep.subr.mxu0 0.0
    %133 = vmatpush1.msra.mxu0 0.0
    %134 = vmatprep.subr.mxu0 0.0
    %135 = vmatpush1.msra.mxu0 0.0
    %136 = vmatprep.subr.mxu0 0.0
    %137 = vmatpush1.msra.mxu0 0.0
    %138 = vmatprep.subr.mxu0 0.0
    %139 = vmatpush1.msra.mxu0 0.0
    %140 = vmatprep.subr.mxu0 0.0
    %141 = vmatpush1.msra.mxu0 0.0
    %142 = vmatprep.subr.mxu0 0.0
    %143 = vmatpush1.msra.mxu0 0.0
    %144 = vmatprep.subr.mxu0 0.0
    %145 = vmatpush1.msra.mxu0 0.0
    %146 = vmatprep.mubr.f32.mxu0 0.0
    %147 = vmatmul.mubr.f32.gmra.mrb[0].mxu0 %v71
    %v148 = vpop.f32.mrb[0].mxu0
    %v149 = vadd.f32 %v67, %v148
    %v150 = vpop.f32.mrb[0].mxu0
    %151 = vmatprep.mubr.f32.mxu0 0.0
    %152 = vmatmul.mubr.f32.gmra.mrb[0].mxu0 %v74
    %v153 = vpop.f32.mrb[0].mxu0
    %v154 = vadd.f32 %v67, %v153
    %v155 = vpop.f32.mrb[0].mxu0
    %156 = vmatprep.mubr.f32.mxu0 0.0
    %157 = vmatmul.mubr.f32.gmra.mrb[0].mxu0 %v77
    %v158 = vpop.f32.mrb[0].mxu0
    %v159 = vadd.f32 %v67, %v158
    %v160 = vpop.f32.mrb[0].mxu0
    %161 = vmatprep.mubr.f32.mxu0 0.0
    %162 = vmatmul.mubr.f32.gmra.mrb[0].mxu0 %v80
    %v163 = vpop.f32.mrb[0].mxu0
    %v164 = vadd.f32 %v67, %v163
    %v165 = vpop.f32.mrb[0].mxu0
    %166 = vdwg.mxu0
    %v167 = vmul.f32 %v149, 0.5
    %v168 = vmul.f32 %v154, 0.5
    %v169 = vmul.f32 %v159, 0.5
    %v170 = vmul.f32 %v164, 0.5
    %v171 = vmul.f32 %v149, 0.044715
    %v172 = vmul.f32 %v154, 0.044715
    %v173 = vmul.f32 %v159, 0.044715
    %v174 = vmul.f32 %v164, 0.044715
    %v175 = vmul.f32 %v171, %v149
    %v176 = vmul.f32 %v172, %v154
    %v177 = vmul.f32 %v173, %v159
    %v178 = vmul.f32 %v174, %v164
    %v179 = vmul.f32 %v175, %v149
    %v180 = vmul.f32 %v176, %v154
    %v181 = vmul.f32 %v177, %v159
    %v182 = vmul.f32 %v178, %v164
    %v183 = vadd.f32 %v149, %v179
    %v184 = vadd.f32 %v154, %v180
    %v185 = vadd.f32 %v159, %v181
    %v186 = vadd.f32 %v164, %v182
    %v187 = vmul.f32 %v183, 0.7978846
    %v188 = vmul.f32 %v184, 0.7978846
    %v189 = vmul.f32 %v185, 0.7978846
    %v190 = vmul.f32 %v186, 0.7978846
    %v191 = vtanh.pop %v187
    %v192 = vtanh.pop %v188
    %v193 = vtanh.pop %v189
    %v194 = vtanh.pop %v190
    %v195 = vadd.f32 %v191, 1.0
    %v196 = vadd.f32 %v192, 1.0
    %v197 = vadd.f32 %v193, 1.0
    %v198 = vadd.f32 %v194, 1.0
    %v199 = vmul.f32 %v167, %v195
    %v200 = vmul.f32 %v168, %v196
    %v201 = vmul.f32 %v169, %v197
    %v202 = vmul.f32 %v170, %v198
    %203 = vst.msk [vmem:[#allocation8] sm:$0xff] %vm69, %v199
    %204 = vst.msk [vmem:[#allocation8 + $0x8] sm:$0xff] %vm69, %v200
    %205 = vst.msk [vmem:[#allocation8 + $0x10] sm:$0xff] %vm69, %v201
    %206 = vst.msk [vmem:[#allocation8 + $0x18] sm:$0xff] %vm69, %v202
    // Predicated region
    $region26: #{transformer_forward_pallas.20} parent=1 // pred_check
      _
    $region27: #{transformer_forward_pallas.20} parent=1 // pred_check_branch
      %208 = sbr.rel (0) target = $region29
    $region28: #{transformer_forward_pallas.20} parent=1 // pred_region
      %s210 = ssub.s32 512, 512
      %211 = vsyncadd [#allocation4], %s210
      %s212 = sshll.u32 [#allocation8], 4
      %s213 = int_to_ptr.vmem [resolvable:$true] %s212
      %218 = dma.vmem_to_hbm [thread:$0]  %s213, 512, %s3, [#allocation4], 128, 128, 8
    $region29: #{transformer_forward_pallas.20} parent=1 // pred_fallthru
      _
    // Predicated region
    $region30: #{transformer_forward_pallas.20} parent=1 // pred_check
      _
    $region31: #{transformer_forward_pallas.20} parent=1 // pred_check_branch
      %220 = sbr.rel (0) target = $region33
    $region32: #{transformer_forward_pallas.20} parent=1 // pred_region
      %221 = dma.done [#allocation4], 512
    $region33: #{transformer_forward_pallas.20} parent=1 // pred_fallthru
      _
    %222 = vsyncpa [#allocation3], 1
    %223 = vsyncpa [#allocation6], 1
    %224 = vsyncpa [#allocation4], 1

// kernel: transformer_forward_pallas.16
$region0: #{transformer_forward_pallas.16}
  #allocation0 [shape = 'u32[]', space=smem, size = 0x4, offset = 0x4, fixed_abs, tag = 'smem constant byte address 0x4 - core index']
  #allocation1 [shape = 'u32[144,128]{1,0:T(1,128)}', space=vmem, size = 0x12000, scoped, tag = 'internal scratch']
  %s0 = inlined_call_operand.hbm [shape: f32[32,32], index: 0, kind: input, shape index: {}]
  %s1 = inlined_call_operand.hbm [shape: f32[32,64], index: 1, kind: input, shape index: {}]
  %s2 = inlined_call_operand.hbm [shape: f32[1,64], index: 2, kind: input, shape index: {}]
  %s3 = inlined_call_operand.hbm [shape: f32[64,32], index: 3, kind: input, shape index: {}]
  %s4 = inlined_call_operand.hbm [shape: f32[1,32], index: 4, kind: input, shape index: {}]
  %s5 = inlined_call_operand.hbm [shape: f32[1,32], index: 5, kind: input, shape index: {}]
  %s6 = inlined_call_operand.hbm [shape: f32[1,32], index: 6, kind: input, shape index: {}]
  %s7 = inlined_call_operand.hbm [shape: f32[32,32], index: 7, kind: output, shape index: {}]
  %s8 = sld [smem:[#allocation0]]
  $region66: #{transformer_forward_pallas.16} parent=0
    _
  %s10 = ssub.s32 1, %s8
  %s11 = scalar_select 0, %s10, %s8
  $region1: #{transformer_forward_pallas.16} parent=0
    #allocation2 [shape = 'u8[16384]{0}', space=vmem, size = 0x4000, scoped, tag = 'input window, operand 0, single buffered']
    #allocation3 [shape = 's32[1]{0}', space=sflag, size = 0x4, scoped, tag = 'scoped memory for transformer_forward_pallas.16']
    #allocation4 [shape = 's32[1]{0}', space=sflag, size = 0x4, scoped, tag = 'scoped memory for transformer_forward_pallas.16']
    #allocation5 [shape = 'u8[16384]{0}', space=vmem, size = 0x4000, scoped, tag = 'input window, operand 1, single buffered']
    #allocation6 [shape = 's32[1]{0}', space=sflag, size = 0x4, scoped, tag = 'scoped memory for transformer_forward_pallas.16']
    #allocation7 [shape = 'u8[512]{0}', space=vmem, size = 0x400, scoped, tag = 'input window, operand 2, single buffered']
    #allocation8 [shape = 'u8[32768]{0}', space=vmem, size = 0x8000, scoped, tag = 'input window, operand 3, single buffered']
    #allocation9 [shape = 's32[1]{0}', space=sflag, size = 0x4, scoped, tag = 'scoped memory for transformer_forward_pallas.16']
    #allocation10 [shape = 'u8[512]{0}', space=vmem, size = 0x400, scoped, tag = 'input window, operand 4, single buffered']
    #allocation11 [shape = 'u8[512]{0}', space=vmem, size = 0x400, scoped, tag = 'input window, operand 5, single buffered']
    #allocation12 [shape = 's32[1]{0}', space=sflag, size = 0x4, scoped, tag = 'scoped memory for transformer_forward_pallas.16']
    #allocation13 [shape = 'u8[512]{0}', space=vmem, size = 0x400, scoped, tag = 'input window, operand 6, single buffered']
    #allocation14 [shape = 'u8[16384]{0}', space=vmem, size = 0x4000, scoped, tag = 'output window, operand 0, single buffered']
    %12 = vsyncpa [#allocation3], 0
    %13 = vsyncpa [#allocation6], 0
    %14 = vsyncpa [#allocation9], 0
    %15 = vsyncpa [#allocation12], 0
    %16 = vsyncpa [#allocation4], 0
    // Predicated region
    $region2: #{transformer_forward_pallas.16} parent=1 // pred_check
      _
    $region3: #{transformer_forward_pallas.16} parent=1 // pred_check_branch
      %18 = sbr.rel (0) target = $region5
    $region4: #{transformer_forward_pallas.16} parent=1 // pred_region
      %s20 = ssub.s32 512, 512
      %21 = vsyncadd [#allocation3], %s20
      %s22 = sshll.u32 [#allocation2], 4
      %s23 = int_to_ptr.vmem [resolvable:$true] %s22
      %28 = dma.hbm_to_vmem [thread:$0]  %s0, 512, %s23, [#allocation3], 128, 128, 8
    $region5: #{transformer_forward_pallas.16} parent=1 // pred_fallthru
      _
    // Predicated region
    $region6: #{transformer_forward_pallas.16} parent=1 // pred_check
      _
    $region7: #{transformer_forward_pallas.16} parent=1 // pred_check_branch
      %30 = sbr.rel (0) target = $region9
    $region8: #{transformer_forward_pallas.16} parent=1 // pred_region
      %s32 = ssub.s32 512, 512
      %33 = vsyncadd [#allocation6], %s32
      %s34 = sshll.u32 [#allocation5], 4
      %s35 = int_to_ptr.vmem [resolvable:$true] %s34
      %40 = dma.hbm_to_vmem [thread:$0]  %s1, 512, %s35, [#allocation6], 128, 128, 8
    $region9: #{transformer_forward_pallas.16} parent=1 // pred_fallthru
      _
    // Predicated region
    $region10: #{transformer_forward_pallas.16} parent=1 // pred_check
      _
    $region11: #{transformer_forward_pallas.16} parent=1 // pred_check_branch
      %42 = sbr.rel (0) target = $region13
    $region12: #{transformer_forward_pallas.16} parent=1 // pred_region
      %s44 = ssub.s32 16, 16
      %45 = vsyncadd [#allocation6], %s44
      %s47 = sshll.u32 [#allocation7], 4
      %s48 = int_to_ptr.vmem [resolvable:$true] %s47
      %50 = dma.hbm_to_vmem [thread:$0]  %s2, 16, %s48, [#allocation6]
    $region13: #{transformer_forward_pallas.16} parent=1 // pred_fallthru
      _
    // Predicated region
    $region14: #{transformer_forward_pallas.16} parent=1 // pred_check
      _
    $region15: #{transformer_forward_pallas.16} parent=1 // pred_check_branch
      %52 = sbr.rel (0) target = $region17
    $region16: #{transformer_forward_pallas.16} parent=1 // pred_region
      %s54 = ssub.s32 1024, 1024
      %55 = vsyncadd [#allocation9], %s54
      %s56 = sshll.u32 [#allocation8], 4
      %s57 = int_to_ptr.vmem [resolvable:$true] %s56
      %62 = dma.hbm_to_vmem [thread:$0]  %s3, 1024, %s57, [#allocation9], 128, 128, 8
    $region17: #{transformer_forward_pallas.16} parent=1 // pred_fallthru
      _
    // Predicated region
    $region18: #{transformer_forward_pallas.16} parent=1 // pred_check
      _
    $region19: #{transformer_forward_pallas.16} parent=1 // pred_check_branch
      %64 = sbr.rel (0) target = $region21
    $region20: #{transformer_forward_pallas.16} parent=1 // pred_region
      %s66 = ssub.s32 16, 16
      %67 = vsyncadd [#allocation9], %s66
      %s69 = sshll.u32 [#allocation10], 4
      %s70 = int_to_ptr.vmem [resolvable:$true] %s69
      %72 = dma.hbm_to_vmem [thread:$0]  %s4, 16, %s70, [#allocation9]
    $region21: #{transformer_forward_pallas.16} parent=1 // pred_fallthru
      _
    // Predicated region
    $region22: #{transformer_forward_pallas.16} parent=1 // pred_check
      _
    $region23: #{transformer_forward_pallas.16} parent=1 // pred_check_branch
      %74 = sbr.rel (0) target = $region25
    $region24: #{transformer_forward_pallas.16} parent=1 // pred_region
      %s76 = ssub.s32 16, 16
      %77 = vsyncadd [#allocation12], %s76
      %s79 = sshll.u32 [#allocation11], 4
      %s80 = int_to_ptr.vmem [resolvable:$true] %s79
      %82 = dma.hbm_to_vmem [thread:$0]  %s5, 16, %s80, [#allocation12]
    $region25: #{transformer_forward_pallas.16} parent=1 // pred_fallthru
      _
    // Predicated region
    $region26: #{transformer_forward_pallas.16} parent=1 // pred_check
      _
    $region27: #{transformer_forward_pallas.16} parent=1 // pred_check_branch
      %84 = sbr.rel (0) target = $region29
    $region28: #{transformer_forward_pallas.16} parent=1 // pred_region
      %s86 = ssub.s32 16, 16
      %87 = vsyncadd [#allocation12], %s86
      %s89 = sshll.u32 [#allocation13], 4
      %s90 = int_to_ptr.vmem [resolvable:$true] %s89
      %92 = dma.hbm_to_vmem [thread:$0]  %s6, 16, %s90, [#allocation12]
    $region29: #{transformer_forward_pallas.16} parent=1 // pred_fallthru
      _
    // Predicated region
    $region30: #{transformer_forward_pallas.16} parent=1 // pred_check
      _
    $region31: #{transformer_forward_pallas.16} parent=1 // pred_check_branch
      %94 = sbr.rel (0) target = $region33
    $region32: #{transformer_forward_pallas.16} parent=1 // pred_region
      %95 = dma.done [#allocation3], 512
    $region33: #{transformer_forward_pallas.16} parent=1 // pred_fallthru
      _
    // Predicated region
    $region34: #{transformer_forward_pallas.16} parent=1 // pred_check
      _
    $region35: #{transformer_forward_pallas.16} parent=1 // pred_check_branch
      %97 = sbr.rel (0) target = $region37
    $region36: #{transformer_forward_pallas.16} parent=1 // pred_region
      %98 = dma.done [#allocation6], 512
    $region37: #{transformer_forward_pallas.16} parent=1 // pred_fallthru
      _
    // Predicated region
    $region38: #{transformer_forward_pallas.16} parent=1 // pred_check
      _
    $region39: #{transformer_forward_pallas.16} parent=1 // pred_check_branch
      %100 = sbr.rel (0) target = $region41
    $region40: #{transformer_forward_pallas.16} parent=1 // pred_region
      %101 = dma.done [#allocation6], 16
    $region41: #{transformer_forward_pallas.16} parent=1 // pred_fallthru
      _
    // Predicated region
    $region42: #{transformer_forward_pallas.16} parent=1 // pred_check
      _
    $region43: #{transformer_forward_pallas.16} parent=1 // pred_check_branch
      %103 = sbr.rel (0) target = $region45
    $region44: #{transformer_forward_pallas.16} parent=1 // pred_region
      %104 = dma.done [#allocation9], 1024
    $region45: #{transformer_forward_pallas.16} parent=1 // pred_fallthru
      _
    // Predicated region
    $region46: #{transformer_forward_pallas.16} parent=1 // pred_check
      _
    $region47: #{transformer_forward_pallas.16} parent=1 // pred_check_branch
      %106 = sbr.rel (0) target = $region49
    $region48: #{transformer_forward_pallas.16} parent=1 // pred_region
      %107 = dma.done [#allocation9], 16
    $region49: #{transformer_forward_pallas.16} parent=1 // pred_fallthru
      _
    // Predicated region
    $region50: #{transformer_forward_pallas.16} parent=1 // pred_check
      _
    $region51: #{transformer_forward_pallas.16} parent=1 // pred_check_branch
      %109 = sbr.rel (0) target = $region53
    $region52: #{transformer_forward_pallas.16} parent=1 // pred_region
      %110 = dma.done [#allocation12], 16
    $region53: #{transformer_forward_pallas.16} parent=1 // pred_fallthru
      _
    // Predicated region
    $region54: #{transformer_forward_pallas.16} parent=1 // pred_check
      _
    $region55: #{transformer_forward_pallas.16} parent=1 // pred_check_branch
      %112 = sbr.rel (0) target = $region57
    $region56: #{transformer_forward_pallas.16} parent=1 // pred_region
      %113 = dma.done [#allocation12], 16
    $region57: #{transformer_forward_pallas.16} parent=1 // pred_fallthru
      _
    %v114 = vld [vmem:[#allocation2] sm:$0xff]
    %v115 = vld [vmem:[#allocation2 + $0x8] sm:$0xff]
    %v116 = vld [vmem:[#allocation2 + $0x10] sm:$0xff]
    %v117 = vld [vmem:[#allocation2 + $0x18] sm:$0xff]
    %v118 = vld [vmem:[#allocation5] sm:$0xff]
    %v119 = vld [vmem:[#allocation5 + $0x8] sm:$0xff]
    %v120 = vld [vmem:[#allocation5 + $0x10] sm:$0xff]
    %v121 = vld [vmem:[#allocation5 + $0x18] sm:$0xff]
    %v122 = vld [vmem:[#allocation7] sm:$0x1]
    %v124 = vlaneseq
    %v125 = vshrl.u32 %v124, 7
    %v126 = vsub.s32 0, %v125
    %v127 = vrot.slane %v122, %v126
    %vm129 = vcmask 261120
    %v131 = vsel %vm129, %v114, 0
    %v134 = vsel %vm129, %v115, 0
    %v137 = vsel %vm129, %v116, 0
    %v140 = vsel %vm129, %v117, 0
    %142 = vmatprep.subr.mxu0 0.0
    %143 = vmatpush1.msra.mxu0 %v118
    %144 = vmatprep.subr.mxu0 0.0
    %145 = vmatpush1.msra.mxu0 %v119
    %146 = vmatprep.subr.mxu0 0.0
    %147 = vmatpush1.msra.mxu0 %v120
    %148 = vmatprep.subr.mxu0 0.0
    %149 = vmatpush1.msra.mxu0 %v121
    %150 = vmatprep.subr.mxu0 0.0
    %151 = vmatpush1.msra.mxu0 0.0
    %152 = vmatprep.subr.mxu0 0.0
    %153 = vmatpush1.msra.mxu0 0.0
    %154 = vmatprep.subr.mxu0 0.0
    %155 = vmatpush1.msra.mxu0 0.0
    %156 = vmatprep.subr.mxu0 0.0
    %157 = vmatpush1.msra.mxu0 0.0
    %158 = vmatprep.subr.mxu0 0.0
    %159 = vmatpush1.msra.mxu0 0.0
    %160 = vmatprep.subr.mxu0 0.0
    %161 = vmatpush1.msra.mxu0 0.0
    %162 = vmatprep.subr.mxu0 0.0
    %163 = vmatpush1.msra.mxu0 0.0
    %164 = vmatprep.subr.mxu0 0.0
    %165 = vmatpush1.msra.mxu0 0.0
    %166 = vmatprep.subr.mxu0 0.0
    %167 = vmatpush1.msra.mxu0 0.0
    %168 = vmatprep.subr.mxu0 0.0
    %169 = vmatpush1.msra.mxu0 0.0
    %170 = vmatprep.subr.mxu0 0.0
    %171 = vmatpush1.msra.mxu0 0.0
    %172 = vmatprep.subr.mxu0 0.0
    %173 = vmatpush1.msra.mxu0 0.0
    %174 = vmatprep.subr.mxu0 0.0
    %175 = vmatpush1.msra.mxu0 0.0
    %176 = vmatprep.subr.mxu0 0.0
    %177 = vmatpush1.msra.mxu0 0.0
    %178 = vmatprep.subr.mxu0 0.0
    %179 = vmatpush1.msra.mxu0 0.0
    %180 = vmatprep.subr.mxu0 0.0
    %181 = vmatpush1.msra.mxu0 0.0
    %182 = vmatprep.subr.mxu0 0.0
    %183 = vmatpush1.msra.mxu0 0.0
    %184 = vmatprep.subr.mxu0 0.0
    %185 = vmatpush1.msra.mxu0 0.0
    %186 = vmatprep.subr.mxu0 0.0
    %187 = vmatpush1.msra.mxu0 0.0
    %188 = vmatprep.subr.mxu0 0.0
    %189 = vmatpush1.msra.mxu0 0.0
    %190 = vmatprep.subr.mxu0 0.0
    %191 = vmatpush1.msra.mxu0 0.0
    %192 = vmatprep.subr.mxu0 0.0
    %193 = vmatpush1.msra.mxu0 0.0
    %194 = vmatprep.subr.mxu0 0.0
    %195 = vmatpush1.msra.mxu0 0.0
    %196 = vmatprep.subr.mxu0 0.0
    %197 = vmatpush1.msra.mxu0 0.0
    %198 = vmatprep.subr.mxu0 0.0
    %199 = vmatpush1.msra.mxu0 0.0
    %200 = vmatprep.subr.mxu0 0.0
    %201 = vmatpush1.msra.mxu0 0.0
    %202 = vmatprep.subr.mxu0 0.0
    %203 = vmatpush1.msra.mxu0 0.0
    %204 = vmatprep.subr.mxu0 0.0
    %205 = vmatpush1.msra.mxu0 0.0
    %206 = vmatprep.mubr.f32.mxu0 0.0
    %207 = vmatmul.mubr.f32.gmra.mrb[0].mxu0 %v131
    %v208 = vpop.f32.mrb[0].mxu0
    %v209 = vadd.f32 %v127, %v208
    %v210 = vpop.f32.mrb[0].mxu0
    %211 = vmatprep.mubr.f32.mxu0 0.0
    %212 = vmatmul.mubr.f32.gmra.mrb[0].mxu0 %v134
    %v213 = vpop.f32.mrb[0].mxu0
    %v214 = vadd.f32 %v127, %v213
    %v215 = vpop.f32.mrb[0].mxu0
    %216 = vmatprep.mubr.f32.mxu0 0.0
    %217 = vmatmul.mubr.f32.gmra.mrb[0].mxu0 %v137
    %v218 = vpop.f32.mrb[0].mxu0
    %v219 = vadd.f32 %v127, %v218
    %v220 = vpop.f32.mrb[0].mxu0
    %221 = vmatprep.mubr.f32.mxu0 0.0
    %222 = vmatmul.mubr.f32.gmra.mrb[0].mxu0 %v140
    %v223 = vpop.f32.mrb[0].mxu0
    %v224 = vadd.f32 %v127, %v223
    %v225 = vpop.f32.mrb[0].mxu0
    %226 = vdwg.mxu0
    %v227 = vmul.f32 %v209, 0.5
    %v228 = vmul.f32 %v214, 0.5
    %v229 = vmul.f32 %v219, 0.5
    %v230 = vmul.f32 %v224, 0.5
    %v231 = vmul.f32 %v209, 0.044715
    %v232 = vmul.f32 %v214, 0.044715
    %v233 = vmul.f32 %v219, 0.044715
    %v234 = vmul.f32 %v224, 0.044715
    %v235 = vmul.f32 %v231, %v209
    %v236 = vmul.f32 %v232, %v214
    %v237 = vmul.f32 %v233, %v219
    %v238 = vmul.f32 %v234, %v224
    %v239 = vmul.f32 %v235, %v209
    %v240 = vmul.f32 %v236, %v214
    %v241 = vmul.f32 %v237, %v219
    %v242 = vmul.f32 %v238, %v224
    %v243 = vadd.f32 %v209, %v239
    %v244 = vadd.f32 %v214, %v240
    %v245 = vadd.f32 %v219, %v241
    %v246 = vadd.f32 %v224, %v242
    %v247 = vmul.f32 %v243, 0.7978846
    %v248 = vmul.f32 %v244, 0.7978846
    %v249 = vmul.f32 %v245, 0.7978846
    %v250 = vmul.f32 %v246, 0.7978846
    %v251 = vtanh.pop %v247
    %v252 = vtanh.pop %v248
    %v253 = vtanh.pop %v249
    %v254 = vtanh.pop %v250
    %v255 = vadd.f32 %v251, 1.0
    %v256 = vadd.f32 %v252, 1.0
    %v257 = vadd.f32 %v253, 1.0
    %v258 = vadd.f32 %v254, 1.0
    %v259 = vmul.f32 %v227, %v255
    %v260 = vmul.f32 %v228, %v256
    %v261 = vmul.f32 %v229, %v257
    %v262 = vmul.f32 %v230, %v258
    %v263 = vld [vmem:[#allocation8] sm:$0xff]
    %v264 = vld [vmem:[#allocation8 + $0x8] sm:$0xff]
    %v265 = vld [vmem:[#allocation8 + $0x10] sm:$0xff]
    %v266 = vld [vmem:[#allocation8 + $0x18] sm:$0xff]
    %v267 = vld [vmem:[#allocation8 + $0x20] sm:$0xff]
    %v268 = vld [vmem:[#allocation8 + $0x28] sm:$0xff]
    %v269 = vld [vmem:[#allocation8 + $0x30] sm:$0xff]
    %v270 = vld [vmem:[#allocation8 + $0x38] sm:$0xff]
    %v271 = vld [vmem:[#allocation10] sm:$0x1]
    %v273 = vlaneseq
    %v274 = vshrl.u32 %v273, 7
    %v275 = vsub.s32 0, %v274
    %v276 = vrot.slane %v271, %v275
    %vm278 = vcmask 523264
    %v280 = vsel %vm278, %v259, 0
    %v283 = vsel %vm278, %v260, 0
    %v286 = vsel %vm278, %v261, 0
    %v289 = vsel %vm278, %v262, 0
    %291 = vmatprep.subr.mxu0 0.0
    %292 = vmatpush1.msra.mxu0 %v263
    %293 = vmatprep.subr.mxu0 0.0
    %294 = vmatpush1.msra.mxu0 %v264
    %295 = vmatprep.subr.mxu0 0.0
    %296 = vmatpush1.msra.mxu0 %v265
    %297 = vmatprep.subr.mxu0 0.0
    %298 = vmatpush1.msra.mxu0 %v266
    %299 = vmatprep.subr.mxu0 0.0
    %300 = vmatpush1.msra.mxu0 %v267
    %301 = vmatprep.subr.mxu0 0.0
    %302 = vmatpush1.msra.mxu0 %v268
    %303 = vmatprep.subr.mxu0 0.0
    %304 = vmatpush1.msra.mxu0 %v269
    %305 = vmatprep.subr.mxu0 0.0
    %306 = vmatpush1.msra.mxu0 %v270
    %307 = vmatprep.subr.mxu0 0.0
    %308 = vmatpush1.msra.mxu0 0.0
    %309 = vmatprep.subr.mxu0 0.0
    %310 = vmatpush1.msra.mxu0 0.0
    %311 = vmatprep.subr.mxu0 0.0
    %312 = vmatpush1.msra.mxu0 0.0
    %313 = vmatprep.subr.mxu0 0.0
    %314 = vmatpush1.msra.mxu0 0.0
    %315 = vmatprep.subr.mxu0 0.0
    %316 = vmatpush1.msra.mxu0 0.0
    %317 = vmatprep.subr.mxu0 0.0
    %318 = vmatpush1.msra.mxu0 0.0
    %319 = vmatprep.subr.mxu0 0.0
    %320 = vmatpush1.msra.mxu0 0.0
    %321 = vmatprep.subr.mxu0 0.0
    %322 = vmatpush1.msra.mxu0 0.0
    %323 = vmatprep.subr.mxu0 0.0
    %324 = vmatpush1.msra.mxu0 0.0
    %325 = vmatprep.subr.mxu0 0.0
    %326 = vmatpush1.msra.mxu0 0.0
    %327 = vmatprep.subr.mxu0 0.0
    %328 = vmatpush1.msra.mxu0 0.0
    %329 = vmatprep.subr.mxu0 0.0
    %330 = vmatpush1.msra.mxu0 0.0
    %331 = vmatprep.subr.mxu0 0.0
    %332 = vmatpush1.msra.mxu0 0.0
    %333 = vmatprep.subr.mxu0 0.0
    %334 = vmatpush1.msra.mxu0 0.0
    %335 = vmatprep.subr.mxu0 0.0
    %336 = vmatpush1.msra.mxu0 0.0
    %337 = vmatprep.subr.mxu0 0.0
    %338 = vmatpush1.msra.mxu0 0.0
    %339 = vmatprep.subr.mxu0 0.0
    %340 = vmatpush1.msra.mxu0 0.0
    %341 = vmatprep.subr.mxu0 0.0
    %342 = vmatpush1.msra.mxu0 0.0
    %343 = vmatprep.subr.mxu0 0.0
    %344 = vmatpush1.msra.mxu0 0.0
    %345 = vmatprep.subr.mxu0 0.0
    %346 = vmatpush1.msra.mxu0 0.0
    %347 = vmatprep.subr.mxu0 0.0
    %348 = vmatpush1.msra.mxu0 0.0
    %349 = vmatprep.subr.mxu0 0.0
    %350 = vmatpush1.msra.mxu0 0.0
    %351 = vmatprep.subr.mxu0 0.0
    %352 = vmatpush1.msra.mxu0 0.0
    %353 = vmatprep.subr.mxu0 0.0
    %354 = vmatpush1.msra.mxu0 0.0
    %355 = vmatprep.mubr.f32.mxu0 0.0
    %356 = vmatmul.mubr.f32.gmra.mrb[0].mxu0 %v280
    %v357 = vpop.f32.mrb[0].mxu0
    %v358 = vadd.f32 %v276, %v357
    %v359 = vpop.f32.mrb[0].mxu0
    %360 = vmatprep.mubr.f32.mxu0 0.0
    %361 = vmatmul.mubr.f32.gmra.mrb[0].mxu0 %v283
    %v362 = vpop.f32.mrb[0].mxu0
    %v363 = vadd.f32 %v276, %v362
    %v364 = vpop.f32.mrb[0].mxu0
    %365 = vmatprep.mubr.f32.mxu0 0.0
    %366 = vmatmul.mubr.f32.gmra.mrb[0].mxu0 %v286
    %v367 = vpop.f32.mrb[0].mxu0
    %v368 = vadd.f32 %v276, %v367
    %v369 = vpop.f32.mrb[0].mxu0
    %370 = vmatprep.mubr.f32.mxu0 0.0
    %371 = vmatmul.mubr.f32.gmra.mrb[0].mxu0 %v289
    %v372 = vpop.f32.mrb[0].mxu0
    %v373 = vadd.f32 %v276, %v372
    %v374 = vpop.f32.mrb[0].mxu0
    %375 = vdwg.mxu0
    %v376 = vadd.f32 %v358, %v114
    %v377 = vadd.f32 %v363, %v115
    %v378 = vadd.f32 %v368, %v116
    %v379 = vadd.f32 %v373, %v117
    %v380 = vsel %vm129, %v376, 0.0
    %381 = vadd.xlane.f32.xlu0 %v380
    %v382 = vpop.xlane.xlu0 %381
    %v383 = vsel %vm129, %v377, 0.0
    %384 = vadd.xlane.f32.xlu0 %v383
    %v385 = vpop.xlane.xlu0 %384
    %v386 = vsel %vm129, %v378, 0.0
    %387 = vadd.xlane.f32.xlu0 %v386
    %v388 = vpop.xlane.xlu0 %387
    %v389 = vsel %vm129, %v379, 0.0
    %390 = vadd.xlane.f32.xlu0 %v389
    %v391 = vpop.xlane.xlu0 %390
    %v392 = vrcp.pop 32.0
    %v393 = vmul.f32 %v382, %v392
    %v394 = vmul.f32 %v385, %v392
    %v395 = vmul.f32 %v388, %v392
    %v396 = vmul.f32 %v391, %v392
    %v397 = vsub.f32 %v376, %v393
    %v398 = vsub.f32 %v377, %v394
    %v399 = vsub.f32 %v378, %v395
    %v400 = vsub.f32 %v379, %v396
    %v401 = vmul.f32 %v397, %v397
    %v402 = vmul.f32 %v398, %v398
    %v403 = vmul.f32 %v399, %v399
    %v404 = vmul.f32 %v400, %v400
    %v405 = vsel %vm129, %v401, 0.0
    %406 = vadd.xlane.f32.xlu0 %v405
    %v407 = vpop.xlane.xlu0 %406
    %v408 = vsel %vm129, %v402, 0.0
    %409 = vadd.xlane.f32.xlu0 %v408
    %v410 = vpop.xlane.xlu0 %409
    %v411 = vsel %vm129, %v403, 0.0
    %412 = vadd.xlane.f32.xlu0 %v411
    %v413 = vpop.xlane.xlu0 %412
    %v414 = vsel %vm129, %v404, 0.0
    %415 = vadd.xlane.f32.xlu0 %v414
    %v416 = vpop.xlane.xlu0 %415
    %v417 = vmul.f32 %v407, %v392
    %v418 = vmul.f32 %v410, %v392
    %v419 = vmul.f32 %v413, %v392
    %v420 = vmul.f32 %v416, %v392
    %v421 = vadd.f32 %v417, 1e-12
    %v422 = vadd.f32 %v418, 1e-12
    %v423 = vadd.f32 %v419, 1e-12
    %v424 = vadd.f32 %v420, 1e-12
    %v425 = vrsqrt.pop %v421
    %v426 = vrsqrt.pop %v422
    %v427 = vrsqrt.pop %v423
    %v428 = vrsqrt.pop %v424
    %v429 = vmul.f32 %v397, %v425
    %v430 = vmul.f32 %v398, %v426
    %v431 = vmul.f32 %v399, %v427
    %v432 = vmul.f32 %v400, %v428
    %v433 = vld [vmem:[#allocation11] sm:$0x1]
    %v435 = vlaneseq
    %v436 = vshrl.u32 %v435, 7
    %v437 = vsub.s32 0, %v436
    %v438 = vrot.slane %v433, %v437
    %v440 = vmul.f32 %v429, %v438
    %v441 = vmul.f32 %v430, %v438
    %v442 = vmul.f32 %v431, %v438
    %v443 = vmul.f32 %v432, %v438
    %v444 = vld [vmem:[#allocation13] sm:$0x1]
    %v446 = vlaneseq
    %v447 = vshrl.u32 %v446, 7
    %v448 = vsub.s32 0, %v447
    %v449 = vrot.slane %v444, %v448
    %v451 = vadd.f32 %v440, %v449
    %v452 = vadd.f32 %v441, %v449
    %v453 = vadd.f32 %v442, %v449
    %v454 = vadd.f32 %v443, %v449
    %455 = vst.msk [vmem:[#allocation14] sm:$0xff] %vm129, %v451
    %456 = vst.msk [vmem:[#allocation14 + $0x8] sm:$0xff] %vm129, %v452
    %457 = vst.msk [vmem:[#allocation14 + $0x10] sm:$0xff] %vm129, %v453
    %458 = vst.msk [vmem:[#allocation14 + $0x18] sm:$0xff] %vm129, %v454
    // Predicated region
    $region58: #{transformer_forward_pallas.16} parent=1 // pred_check
      _
    $region59: #{transformer_forward_pallas.16} parent=1 // pred_check_branch
      %460 = sbr.rel (0) target = $region61
    $region60: #{transformer_forward_pallas.16} parent=1 // pred_region
      %s462 = ssub.s32 512, 512
      %463 = vsyncadd [#allocation4], %s462
      %s464 = sshll.u32 [#allocation14], 4
      %s465 = int_to_ptr.vmem [resolvable:$true] %s464
      %470 = dma.vmem_to_hbm [thread:$0]  %s465, 512, %s7, [#allocation4], 128, 128, 8
    $region61: #{transformer_forward_pallas.16} parent=1 // pred_fallthru
      _
    // Predicated region
    $region62: #{transformer_forward_pallas.16} parent=1 // pred_check
      _
    $region63: #{transformer_forward_pallas.16} parent=1 // pred_check_branch
      %472 = sbr.rel (0) target = $region65
    $region64: #{transformer_forward_pallas.16} parent=1 // pred_region
      %473 = dma.done [#allocation4], 512
    $region65: #{transformer_forward_pallas.16} parent=1 // pred_fallthru
      _
    %474 = vsyncpa [#allocation3], 1
    %475 = vsyncpa [#allocation6], 1
    %476 = vsyncpa [#allocation9], 1
    %477 = vsyncpa [#allocation12], 1
    %478 = vsyncpa [#allocation4], 1

// kernel: transformer_forward_pallas.22
$region0: #{transformer_forward_pallas.22}
  #allocation0 [shape = 'u32[]', space=smem, size = 0x4, offset = 0x4, fixed_abs, tag = 'smem constant byte address 0x4 - core index']
  #allocation1 [shape = 'u32[144,128]{1,0:T(1,128)}', space=vmem, size = 0x12000, scoped, tag = 'internal scratch']
  #allocation2 [shape = 'f32[1,32]{1,0:T(1,128)}', space=vmem, size = 0x200, scoped, tag = 'scratch operand']
  %s0 = inlined_call_operand.hbm [shape: f32[2,16,32], index: 0, kind: input, shape index: {}]
  %s1 = inlined_call_operand.hbm [shape: f32[32,32], index: 1, kind: input, shape index: {}]
  %s2 = inlined_call_operand.hbm [shape: f32[1,32], index: 2, kind: input, shape index: {}]
  %s3 = inlined_call_operand.hbm [shape: f32[2,1,32], index: 3, kind: output, shape index: {}]
  %s4 = sld [smem:[#allocation0]]
  $region65: #{transformer_forward_pallas.22} parent=0
    _
  %s6 = ssub.s32 1, %s4
  %s7 = scalar_select 0, %s6, %s4
  $region1: #{transformer_forward_pallas.22} parent=0
    #allocation3 [shape = 'u8[16384]{0}', space=vmem, size = 0x4000, scoped, tag = 'input window, operand 0']
    #allocation4 [shape = 's32[2]{0}', space=sflag, size = 0x8, scoped, tag = 'scoped memory for transformer_forward_pallas.22']
    #allocation5 [shape = 's32[2]{0}', space=sflag, size = 0x8, scoped, tag = 'scoped memory for transformer_forward_pallas.22']
    #allocation6 [shape = 'u8[16384]{0}', space=vmem, size = 0x4000, scoped, tag = 'input window, operand 1, single buffered']
    #allocation7 [shape = 's32[1]{0}', space=sflag, size = 0x4, scoped, tag = 'scoped memory for transformer_forward_pallas.22']
    #allocation8 [shape = 'u8[512]{0}', space=vmem, size = 0x400, scoped, tag = 'input window, operand 2, single buffered']
    #allocation9 [shape = 'u8[1024]{0}', space=vmem, size = 0x400, scoped, tag = 'output window, operand 0']
    %8 = vsyncpa [#allocation4], 0
    %s9 = scalar_lea.sflag [#allocation4], 1
    %10 = vsyncpa %s9, 0
    %11 = vsyncpa [#allocation7], 0
    %12 = vsyncpa [#allocation5], 0
    %s13 = scalar_lea.sflag [#allocation5], 1
    %14 = vsyncpa %s13, 0
    loop: start=0, step=1, limit=4
    $region2: #{transformer_forward_pallas.22} parent=1 // loop_pre_header
      _
    $region3: #{transformer_forward_pallas.22} parent=1 // loop_header
      %s16 = sphi 0, %s20
      %p17 = scmp.ge.s32.totalorder %s16, 4
      %s23 = sphi 0, %s35
      %s24 = sphi 0, %s31
      %s25 = sphi 0, %s23
      %s26 = sphi 0, %s24
      %s27 = sphi 0, %s25
      %s28 = sphi 0, %s26
      %s40 = sphi 0, %s42
      %s43 = sphi 0, %s40
      %s44 = sphi 0, %s43
      %s60 = sphi 0, %s44
      %s64 = sphi 0, %s64
      %s66 = sphi 0, %s64
      %s67 = sphi 0, %s66
      %s81 = sphi 0, %s67
      %s85 = sphi 0, %s85
      %s87 = sphi 0, %s85
      %s88 = sphi 0, %s87
      %s102 = sphi 0, %s88
      %s108 = sphi 0, %s110
      %s111 = sphi 0, %s108
      %s112 = sphi 0, %s111
      %s128 = sphi 0, %s112
    $region4: #{transformer_forward_pallas.22} parent=1 // loop_header_branch
      %19 = sbr.rel (%p17) target = $region8
    $region5: #{transformer_forward_pallas.22} parent=1 // loop_body
      %s21 = ssub.s32 %s16, 1
      %s22 = ssub.s32 %s16, 2
      %s29 = sadd.s32 1, %s24
      %p30 = scmp.ge.s32.totalorder %s29, 1
      %s31 = scalar_select %p30, 0, %s29
      %s32 = sadd.s32 1, %s23
      %s33 = scalar_select %p30, %s32, %s23
      %p34 = scmp.ge.s32.totalorder %s33, 2
      %s35 = scalar_select %p34, 0, %s33
      %s36 = ssub.s32 %s23, %s35
      %s37 = ssub.s32 %s24, %s31
      %s38 = sor.u32 %s36, %s37
      %p39 = scmp.eq.s32.totalorder %s38, 0
      %s41 = sadd.s32 %s40, 1
      %s42 = scalar_select %p39, %s40, %s41
      %p45 = pneg %p39
      %p46 = scmp.eq.s32.totalorder %s16, 1
      %p47 = por %p45, %p46
      %p48 = scmp.ne.s32.totalorder %s40, %s43
      %p49 = scmp.eq.s32.totalorder %s16, 0
      %p50 = por %p48, %p49
      %p51 = scmp.ne.s32.totalorder %s40, %s43
      %p52 = scmp.eq.s32.totalorder %s21, 1
      %p53 = por %p51, %p52
      %p54 = scmp.ne.s32.totalorder %s43, %s44
      %p55 = scmp.eq.s32.totalorder %s21, 0
      %p56 = por %p54, %p55
      %p57 = scmp.ne.s32.totalorder %s43, %s44
      %p58 = scmp.eq.s32.totalorder %s22, 1
      %p59 = por %p57, %p58
      %p61 = scmp.ne.s32.totalorder %s44, %s60
      %p62 = scmp.eq.s32.totalorder %s22, 0
      %p63 = por %p61, %p62
      %s65 = sadd.s32 %s64, 1
      %p68 = scmp.eq.s32.totalorder %s16, 1
      %p69 = scmp.ne.s32.totalorder %s64, %s66
      %p70 = scmp.eq.s32.totalorder %s16, 0
      %p71 = por %p69, %p70
      %p72 = scmp.ne.s32.totalorder %s64, %s66
      %p73 = scmp.eq.s32.totalorder %s21, 1
      %p74 = por %p72, %p73
      %p75 = scmp.ne.s32.totalorder %s66, %s67
      %p76 = scmp.eq.s32.totalorder %s21, 0
      %p77 = por %p75, %p76
      %p78 = scmp.ne.s32.totalorder %s66, %s67
      %p79 = scmp.eq.s32.totalorder %s22, 1
      %p80 = por %p78, %p79
      %p82 = scmp.ne.s32.totalorder %s67, %s81
      %p83 = scmp.eq.s32.totalorder %s22, 0
      %p84 = por %p82, %p83
      %s86 = sadd.s32 %s85, 1
      %p89 = scmp.eq.s32.totalorder %s16, 1
      %p90 = scmp.ne.s32.totalorder %s85, %s87
      %p91 = scmp.eq.s32.totalorder %s16, 0
      %p92 = por %p90, %p91
      %p93 = scmp.ne.s32.totalorder %s85, %s87
      %p94 = scmp.eq.s32.totalorder %s21, 1
      %p95 = por %p93, %p94
      %p96 = scmp.ne.s32.totalorder %s87, %s88
      %p97 = scmp.eq.s32.totalorder %s21, 0
      %p98 = por %p96, %p97
      %p99 = scmp.ne.s32.totalorder %s87, %s88
      %p100 = scmp.eq.s32.totalorder %s22, 1
      %p101 = por %p99, %p100
      %p103 = scmp.ne.s32.totalorder %s88, %s102
      %p104 = scmp.eq.s32.totalorder %s22, 0
      %p105 = por %p103, %p104
      %s106 = ssub.s32 %s23, %s35
      %p107 = scmp.eq.s32.totalorder %s106, 0
      %s109 = sadd.s32 %s108, 1
      %s110 = scalar_select %p107, %s108, %s109
      %p113 = pneg %p107
      %p114 = scmp.eq.s32.totalorder %s16, 1
      %p115 = por %p113, %p114
      %p116 = scmp.ne.s32.totalorder %s108, %s111
      %p117 = scmp.eq.s32.totalorder %s16, 0
      %p118 = por %p116, %p117
      %p119 = scmp.ne.s32.totalorder %s108, %s111
      %p120 = scmp.eq.s32.totalorder %s21, 1
      %p121 = por %p119, %p120
      %p122 = scmp.ne.s32.totalorder %s111, %s112
      %p123 = scmp.eq.s32.totalorder %s21, 0
      %p124 = por %p122, %p123
      %p125 = scmp.ne.s32.totalorder %s111, %s112
      %p126 = scmp.eq.s32.totalorder %s22, 1
      %p127 = por %p125, %p126
      %p129 = scmp.ne.s32.totalorder %s112, %s128
      %p130 = scmp.eq.s32.totalorder %s22, 0
      %p131 = por %p129, %p130
      %p132 = scmp.le.s32.totalorder 1, %s16
      %p133 = scmp.lt.s32.totalorder %s16, 3
      %p134 = pnand %p132, %p133
      %p135 = pneg %p134
      // Predicated region
      $region9: #{transformer_forward_pallas.22} parent=5 // pred_check
        _
      $region10: #{transformer_forward_pallas.22} parent=5 // pred_check_branch
        %137 = sbr.rel (%p134) target = $region12
      $region11: #{transformer_forward_pallas.22} parent=5 // pred_region
        %s138 = ssub.s32 %s16, 1
        // Predicated region
        $region13: #{transformer_forward_pallas.22} parent=11 // pred_check
          %p139 = pneg %p77
        $region14: #{transformer_forward_pallas.22} parent=11 // pred_check_branch
          %141 = sbr.rel (%p139) target = $region16
        $region15: #{transformer_forward_pallas.22} parent=11 // pred_region
          %s143 = ssub.s32 512, 512
          %144 = vsyncadd [#allocation7], %s143
          %s145 = sshll.u32 [#allocation6], 4
          %s146 = int_to_ptr.vmem [resolvable:$true] %s145
          %151 = dma.hbm_to_vmem [thread:$0]  %s1, 512, %s146, [#allocation7], 128, 128, 8
        $region16: #{transformer_forward_pallas.22} parent=11 // pred_fallthru
          _
        // Predicated region
        $region17: #{transformer_forward_pallas.22} parent=11 // pred_check
          %p152 = pneg %p98
        $region18: #{transformer_forward_pallas.22} parent=11 // pred_check_branch
          %154 = sbr.rel (%p152) target = $region20
        $region19: #{transformer_forward_pallas.22} parent=11 // pred_region
          %s156 = ssub.s32 16, 16
          %157 = vsyncadd [#allocation7], %s156
          %s159 = sshll.u32 [#allocation8], 4
          %s160 = int_to_ptr.vmem [resolvable:$true] %s159
          %162 = dma.hbm_to_vmem [thread:$0]  %s2, 16, %s160, [#allocation7]
        $region20: #{transformer_forward_pallas.22} parent=11 // pred_fallthru
          _
      $region12: #{transformer_forward_pallas.22} parent=5 // pred_fallthru
        _
      %p163 = scmp.lt.s32.totalorder %s16, 2
      // Predicated region
      $region21: #{transformer_forward_pallas.22} parent=5 // pred_check
        %p164 = pneg %p163
      $region22: #{transformer_forward_pallas.22} parent=5 // pred_check_branch
        %166 = sbr.rel (%p164) target = $region24
      $region23: #{transformer_forward_pallas.22} parent=5 // pred_region
        // Predicated region
        $region25: #{transformer_forward_pallas.22} parent=23 // pred_check
          %p167 = pneg %p50
        $region26: #{transformer_forward_pallas.22} parent=23 // pred_check_branch
          %169 = sbr.rel (%p167) target = $region28
        $region27: #{transformer_forward_pallas.22} parent=23 // pred_region
          %s170 = sand.u32 %s40, 1
          %s171 = scalar_lea.sflag [#allocation4], %s170
          %s172 = sand.u32 %s40, 1
          %s173 = smul.addr %s172, 16
          %s174 = scalar_lea.vmem [#allocation3], %s173
          %s175 = smul.u32 2, %s24
          %s177 = ssub.s32 256, 256
          %178 = vsyncadd %s171, %s177
          %s179 = smul.addr %s23, 2
          %s180 = sadd.s32 %s175, %s179
          %s181 = smul.addr %s180, 128
          %s182 = scalar_lea.hbm %s0, %s181
          %s183 = sshll.u32 %s174, 4
          %s184 = int_to_ptr.vmem [resolvable:$true] %s183
          %189 = dma.hbm_to_vmem [thread:$0]  %s182, 256, %s184, %s171, 128, 128, 8
        $region28: #{transformer_forward_pallas.22} parent=23 // pred_fallthru
          _
      $region24: #{transformer_forward_pallas.22} parent=5 // pred_fallthru
        _
      %p190 = scmp.le.s32.totalorder 1, %s16
      %p191 = scmp.lt.s32.totalorder %s16, 3
      %p192 = pnand %p190, %p191
      %p193 = pneg %p192
      // Predicated region
      $region29: #{transformer_forward_pallas.22} parent=5 // pred_check
        _
      $region30: #{transformer_forward_pallas.22} parent=5 // pred_check_branch
        %195 = sbr.rel (%p192) target = $region32
      $region31: #{transformer_forward_pallas.22} parent=5 // pred_region
        %s196 = ssub.s32 %s16, 1
        %s197 = sand.u32 %s43, 1
        %s198 = scalar_lea.sflag [#allocation4], %s197
        %s199 = sand.u32 %s43, 1
        %s200 = smul.addr %s199, 16
        %s201 = scalar_lea.vmem [#allocation3], %s200
        // Predicated region
        $region33: #{transformer_forward_pallas.22} parent=31 // pred_check
          %p202 = pneg %p56
        $region34: #{transformer_forward_pallas.22} parent=31 // pred_check_branch
          %204 = sbr.rel (%p202) target = $region36
        $region35: #{transformer_forward_pallas.22} parent=31 // pred_region
          %205 = dma.done %s198, 256
        $region36: #{transformer_forward_pallas.22} parent=31 // pred_fallthru
          _
        // Predicated region
        $region37: #{transformer_forward_pallas.22} parent=31 // pred_check
          %p206 = pneg %p77
        $region38: #{transformer_forward_pallas.22} parent=31 // pred_check_branch
          %208 = sbr.rel (%p206) target = $region40
        $region39: #{transformer_forward_pallas.22} parent=31 // pred_region
          %209 = dma.done [#allocation7], 512
        $region40: #{transformer_forward_pallas.22} parent=31 // pred_fallthru
          _
        // Predicated region
        $region41: #{transformer_forward_pallas.22} parent=31 // pred_check
          %p210 = pneg %p98
        $region42: #{transformer_forward_pallas.22} parent=31 // pred_check_branch
          %212 = sbr.rel (%p210) target = $region44
        $region43: #{transformer_forward_pallas.22} parent=31 // pred_region
          %213 = dma.done [#allocation7], 16
        $region44: #{transformer_forward_pallas.22} parent=31 // pred_fallthru
          _
        %s214 = sand.u32 %s43, 1
        %s215 = scalar_lea.sflag [#allocation4], %s214
        %s216 = sand.u32 %s43, 1
        %s217 = smul.addr %s216, 16
        %s218 = scalar_lea.vmem [#allocation3], %s217
        %p219 = pneg %p56
        %p220 = pneg %p53
        %p221 = pneg %p77
        %p222 = pneg %p74
        %p223 = pneg %p98
        %p224 = pneg %p95
        %p225 = pneg %p124
        %p226 = pneg %p121
        %s227 = sand.u32 %s111, 1
        %s228 = scalar_lea.sflag [#allocation5], %s227
        %s229 = sand.u32 %s111, 1
        %s230 = scalar_lea.vmem [#allocation9], %s229
        %s231 = smul.u32 2, %s26
        %p232 = scmp.eq.s32.totalorder %s26, 0
        // Predicated region
        $region45: #{transformer_forward_pallas.22} parent=31 // pred_check
          %p233 = pneg %p232
        $region46: #{transformer_forward_pallas.22} parent=31 // pred_check_branch
          %235 = sbr.rel (%p233) target = $region48
        $region47: #{transformer_forward_pallas.22} parent=31 // pred_region
          %vm236 = vcmask 253952
          %237 = vst.msk [vmem:[#allocation2] sm:$0x1] %vm236, 0.0
        $region48: #{transformer_forward_pallas.22} parent=31 // pred_fallthru
          _
        %v238 = vld [vmem:[%s201] sm:$0xff]
        %v239 = vld [vmem:[%s201 + $0x8] sm:$0xff]
        %v240 = vld [vmem:[#allocation6] sm:$0xff]
        %v241 = vld [vmem:[#allocation6 + $0x8] sm:$0xff]
        %v242 = vld [vmem:[#allocation6 + $0x10] sm:$0xff]
        %v243 = vld [vmem:[#allocation6 + $0x18] sm:$0xff]
        %vm244 = vcmask 261120
        %v246 = vsel %vm244, %v238, 0
        %v249 = vsel %vm244, %v239, 0
        %251 = vmatprep.subr.mxu0 0.0
        %252 = vmatpush1.msra.mxu0 %v240
        %253 = vmatprep.subr.mxu0 0.0
        %254 = vmatpush1.msra.mxu0 %v241
        %255 = vmatprep.subr.mxu0 0.0
        %256 = vmatpush1.msra.mxu0 %v242
        %257 = vmatprep.subr.mxu0 0.0
        %258 = vmatpush1.msra.mxu0 %v243
        %259 = vmatprep.subr.mxu0 0.0
        %260 = vmatpush1.msra.mxu0 0.0
        %261 = vmatprep.subr.mxu0 0.0
        %262 = vmatpush1.msra.mxu0 0.0
        %263 = vmatprep.subr.mxu0 0.0
        %264 = vmatpush1.msra.mxu0 0.0
        %265 = vmatprep.subr.mxu0 0.0
        %266 = vmatpush1.msra.mxu0 0.0
        %267 = vmatprep.subr.mxu0 0.0
        %268 = vmatpush1.msra.mxu0 0.0
        %269 = vmatprep.subr.mxu0 0.0
        %270 = vmatpush1.msra.mxu0 0.0
        %271 = vmatprep.subr.mxu0 0.0
        %272 = vmatpush1.msra.mxu0 0.0
        %273 = vmatprep.subr.mxu0 0.0
        %274 = vmatpush1.msra.mxu0 0.0
        %275 = vmatprep.subr.mxu0 0.0
        %276 = vmatpush1.msra.mxu0 0.0
        %277 = vmatprep.subr.mxu0 0.0
        %278 = vmatpush1.msra.mxu0 0.0
        %279 = vmatprep.subr.mxu0 0.0
        %280 = vmatpush1.msra.mxu0 0.0
        %281 = vmatprep.subr.mxu0 0.0
        %282 = vmatpush1.msra.mxu0 0.0
        %283 = vmatprep.subr.mxu0 0.0
        %284 = vmatpush1.msra.mxu0 0.0
        %285 = vmatprep.subr.mxu0 0.0
        %286 = vmatpush1.msra.mxu0 0.0
        %287 = vmatprep.subr.mxu0 0.0
        %288 = vmatpush1.msra.mxu0 0.0
        %289 = vmatprep.subr.mxu0 0.0
        %290 = vmatpush1.msra.mxu0 0.0
        %291 = vmatprep.subr.mxu0 0.0
        %292 = vmatpush1.msra.mxu0 0.0
        %293 = vmatprep.subr.mxu0 0.0
        %294 = vmatpush1.msra.mxu0 0.0
        %295 = vmatprep.subr.mxu0 0.0
        %296 = vmatpush1.msra.mxu0 0.0
        %297 = vmatprep.subr.mxu0 0.0
        %298 = vmatpush1.msra.mxu0 0.0
        %299 = vmatprep.subr.mxu0 0.0
        %300 = vmatpush1.msra.mxu0 0.0
        %301 = vmatprep.subr.mxu0 0.0
        %302 = vmatpush1.msra.mxu0 0.0
        %303 = vmatprep.subr.mxu0 0.0
        %304 = vmatpush1.msra.mxu0 0.0
        %305 = vmatprep.subr.mxu0 0.0
        %306 = vmatpush1.msra.mxu0 0.0
        %307 = vmatprep.subr.mxu0 0.0
        %308 = vmatpush1.msra.mxu0 0.0
        %309 = vmatprep.subr.mxu0 0.0
        %310 = vmatpush1.msra.mxu0 0.0
        %311 = vmatprep.subr.mxu0 0.0
        %312 = vmatpush1.msra.mxu0 0.0
        %313 = vmatprep.subr.mxu0 0.0
        %314 = vmatpush1.msra.mxu0 0.0
        %315 = vmatprep.mubr.f32.mxu0 0.0
        %316 = vmatmul.mubr.f32.gmra.mrb[0].mxu0 %v246
        %v317 = vpop.f32.mrb[0].mxu0
        %v318 = vadd.f32 0.0, %v317
        %v319 = vpop.f32.mrb[0].mxu0
        %320 = vmatprep.mubr.f32.mxu0 0.0
        %321 = vmatmul.mubr.f32.gmra.mrb[0].mxu0 %v249
        %v322 = vpop.f32.mrb[0].mxu0
        %v323 = vadd.f32 0.0, %v322
        %v324 = vpop.f32.mrb[0].mxu0
        %325 = vdwg.mxu0
        %v326 = vld [vmem:[#allocation2] sm:$0x1]
        %v327 = vsel %vm244, %v318, 0.0
        %v328 = vsel %vm244, %v323, 0.0
        %v329 = vadd.f32 %v327, %v328
        %v330 = vrot.slane %v329, 4
        %v331 = vadd.f32 %v329, %v330
        %v332 = vrot.slane %v331, 2
        %v333 = vadd.f32 %v331, %v332
        %v334 = vrot.slane %v333, 1
        %v335 = vadd.f32 %v333, %v334
        %v336 = vadd.f32 %v326, %v335
        %vm337 = vcmask 253952
        %338 = vst.msk [vmem:[#allocation2] sm:$0x1] %vm337, %v336
        // Predicated region
        $region49: #{transformer_forward_pallas.22} parent=31 // pred_check
          %p339 = pneg %p232
        $region50: #{transformer_forward_pallas.22} parent=31 // pred_check_branch
          %341 = sbr.rel (%p339) target = $region52
        $region51: #{transformer_forward_pallas.22} parent=31 // pred_region
          %v342 = vld [vmem:[#allocation2] sm:$0x1]
          %v343 = vmul.f32 %v342, 0.0625
          %v344 = vld [vmem:[#allocation8] sm:$0x1]
          %v345 = vadd.f32 %v343, %v344
          %346 = vst.msk [vmem:[%s230] sm:$0x1] %vm337, %v345
        $region52: #{transformer_forward_pallas.22} parent=31 // pred_fallthru
          _
        %s347 = sand.u32 %s111, 1
        %s348 = scalar_lea.sflag [#allocation5], %s347
        %s349 = sand.u32 %s111, 1
        %s350 = scalar_lea.vmem [#allocation9], %s349
        // Predicated region
        $region53: #{transformer_forward_pallas.22} parent=31 // pred_check
          %p351 = pneg %p121
        $region54: #{transformer_forward_pallas.22} parent=31 // pred_check_branch
          %353 = sbr.rel (%p351) target = $region56
        $region55: #{transformer_forward_pallas.22} parent=31 // pred_region
          %s355 = ssub.s32 16, 16
          %356 = vsyncadd %s348, %s355
          %s357 = smul.addr %s25, 16
          %s358 = scalar_lea.hbm %s3, %s357
          %s360 = sshll.u32 %s350, 4
          %s361 = int_to_ptr.vmem [resolvable:$true] %s360
          %363 = dma.vmem_to_hbm [thread:$0]  %s361, 16, %s358, %s348
        $region56: #{transformer_forward_pallas.22} parent=31 // pred_fallthru
          _
      $region32: #{transformer_forward_pallas.22} parent=5 // pred_fallthru
        _
      %p364 = scmp.le.s32.totalorder 2, %s16
      // Predicated region
      $region57: #{transformer_forward_pallas.22} parent=5 // pred_check
        %p365 = pneg %p364
      $region58: #{transformer_forward_pallas.22} parent=5 // pred_check_branch
        %367 = sbr.rel (%p365) target = $region60
      $region59: #{transformer_forward_pallas.22} parent=5 // pred_region
        %s368 = ssub.s32 %s16, 2
        // Predicated region
        $region61: #{transformer_forward_pallas.22} parent=59 // pred_check
          %p369 = pneg %p127
        $region62: #{transformer_forward_pallas.22} parent=59 // pred_check_branch
          %371 = sbr.rel (%p369) target = $region64
        $region63: #{transformer_forward_pallas.22} parent=59 // pred_region
          %s372 = sand.u32 %s112, 1
          %s373 = scalar_lea.sflag [#allocation5], %s372
          %s374 = sand.u32 %s112, 1
          %s375 = scalar_lea.vmem [#allocation9], %s374
          %376 = dma.done %s373, 16
        $region64: #{transformer_forward_pallas.22} parent=59 // pred_fallthru
          _
      $region60: #{transformer_forward_pallas.22} parent=5 // pred_fallthru
        _
    $region6: #{transformer_forward_pallas.22} parent=1 // loop_footer
      %s20 = sadd.s32 1, %s16
    $region7: #{transformer_forward_pallas.22} parent=1 // loop_footer_branch
      %15 = sbr.rel target = $region3
    $region8: #{transformer_forward_pallas.22} parent=1 // loop_exit
      _
    %377 = vsyncpa [#allocation4], 1
    %s378 = scalar_lea.sflag [#allocation4], 1
    %379 = vsyncpa %s378, 1
    %380 = vsyncpa [#allocation7], 1
    %381 = vsyncpa [#allocation5], 1
    %s382 = scalar_lea.sflag [#allocation5], 1
    %383 = vsyncpa %s382, 1

// kernel: transformer_forward_pallas.15
$region0: #{transformer_forward_pallas.15}
  #allocation0 [shape = 'u32[]', space=smem, size = 0x4, offset = 0x4, fixed_abs, tag = 'smem constant byte address 0x4 - core index']
  #allocation1 [shape = 'u32[144,128]{1,0:T(1,128)}', space=vmem, size = 0x12000, scoped, tag = 'internal scratch']
  #allocation2 [shape = 'f32[4,16,1]{2,1,0:T(8,128)}', space=vmem, size = 0x8000, scoped, tag = 'scratch operand']
  #allocation3 [shape = 'f32[4,16,1]{2,1,0:T(8,128)}', space=vmem, size = 0x8000, scoped, tag = 'scratch operand']
  #allocation4 [shape = 'f32[4,16,8]{2,1,0:T(8,128)}', space=vmem, size = 0x8000, scoped, tag = 'scratch operand']
  %s0 = inlined_call_operand.hbm [shape: f32[2,16,32], index: 0, kind: input, shape index: {}]
  %s1 = inlined_call_operand.hbm [shape: f32[2,16,32], index: 1, kind: input, shape index: {}]
  %s2 = inlined_call_operand.hbm [shape: f32[2,16,32], index: 2, kind: input, shape index: {}]
  %s3 = inlined_call_operand.hbm [shape: f32[2,16,32], index: 3, kind: input, shape index: {}]
  %s4 = inlined_call_operand.hbm [shape: f32[32,32], index: 4, kind: input, shape index: {}]
  %s5 = inlined_call_operand.hbm [shape: f32[1,32], index: 5, kind: input, shape index: {}]
  %s6 = inlined_call_operand.hbm [shape: f32[1,32], index: 6, kind: input, shape index: {}]
  %s7 = inlined_call_operand.hbm [shape: f32[1,32], index: 7, kind: input, shape index: {}]
  %s8 = inlined_call_operand.hbm [shape: f32[2,16,32], index: 8, kind: output, shape index: {}]
  %s9 = sld [smem:[#allocation0]]
  $region105: #{transformer_forward_pallas.15} parent=0
    _
  %s11 = ssub.s32 1, %s9
  %s12 = scalar_select 0, %s11, %s9
  $region1: #{transformer_forward_pallas.15} parent=0
    #allocation5 [shape = 'u8[16384]{0}', space=vmem, size = 0x4000, scoped, tag = 'input window, operand 0']
    #allocation6 [shape = 's32[2]{0}', space=sflag, size = 0x8, scoped, tag = 'scoped memory for transformer_forward_pallas.15']
    #allocation7 [shape = 's32[2]{0}', space=sflag, size = 0x8, scoped, tag = 'scoped memory for transformer_forward_pallas.15']
    #allocation8 [shape = 'u8[16384]{0}', space=vmem, size = 0x4000, scoped, tag = 'input window, operand 1']
    #allocation9 [shape = 's32[2]{0}', space=sflag, size = 0x8, scoped, tag = 'scoped memory for transformer_forward_pallas.15']
    #allocation10 [shape = 'u8[16384]{0}', space=vmem, size = 0x4000, scoped, tag = 'input window, operand 2']
    #allocation11 [shape = 'u8[16384]{0}', space=vmem, size = 0x4000, scoped, tag = 'input window, operand 3']
    #allocation12 [shape = 's32[2]{0}', space=sflag, size = 0x8, scoped, tag = 'scoped memory for transformer_forward_pallas.15']
    #allocation13 [shape = 'u8[16384]{0}', space=vmem, size = 0x4000, scoped, tag = 'input window, operand 4, single buffered']
    #allocation14 [shape = 'u8[512]{0}', space=vmem, size = 0x400, scoped, tag = 'input window, operand 5, single buffered']
    #allocation15 [shape = 's32[1]{0}', space=sflag, size = 0x4, scoped, tag = 'scoped memory for transformer_forward_pallas.15']
    #allocation16 [shape = 'u8[512]{0}', space=vmem, size = 0x400, scoped, tag = 'input window, operand 6, single buffered']
    #allocation17 [shape = 'u8[512]{0}', space=vmem, size = 0x400, scoped, tag = 'input window, operand 7, single buffered']
    #allocation18 [shape = 's32[1]{0}', space=sflag, size = 0x4, scoped, tag = 'scoped memory for transformer_forward_pallas.15']
    #allocation19 [shape = 'u8[16384]{0}', space=vmem, size = 0x4000, scoped, tag = 'output window, operand 0']
    %13 = vsyncpa [#allocation6], 0
    %s14 = scalar_lea.sflag [#allocation6], 1
    %15 = vsyncpa %s14, 0
    %16 = vsyncpa [#allocation9], 0
    %s17 = scalar_lea.sflag [#allocation9], 1
    %18 = vsyncpa %s17, 0
    %19 = vsyncpa [#allocation12], 0
    %s20 = scalar_lea.sflag [#allocation12], 1
    %21 = vsyncpa %s20, 0
    %22 = vsyncpa [#allocation15], 0
    %23 = vsyncpa [#allocation18], 0
    %24 = vsyncpa [#allocation7], 0
    %s25 = scalar_lea.sflag [#allocation7], 1
    %26 = vsyncpa %s25, 0
    loop: start=0, step=1, limit=4
    $region2: #{transformer_forward_pallas.15} parent=1 // loop_pre_header
      _
    $region3: #{transformer_forward_pallas.15} parent=1 // loop_header
      %s28 = sphi 0, %s32
      %p29 = scmp.ge.s32.totalorder %s28, 4
      %s35 = sphi 0, %s54
      %s36 = sphi 0, %s50
      %s37 = sphi 0, %s46
      %s38 = sphi 0, %s35
      %s39 = sphi 0, %s36
      %s40 = sphi 0, %s37
      %s41 = sphi 0, %s38
      %s42 = sphi 0, %s39
      %s43 = sphi 0, %s40
      %s59 = sphi 0, %s61
      %s62 = sphi 0, %s59
      %s63 = sphi 0, %s62
      %s79 = sphi 0, %s63
      %s87 = sphi 0, %s89
      %s90 = sphi 0, %s87
      %s91 = sphi 0, %s90
      %s107 = sphi 0, %s91
      %s115 = sphi 0, %s117
      %s118 = sphi 0, %s115
      %s119 = sphi 0, %s118
      %s135 = sphi 0, %s119
      %s143 = sphi 0, %s145
      %s146 = sphi 0, %s143
      %s147 = sphi 0, %s146
      %s163 = sphi 0, %s147
      %s167 = sphi 0, %s167
      %s169 = sphi 0, %s167
      %s170 = sphi 0, %s169
      %s184 = sphi 0, %s170
      %s188 = sphi 0, %s188
      %s190 = sphi 0, %s188
      %s191 = sphi 0, %s190
      %s205 = sphi 0, %s191
      %s209 = sphi 0, %s209
      %s211 = sphi 0, %s209
      %s212 = sphi 0, %s211
      %s226 = sphi 0, %s212
      %s230 = sphi 0, %s230
      %s232 = sphi 0, %s230
      %s233 = sphi 0, %s232
      %s247 = sphi 0, %s233
      %s255 = sphi 0, %s257
      %s258 = sphi 0, %s255
      %s259 = sphi 0, %s258
      %s275 = sphi 0, %s259
    $region4: #{transformer_forward_pallas.15} parent=1 // loop_header_branch
      %31 = sbr.rel (%p29) target = $region8
    $region5: #{transformer_forward_pallas.15} parent=1 // loop_body
      %s33 = ssub.s32 %s28, 1
      %s34 = ssub.s32 %s28, 2
      %s44 = sadd.s32 1, %s37
      %p45 = scmp.ge.s32.totalorder %s44, 1
      %s46 = scalar_select %p45, 0, %s44
      %s47 = sadd.s32 1, %s36
      %s48 = scalar_select %p45, %s47, %s36
      %p49 = scmp.ge.s32.totalorder %s48, 1
      %s50 = scalar_select %p49, 0, %s48
      %s51 = sadd.s32 1, %s35
      %s52 = scalar_select %p49, %s51, %s35
      %p53 = scmp.ge.s32.totalorder %s52, 2
      %s54 = scalar_select %p53, 0, %s52
      %s55 = ssub.s32 %s35, %s54
      %s56 = ssub.s32 %s36, %s50
      %s57 = sor.u32 %s55, %s56
      %p58 = scmp.eq.s32.totalorder %s57, 0
      %s60 = sadd.s32 %s59, 1
      %s61 = scalar_select %p58, %s59, %s60
      %p64 = pneg %p58
      %p65 = scmp.eq.s32.totalorder %s28, 1
      %p66 = por %p64, %p65
      %p67 = scmp.ne.s32.totalorder %s59, %s62
      %p68 = scmp.eq.s32.totalorder %s28, 0
      %p69 = por %p67, %p68
      %p70 = scmp.ne.s32.totalorder %s59, %s62
      %p71 = scmp.eq.s32.totalorder %s33, 1
      %p72 = por %p70, %p71
      %p73 = scmp.ne.s32.totalorder %s62, %s63
      %p74 = scmp.eq.s32.totalorder %s33, 0
      %p75 = por %p73, %p74
      %p76 = scmp.ne.s32.totalorder %s62, %s63
      %p77 = scmp.eq.s32.totalorder %s34, 1
      %p78 = por %p76, %p77
      %p80 = scmp.ne.s32.totalorder %s63, %s79
      %p81 = scmp.eq.s32.totalorder %s34, 0
      %p82 = por %p80, %p81
      %s83 = ssub.s32 %s35, %s54
      %s84 = ssub.s32 %s37, %s46
      %s85 = sor.u32 %s83, %s84
      %p86 = scmp.eq.s32.totalorder %s85, 0
      %s88 = sadd.s32 %s87, 1
      %s89 = scalar_select %p86, %s87, %s88
      %p92 = pneg %p86
      %p93 = scmp.eq.s32.totalorder %s28, 1
      %p94 = por %p92, %p93
      %p95 = scmp.ne.s32.totalorder %s87, %s90
      %p96 = scmp.eq.s32.totalorder %s28, 0
      %p97 = por %p95, %p96
      %p98 = scmp.ne.s32.totalorder %s87, %s90
      %p99 = scmp.eq.s32.totalorder %s33, 1
      %p100 = por %p98, %p99
      %p101 = scmp.ne.s32.totalorder %s90, %s91
      %p102 = scmp.eq.s32.totalorder %s33, 0
      %p103 = por %p101, %p102
      %p104 = scmp.ne.s32.totalorder %s90, %s91
      %p105 = scmp.eq.s32.totalorder %s34, 1
      %p106 = por %p104, %p105
      %p108 = scmp.ne.s32.totalorder %s91, %s107
      %p109 = scmp.eq.s32.totalorder %s34, 0
      %p110 = por %p108, %p109
      %s111 = ssub.s32 %s35, %s54
      %s112 = ssub.s32 %s37, %s46
      %s113 = sor.u32 %s111, %s112
      %p114 = scmp.eq.s32.totalorder %s113, 0
      %s116 = sadd.s32 %s115, 1
      %s117 = scalar_select %p114, %s115, %s116
      %p120 = pneg %p114
      %p121 = scmp.eq.s32.totalorder %s28, 1
      %p122 = por %p120, %p121
      %p123 = scmp.ne.s32.totalorder %s115, %s118
      %p124 = scmp.eq.s32.totalorder %s28, 0
      %p125 = por %p123, %p124
      %p126 = scmp.ne.s32.totalorder %s115, %s118
      %p127 = scmp.eq.s32.totalorder %s33, 1
      %p128 = por %p126, %p127
      %p129 = scmp.ne.s32.totalorder %s118, %s119
      %p130 = scmp.eq.s32.totalorder %s33, 0
      %p131 = por %p129, %p130
      %p132 = scmp.ne.s32.totalorder %s118, %s119
      %p133 = scmp.eq.s32.totalorder %s34, 1
      %p134 = por %p132, %p133
      %p136 = scmp.ne.s32.totalorder %s119, %s135
      %p137 = scmp.eq.s32.totalorder %s34, 0
      %p138 = por %p136, %p137
      %s139 = ssub.s32 %s35, %s54
      %s140 = ssub.s32 %s36, %s50
      %s141 = sor.u32 %s139, %s140
      %p142 = scmp.eq.s32.totalorder %s141, 0
      %s144 = sadd.s32 %s143, 1
      %s145 = scalar_select %p142, %s143, %s144
      %p148 = pneg %p142
      %p149 = scmp.eq.s32.totalorder %s28, 1
      %p150 = por %p148, %p149
      %p151 = scmp.ne.s32.totalorder %s143, %s146
      %p152 = scmp.eq.s32.totalorder %s28, 0
      %p153 = por %p151, %p152
      %p154 = scmp.ne.s32.totalorder %s143, %s146
      %p155 = scmp.eq.s32.totalorder %s33, 1
      %p156 = por %p154, %p155
      %p157 = scmp.ne.s32.totalorder %s146, %s147
      %p158 = scmp.eq.s32.totalorder %s33, 0
      %p159 = por %p157, %p158
      %p160 = scmp.ne.s32.totalorder %s146, %s147
      %p161 = scmp.eq.s32.totalorder %s34, 1
      %p162 = por %p160, %p161
      %p164 = scmp.ne.s32.totalorder %s147, %s163
      %p165 = scmp.eq.s32.totalorder %s34, 0
      %p166 = por %p164, %p165
      %s168 = sadd.s32 %s167, 1
      %p171 = scmp.eq.s32.totalorder %s28, 1
      %p172 = scmp.ne.s32.totalorder %s167, %s169
      %p173 = scmp.eq.s32.totalorder %s28, 0
      %p174 = por %p172, %p173
      %p175 = scmp.ne.s32.totalorder %s167, %s169
      %p176 = scmp.eq.s32.totalorder %s33, 1
      %p177 = por %p175, %p176
      %p178 = scmp.ne.s32.totalorder %s169, %s170
      %p179 = scmp.eq.s32.totalorder %s33, 0
      %p180 = por %p178, %p179
      %p181 = scmp.ne.s32.totalorder %s169, %s170
      %p182 = scmp.eq.s32.totalorder %s34, 1
      %p183 = por %p181, %p182
      %p185 = scmp.ne.s32.totalorder %s170, %s184
      %p186 = scmp.eq.s32.totalorder %s34, 0
      %p187 = por %p185, %p186
      %s189 = sadd.s32 %s188, 1
      %p192 = scmp.eq.s32.totalorder %s28, 1
      %p193 = scmp.ne.s32.totalorder %s188, %s190
      %p194 = scmp.eq.s32.totalorder %s28, 0
      %p195 = por %p193, %p194
      %p196 = scmp.ne.s32.totalorder %s188, %s190
      %p197 = scmp.eq.s32.totalorder %s33, 1
      %p198 = por %p196, %p197
      %p199 = scmp.ne.s32.totalorder %s190, %s191
      %p200 = scmp.eq.s32.totalorder %s33, 0
      %p201 = por %p199, %p200
      %p202 = scmp.ne.s32.totalorder %s190, %s191
      %p203 = scmp.eq.s32.totalorder %s34, 1
      %p204 = por %p202, %p203
      %p206 = scmp.ne.s32.totalorder %s191, %s205
      %p207 = scmp.eq.s32.totalorder %s34, 0
      %p208 = por %p206, %p207
      %s210 = sadd.s32 %s209, 1
      %p213 = scmp.eq.s32.totalorder %s28, 1
      %p214 = scmp.ne.s32.totalorder %s209, %s211
      %p215 = scmp.eq.s32.totalorder %s28, 0
      %p216 = por %p214, %p215
      %p217 = scmp.ne.s32.totalorder %s209, %s211
      %p218 = scmp.eq.s32.totalorder %s33, 1
      %p219 = por %p217, %p218
      %p220 = scmp.ne.s32.totalorder %s211, %s212
      %p221 = scmp.eq.s32.totalorder %s33, 0
      %p222 = por %p220, %p221
      %p223 = scmp.ne.s32.totalorder %s211, %s212
      %p224 = scmp.eq.s32.totalorder %s34, 1
      %p225 = por %p223, %p224
      %p227 = scmp.ne.s32.totalorder %s212, %s226
      %p228 = scmp.eq.s32.totalorder %s34, 0
      %p229 = por %p227, %p228
      %s231 = sadd.s32 %s230, 1
      %p234 = scmp.eq.s32.totalorder %s28, 1
      %p235 = scmp.ne.s32.totalorder %s230, %s232
      %p236 = scmp.eq.s32.totalorder %s28, 0
      %p237 = por %p235, %p236
      %p238 = scmp.ne.s32.totalorder %s230, %s232
      %p239 = scmp.eq.s32.totalorder %s33, 1
      %p240 = por %p238, %p239
      %p241 = scmp.ne.s32.totalorder %s232, %s233
      %p242 = scmp.eq.s32.totalorder %s33, 0
      %p243 = por %p241, %p242
      %p244 = scmp.ne.s32.totalorder %s232, %s233
      %p245 = scmp.eq.s32.totalorder %s34, 1
      %p246 = por %p244, %p245
      %p248 = scmp.ne.s32.totalorder %s233, %s247
      %p249 = scmp.eq.s32.totalorder %s34, 0
      %p250 = por %p248, %p249
      %s251 = ssub.s32 %s35, %s54
      %s252 = ssub.s32 %s36, %s50
      %s253 = sor.u32 %s251, %s252
      %p254 = scmp.eq.s32.totalorder %s253, 0
      %s256 = sadd.s32 %s255, 1
      %s257 = scalar_select %p254, %s255, %s256
      %p260 = pneg %p254
      %p261 = scmp.eq.s32.totalorder %s28, 1
      %p262 = por %p260, %p261
      %p263 = scmp.ne.s32.totalorder %s255, %s258
      %p264 = scmp.eq.s32.totalorder %s28, 0
      %p265 = por %p263, %p264
      %p266 = scmp.ne.s32.totalorder %s255, %s258
      %p267 = scmp.eq.s32.totalorder %s33, 1
      %p268 = por %p266, %p267
      %p269 = scmp.ne.s32.totalorder %s258, %s259
      %p270 = scmp.eq.s32.totalorder %s33, 0
      %p271 = por %p269, %p270
      %p272 = scmp.ne.s32.totalorder %s258, %s259
      %p273 = scmp.eq.s32.totalorder %s34, 1
      %p274 = por %p272, %p273
      %p276 = scmp.ne.s32.totalorder %s259, %s275
      %p277 = scmp.eq.s32.totalorder %s34, 0
      %p278 = por %p276, %p277
      %p279 = scmp.le.s32.totalorder 1, %s28
      %p280 = scmp.lt.s32.totalorder %s28, 3
      %p281 = pnand %p279, %p280
      %p282 = pneg %p281
      // Predicated region
      $region9: #{transformer_forward_pallas.15} parent=5 // pred_check
        _
      $region10: #{transformer_forward_pallas.15} parent=5 // pred_check_branch
        %284 = sbr.rel (%p281) target = $region12
      $region11: #{transformer_forward_pallas.15} parent=5 // pred_region
        %s285 = ssub.s32 %s28, 1
        // Predicated region
        $region13: #{transformer_forward_pallas.15} parent=11 // pred_check
          %p286 = pneg %p180
        $region14: #{transformer_forward_pallas.15} parent=11 // pred_check_branch
          %288 = sbr.rel (%p286) target = $region16
        $region15: #{transformer_forward_pallas.15} parent=11 // pred_region
          %s290 = ssub.s32 512, 512
          %291 = vsyncadd [#allocation12], %s290
          %s292 = sshll.u32 [#allocation13], 4
          %s293 = int_to_ptr.vmem [resolvable:$true] %s292
          %298 = dma.hbm_to_vmem [thread:$0]  %s4, 512, %s293, [#allocation12], 128, 128, 8
        $region16: #{transformer_forward_pallas.15} parent=11 // pred_fallthru
          _
        // Predicated region
        $region17: #{transformer_forward_pallas.15} parent=11 // pred_check
          %p299 = pneg %p201
        $region18: #{transformer_forward_pallas.15} parent=11 // pred_check_branch
          %301 = sbr.rel (%p299) target = $region20
        $region19: #{transformer_forward_pallas.15} parent=11 // pred_region
          %s303 = ssub.s32 16, 16
          %304 = vsyncadd [#allocation15], %s303
          %s306 = sshll.u32 [#allocation14], 4
          %s307 = int_to_ptr.vmem [resolvable:$true] %s306
          %309 = dma.hbm_to_vmem [thread:$0]  %s5, 16, %s307, [#allocation15]
        $region20: #{transformer_forward_pallas.15} parent=11 // pred_fallthru
          _
        // Predicated region
        $region21: #{transformer_forward_pallas.15} parent=11 // pred_check
          %p310 = pneg %p222
        $region22: #{transformer_forward_pallas.15} parent=11 // pred_check_branch
          %312 = sbr.rel (%p310) target = $region24
        $region23: #{transformer_forward_pallas.15} parent=11 // pred_region
          %s314 = ssub.s32 16, 16
          %315 = vsyncadd [#allocation15], %s314
          %s317 = sshll.u32 [#allocation16], 4
          %s318 = int_to_ptr.vmem [resolvable:$true] %s317
          %320 = dma.hbm_to_vmem [thread:$0]  %s6, 16, %s318, [#allocation15]
        $region24: #{transformer_forward_pallas.15} parent=11 // pred_fallthru
          _
        // Predicated region
        $region25: #{transformer_forward_pallas.15} parent=11 // pred_check
          %p321 = pneg %p243
        $region26: #{transformer_forward_pallas.15} parent=11 // pred_check_branch
          %323 = sbr.rel (%p321) target = $region28
        $region27: #{transformer_forward_pallas.15} parent=11 // pred_region
          %s325 = ssub.s32 16, 16
          %326 = vsyncadd [#allocation18], %s325
          %s328 = sshll.u32 [#allocation17], 4
          %s329 = int_to_ptr.vmem [resolvable:$true] %s328
          %331 = dma.hbm_to_vmem [thread:$0]  %s7, 16, %s329, [#allocation18]
        $region28: #{transformer_forward_pallas.15} parent=11 // pred_fallthru
          _
      $region12: #{transformer_forward_pallas.15} parent=5 // pred_fallthru
        _
      %p332 = scmp.lt.s32.totalorder %s28, 2
      // Predicated region
      $region29: #{transformer_forward_pallas.15} parent=5 // pred_check
        %p333 = pneg %p332
      $region30: #{transformer_forward_pallas.15} parent=5 // pred_check_branch
        %335 = sbr.rel (%p333) target = $region32
      $region31: #{transformer_forward_pallas.15} parent=5 // pred_region
        // Predicated region
        $region33: #{transformer_forward_pallas.15} parent=31 // pred_check
          %p336 = pneg %p69
        $region34: #{transformer_forward_pallas.15} parent=31 // pred_check_branch
          %338 = sbr.rel (%p336) target = $region36
        $region35: #{transformer_forward_pallas.15} parent=31 // pred_region
          %s339 = sand.u32 %s59, 1
          %s340 = scalar_lea.sflag [#allocation6], %s339
          %s341 = sand.u32 %s59, 1
          %s342 = smul.addr %s341, 16
          %s343 = scalar_lea.vmem [#allocation5], %s342
          %s344 = smul.u32 2, %s36
          %s346 = ssub.s32 256, 256
          %347 = vsyncadd %s340, %s346
          %s348 = smul.addr %s35, 2
          %s349 = sadd.s32 %s344, %s348
          %s350 = smul.addr %s349, 128
          %s351 = scalar_lea.hbm %s0, %s350
          %s352 = sshll.u32 %s343, 4
          %s353 = int_to_ptr.vmem [resolvable:$true] %s352
          %358 = dma.hbm_to_vmem [thread:$0]  %s351, 256, %s353, %s340, 128, 128, 8
        $region36: #{transformer_forward_pallas.15} parent=31 // pred_fallthru
          _
        // Predicated region
        $region37: #{transformer_forward_pallas.15} parent=31 // pred_check
          %p359 = pneg %p97
        $region38: #{transformer_forward_pallas.15} parent=31 // pred_check_branch
          %361 = sbr.rel (%p359) target = $region40
        $region39: #{transformer_forward_pallas.15} parent=31 // pred_region
          %s362 = sand.u32 %s28, 1
          %s363 = scalar_lea.sflag [#allocation9], %s362
          %s364 = sand.u32 %s87, 1
          %s365 = smul.addr %s364, 16
          %s366 = scalar_lea.vmem [#allocation8], %s365
          %s367 = smul.u32 2, %s37
          %s369 = ssub.s32 256, 256
          %370 = vsyncadd %s363, %s369
          %s371 = smul.addr %s35, 2
          %s372 = sadd.s32 %s367, %s371
          %s373 = smul.addr %s372, 128
          %s374 = scalar_lea.hbm %s1, %s373
          %s375 = sshll.u32 %s366, 4
          %s376 = int_to_ptr.vmem [resolvable:$true] %s375
          %381 = dma.hbm_to_vmem [thread:$0]  %s374, 256, %s376, %s363, 128, 128, 8
        $region40: #{transformer_forward_pallas.15} parent=31 // pred_fallthru
          _
        // Predicated region
        $region41: #{transformer_forward_pallas.15} parent=31 // pred_check
          %p382 = pneg %p125
        $region42: #{transformer_forward_pallas.15} parent=31 // pred_check_branch
          %384 = sbr.rel (%p382) target = $region44
        $region43: #{transformer_forward_pallas.15} parent=31 // pred_region
          %s385 = sand.u32 %s28, 1
          %s386 = scalar_lea.sflag [#allocation9], %s385
          %s387 = sand.u32 %s115, 1
          %s388 = smul.addr %s387, 16
          %s389 = scalar_lea.vmem [#allocation10], %s388
          %s390 = smul.u32 2, %s37
          %s392 = ssub.s32 256, 256
          %393 = vsyncadd %s386, %s392
          %s394 = smul.addr %s35, 2
          %s395 = sadd.s32 %s390, %s394
          %s396 = smul.addr %s395, 128
          %s397 = scalar_lea.hbm %s2, %s396
          %s398 = sshll.u32 %s389, 4
          %s399 = int_to_ptr.vmem [resolvable:$true] %s398
          %404 = dma.hbm_to_vmem [thread:$0]  %s397, 256, %s399, %s386, 128, 128, 8
        $region44: #{transformer_forward_pallas.15} parent=31 // pred_fallthru
          _
        // Predicated region
        $region45: #{transformer_forward_pallas.15} parent=31 // pred_check
          %p405 = pneg %p153
        $region46: #{transformer_forward_pallas.15} parent=31 // pred_check_branch
          %407 = sbr.rel (%p405) target = $region48
        $region47: #{transformer_forward_pallas.15} parent=31 // pred_region
          %s408 = sand.u32 %s28, 1
          %s409 = scalar_lea.sflag [#allocation12], %s408
          %s410 = sand.u32 %s143, 1
          %s411 = smul.addr %s410, 16
          %s412 = scalar_lea.vmem [#allocation11], %s411
          %s413 = smul.u32 2, %s36
          %s415 = ssub.s32 256, 256
          %416 = vsyncadd %s409, %s415
          %s417 = smul.addr %s35, 2
          %s418 = sadd.s32 %s413, %s417
          %s419 = smul.addr %s418, 128
          %s420 = scalar_lea.hbm %s3, %s419
          %s421 = sshll.u32 %s412, 4
          %s422 = int_to_ptr.vmem [resolvable:$true] %s421
          %427 = dma.hbm_to_vmem [thread:$0]  %s420, 256, %s422, %s409, 128, 128, 8
        $region48: #{transformer_forward_pallas.15} parent=31 // pred_fallthru
          _
      $region32: #{transformer_forward_pallas.15} parent=5 // pred_fallthru
        _
      %p428 = scmp.le.s32.totalorder 1, %s28
      %p429 = scmp.lt.s32.totalorder %s28, 3
      %p430 = pnand %p428, %p429
      %p431 = pneg %p430
      // Predicated region
      $region49: #{transformer_forward_pallas.15} parent=5 // pred_check
        _
      $region50: #{transformer_forward_pallas.15} parent=5 // pred_check_branch
        %433 = sbr.rel (%p430) target = $region52
      $region51: #{transformer_forward_pallas.15} parent=5 // pred_region
        %s434 = ssub.s32 %s28, 1
        %s435 = sand.u32 %s62, 1
        %s436 = scalar_lea.sflag [#allocation6], %s435
        %s437 = sand.u32 %s62, 1
        %s438 = smul.addr %s437, 16
        %s439 = scalar_lea.vmem [#allocation5], %s438
        // Predicated region
        $region53: #{transformer_forward_pallas.15} parent=51 // pred_check
          %p440 = pneg %p75
        $region54: #{transformer_forward_pallas.15} parent=51 // pred_check_branch
          %442 = sbr.rel (%p440) target = $region56
        $region55: #{transformer_forward_pallas.15} parent=51 // pred_region
          %443 = dma.done %s436, 256
        $region56: #{transformer_forward_pallas.15} parent=51 // pred_fallthru
          _
        %s444 = sand.u32 %s33, 1
        %s445 = scalar_lea.sflag [#allocation9], %s444
        %s446 = sand.u32 %s90, 1
        %s447 = smul.addr %s446, 16
        %s448 = scalar_lea.vmem [#allocation8], %s447
        // Predicated region
        $region57: #{transformer_forward_pallas.15} parent=51 // pred_check
          %p449 = pneg %p103
        $region58: #{transformer_forward_pallas.15} parent=51 // pred_check_branch
          %451 = sbr.rel (%p449) target = $region60
        $region59: #{transformer_forward_pallas.15} parent=51 // pred_region
          %452 = dma.done %s445, 256
        $region60: #{transformer_forward_pallas.15} parent=51 // pred_fallthru
          _
        %s453 = sand.u32 %s33, 1
        %s454 = scalar_lea.sflag [#allocation9], %s453
        %s455 = sand.u32 %s118, 1
        %s456 = smul.addr %s455, 16
        %s457 = scalar_lea.vmem [#allocation10], %s456
        // Predicated region
        $region61: #{transformer_forward_pallas.15} parent=51 // pred_check
          %p458 = pneg %p131
        $region62: #{transformer_forward_pallas.15} parent=51 // pred_check_branch
          %460 = sbr.rel (%p458) target = $region64
        $region63: #{transformer_forward_pallas.15} parent=51 // pred_region
          %461 = dma.done %s454, 256
        $region64: #{transformer_forward_pallas.15} parent=51 // pred_fallthru
          _
        %s462 = sand.u32 %s33, 1
        %s463 = scalar_lea.sflag [#allocation12], %s462
        %s464 = sand.u32 %s146, 1
        %s465 = smul.addr %s464, 16
        %s466 = scalar_lea.vmem [#allocation11], %s465
        // Predicated region
        $region65: #{transformer_forward_pallas.15} parent=51 // pred_check
          %p467 = pneg %p159
        $region66: #{transformer_forward_pallas.15} parent=51 // pred_check_branch
          %469 = sbr.rel (%p467) target = $region68
        $region67: #{transformer_forward_pallas.15} parent=51 // pred_region
          %470 = dma.done %s463, 256
        $region68: #{transformer_forward_pallas.15} parent=51 // pred_fallthru
          _
        // Predicated region
        $region69: #{transformer_forward_pallas.15} parent=51 // pred_check
          %p471 = pneg %p180
        $region70: #{transformer_forward_pallas.15} parent=51 // pred_check_branch
          %473 = sbr.rel (%p471) target = $region72
        $region71: #{transformer_forward_pallas.15} parent=51 // pred_region
          %474 = dma.done [#allocation12], 512
        $region72: #{transformer_forward_pallas.15} parent=51 // pred_fallthru
          _
        // Predicated region
        $region73: #{transformer_forward_pallas.15} parent=51 // pred_check
          %p475 = pneg %p201
        $region74: #{transformer_forward_pallas.15} parent=51 // pred_check_branch
          %477 = sbr.rel (%p475) target = $region76
        $region75: #{transformer_forward_pallas.15} parent=51 // pred_region
          %478 = dma.done [#allocation15], 16
        $region76: #{transformer_forward_pallas.15} parent=51 // pred_fallthru
          _
        // Predicated region
        $region77: #{transformer_forward_pallas.15} parent=51 // pred_check
          %p479 = pneg %p222
        $region78: #{transformer_forward_pallas.15} parent=51 // pred_check_branch
          %481 = sbr.rel (%p479) target = $region80
        $region79: #{transformer_forward_pallas.15} parent=51 // pred_region
          %482 = dma.done [#allocation15], 16
        $region80: #{transformer_forward_pallas.15} parent=51 // pred_fallthru
          _
        // Predicated region
        $region81: #{transformer_forward_pallas.15} parent=51 // pred_check
          %p483 = pneg %p243
        $region82: #{transformer_forward_pallas.15} parent=51 // pred_check_branch
          %485 = sbr.rel (%p483) target = $region84
        $region83: #{transformer_forward_pallas.15} parent=51 // pred_region
          %486 = dma.done [#allocation18], 16
        $region84: #{transformer_forward_pallas.15} parent=51 // pred_fallthru
          _
        %s487 = sand.u32 %s62, 1
        %s488 = scalar_lea.sflag [#allocation6], %s487
        %s489 = sand.u32 %s62, 1
        %s490 = smul.addr %s489, 16
        %s491 = scalar_lea.vmem [#allocation5], %s490
        %p492 = pneg %p75
        %p493 = pneg %p72
        %s494 = sand.u32 %s33, 1
        %s495 = scalar_lea.sflag [#allocation9], %s494
        %s496 = sand.u32 %s90, 1
        %s497 = smul.addr %s496, 16
        %s498 = scalar_lea.vmem [#allocation8], %s497
        %p499 = pneg %p103
        %p500 = pneg %p100
        %s501 = sand.u32 %s33, 1
        %s502 = scalar_lea.sflag [#allocation9], %s501
        %s503 = sand.u32 %s118, 1
        %s504 = smul.addr %s503, 16
        %s505 = scalar_lea.vmem [#allocation10], %s504
        %p506 = pneg %p131
        %p507 = pneg %p128
        %s508 = sand.u32 %s33, 1
        %s509 = scalar_lea.sflag [#allocation12], %s508
        %s510 = sand.u32 %s146, 1
        %s511 = smul.addr %s510, 16
        %s512 = scalar_lea.vmem [#allocation11], %s511
        %p513 = pneg %p159
        %p514 = pneg %p156
        %p515 = pneg %p180
        %p516 = pneg %p177
        %p517 = pneg %p201
        %p518 = pneg %p198
        %p519 = pneg %p222
        %p520 = pneg %p219
        %p521 = pneg %p243
        %p522 = pneg %p240
        %p523 = pneg %p271
        %p524 = pneg %p268
        %s525 = sand.u32 %s258, 1
        %s526 = scalar_lea.sflag [#allocation7], %s525
        %s527 = sand.u32 %s258, 1
        %s528 = smul.addr %s527, 16
        %s529 = scalar_lea.vmem [#allocation19], %s528
        %s530 = smul.u32 2, %s39
        %s531 = smul.u32 2, %s40
        %s532 = smul.u32 2, %s40
        %s533 = smul.u32 2, %s39
        %s534 = smul.u32 2, %s39
        %p535 = scmp.eq.s32.totalorder %s40, 0
        // Predicated region
        $region85: #{transformer_forward_pallas.15} parent=51 // pred_check
          %p536 = pneg %p535
        $region86: #{transformer_forward_pallas.15} parent=51 // pred_check_branch
          %538 = sbr.rel (%p536) target = $region88
        $region87: #{transformer_forward_pallas.15} parent=51 // pred_region
          %vm539 = vcmask 7168
          %540 = vst.msk [vmem:[#allocation2] sm:$0xff] %vm539, -inf
          %541 = vst.msk [vmem:[#allocation2 + $0x8] sm:$0xff] %vm539, -inf
          %542 = vst.msk [vmem:[#allocation2 + $0x10] sm:$0xff] %vm539, -inf
          %543 = vst.msk [vmem:[#allocation2 + $0x18] sm:$0xff] %vm539, -inf
          %544 = vst.msk [vmem:[#allocation2 + $0x20] sm:$0xff] %vm539, -inf
          %545 = vst.msk [vmem:[#allocation2 + $0x28] sm:$0xff] %vm539, -inf
          %546 = vst.msk [vmem:[#allocation2 + $0x30] sm:$0xff] %vm539, -inf
          %547 = vst.msk [vmem:[#allocation2 + $0x38] sm:$0xff] %vm539, -inf
          %548 = vst.msk [vmem:[#allocation3] sm:$0xff] %vm539, 0.0
          %549 = vst.msk [vmem:[#allocation3 + $0x8] sm:$0xff] %vm539, 0.0
          %550 = vst.msk [vmem:[#allocation3 + $0x10] sm:$0xff] %vm539, 0.0
          %551 = vst.msk [vmem:[#allocation3 + $0x18] sm:$0xff] %vm539, 0.0
          %552 = vst.msk [vmem:[#allocation3 + $0x20] sm:$0xff] %vm539, 0.0
          %553 = vst.msk [vmem:[#allocation3 + $0x28] sm:$0xff] %vm539, 0.0
          %554 = vst.msk [vmem:[#allocation3 + $0x30] sm:$0xff] %vm539, 0.0
          %555 = vst.msk [vmem:[#allocation3 + $0x38] sm:$0xff] %vm539, 0.0
          %vm556 = vcmask 64512
          %557 = vst.msk [vmem:[#allocation4] sm:$0xff] %vm556, 0.0
          %558 = vst.msk [vmem:[#allocation4 + $0x8] sm:$0xff] %vm556, 0.0
          %559 = vst.msk [vmem:[#allocation4 + $0x10] sm:$0xff] %vm556, 0.0
          %560 = vst.msk [vmem:[#allocation4 + $0x18] sm:$0xff] %vm556, 0.0
          %561 = vst.msk [vmem:[#allocation4 + $0x20] sm:$0xff] %vm556, 0.0
          %562 = vst.msk [vmem:[#allocation4 + $0x28] sm:$0xff] %vm556, 0.0
          %563 = vst.msk [vmem:[#allocation4 + $0x30] sm:$0xff] %vm556, 0.0
          %564 = vst.msk [vmem:[#allocation4 + $0x38] sm:$0xff] %vm556, 0.0
        $region88: #{transformer_forward_pallas.15} parent=51 // pred_fallthru
          _
        %v565 = vld [vmem:[%s439] sm:$0xff]
        %v566 = vld [vmem:[%s439 + $0x8] sm:$0xff]
        %v567 = vld [vmem:[%s448] sm:$0xff]
        %v568 = vld [vmem:[%s448 + $0x8] sm:$0xff]
        %v569 = vld [vmem:[%s457] sm:$0xff]
        %v570 = vld [vmem:[%s457 + $0x8] sm:$0xff]
        %vm571 = vcmask 64512
        %v573 = vsel %vm571, %v565, 0
        %v576 = vsel %vm571, %v566, 0
        %v579 = vsel %vm571, %v567, 0
        %v582 = vsel %vm571, %v568, 0
        %584 = vmatprep.subr.mxu0 0.0
        %585 = vmatpush1.xpose.msra.mxu0 %v579
        %586 = vmatprep.subr.mxu0 0.0
        %587 = vmatpush1.xpose.msra.mxu0 %v582
        %588 = vmatprep.subr.mxu0 0.0
        %589 = vmatpush1.xpose.msra.mxu0 0.0
        %590 = vmatprep.subr.mxu0 0.0
        %591 = vmatpush1.xpose.msra.mxu0 0.0
        %592 = vmatprep.subr.mxu0 0.0
        %593 = vmatpush1.xpose.msra.mxu0 0.0
        %594 = vmatprep.subr.mxu0 0.0
        %595 = vmatpush1.xpose.msra.mxu0 0.0
        %596 = vmatprep.subr.mxu0 0.0
        %597 = vmatpush1.xpose.msra.mxu0 0.0
        %598 = vmatprep.subr.mxu0 0.0
        %599 = vmatpush1.xpose.msra.mxu0 0.0
        %600 = vmatprep.subr.mxu0 0.0
        %601 = vmatpush1.xpose.msra.mxu0 0.0
        %602 = vmatprep.subr.mxu0 0.0
        %603 = vmatpush1.xpose.msra.mxu0 0.0
        %604 = vmatprep.subr.mxu0 0.0
        %605 = vmatpush1.xpose.msra.mxu0 0.0
        %606 = vmatprep.subr.mxu0 0.0
        %607 = vmatpush1.xpose.msra.mxu0 0.0
        %608 = vmatprep.subr.mxu0 0.0
        %609 = vmatpush1.xpose.msra.mxu0 0.0
        %610 = vmatprep.subr.mxu0 0.0
        %611 = vmatpush1.xpose.msra.mxu0 0.0
        %612 = vmatprep.subr.mxu0 0.0
        %613 = vmatpush1.xpose.msra.mxu0 0.0
        %614 = vmatprep.subr.mxu0 0.0
        %615 = vmatpush1.xpose.msra.mxu0 0.0
        %616 = vmatprep.subr.mxu0 0.0
        %617 = vmatpush1.xpose.msra.mxu0 0.0
        %618 = vmatprep.subr.mxu0 0.0
        %619 = vmatpush1.xpose.msra.mxu0 0.0
        %620 = vmatprep.subr.mxu0 0.0
        %621 = vmatpush1.xpose.msra.mxu0 0.0
        %622 = vmatprep.subr.mxu0 0.0
        %623 = vmatpush1.xpose.msra.mxu0 0.0
        %624 = vmatprep.subr.mxu0 0.0
        %625 = vmatpush1.xpose.msra.mxu0 0.0
        %626 = vmatprep.subr.mxu0 0.0
        %627 = vmatpush1.xpose.msra.mxu0 0.0
        %628 = vmatprep.subr.mxu0 0.0
        %629 = vmatpush1.xpose.msra.mxu0 0.0
        %630 = vmatprep.subr.mxu0 0.0
        %631 = vmatpush1.xpose.msra.mxu0 0.0
        %632 = vmatprep.subr.mxu0 0.0
        %633 = vmatpush1.xpose.msra.mxu0 0.0
        %634 = vmatprep.subr.mxu0 0.0
        %635 = vmatpush1.xpose.msra.mxu0 0.0
        %636 = vmatprep.subr.mxu0 0.0
        %637 = vmatpush1.xpose.msra.mxu0 0.0
        %638 = vmatprep.subr.mxu0 0.0
        %639 = vmatpush1.xpose.msra.mxu0 0.0
        %640 = vmatprep.subr.mxu0 0.0
        %641 = vmatpush1.xpose.msra.mxu0 0.0
        %642 = vmatprep.subr.mxu0 0.0
        %643 = vmatpush1.xpose.msra.mxu0 0.0
        %644 = vmatprep.subr.mxu0 0.0
        %645 = vmatpush1.xpose.msra.mxu0 0.0
        %646 = vmatprep.subr.mxu0 0.0
        %647 = vmatpush1.xpose.msra.mxu0 0.0
        %648 = vmatprep.mubr.f32.mxu0 0.0
        %649 = vmatmul.mubr.f32.gmra.mrb[0].mxu0 %v573
        %v650 = vpop.f32.mrb[0].mxu0
        %v651 = vadd.f32 0.0, %v650
        %v652 = vpop.f32.mrb[0].mxu0
        %653 = vmatprep.mubr.f32.mxu0 0.0
        %654 = vmatmul.mubr.f32.gmra.mrb[0].mxu0 %v576
        %v655 = vpop.f32.mrb[0].mxu0
        %v656 = vadd.f32 0.0, %v655
        %v657 = vpop.f32.mrb[0].mxu0
        %658 = vdwg.mxu0
        %v659 = vmul.f32 %v651, 0.35355338
        %v660 = vmul.f32 %v656, 0.35355338
        %v661 = vld [vmem:[#allocation2] sm:$0xff]
        %v662 = vld [vmem:[#allocation2 + $0x8] sm:$0xff]
        %vm663 = vcmask 130048
        %v664 = vsel %vm663, %v659, -inf
        %665 = vmax.xlane.f32.xlu0 %v664
        %v666 = vpop.xlane.xlu0 %665
        %v667 = vsel %vm663, %v660, -inf
        %668 = vmax.xlane.f32.xlu0 %v667
        %v669 = vpop.xlane.xlu0 %668
        %v670 = vmax.f32 %v661, %v666
        %v671 = vmax.f32 %v662, %v669
        %v672 = vsub.f32 %v661, %v670
        %v673 = vsub.f32 %v662, %v671
        %v674 = vmul.f32 %v672, 1.442695
        %v675 = vpow.pop %v674
        %v676 = vmul.f32 %v673, 1.442695
        %v677 = vpow.pop %v676
        %679 = vset.pattern.permute.xlu0 0
        %680 = vperm.xlu0 %679, %v670
        %v681 = vpop.permute.xlu0 %680
        %684 = vset.pattern.permute.xlu0 0
        %685 = vperm.xlu0 %684, %v671
        %v686 = vpop.permute.xlu0 %685
        %v688 = vsub.f32 %v659, %v681
        %v689 = vsub.f32 %v660, %v686
        %v690 = vmul.f32 %v688, 1.442695
        %v691 = vpow.pop %v690
        %v692 = vmul.f32 %v689, 1.442695
        %v693 = vpow.pop %v692
        %v694 = vld [vmem:[#allocation3] sm:$0xff]
        %v695 = vld [vmem:[#allocation3 + $0x8] sm:$0xff]
        %v696 = vmul.f32 %v675, %v694
        %v697 = vmul.f32 %v677, %v695
        %v698 = vsel %vm663, %v691, 0.0
        %699 = vadd.xlane.f32.xlu0 %v698
        %v700 = vpop.xlane.xlu0 %699
        %v701 = vsel %vm663, %v693, 0.0
        %702 = vadd.xlane.f32.xlu0 %v701
        %v703 = vpop.xlane.xlu0 %702
        %v704 = vadd.f32 %v696, %v700
        %v705 = vadd.f32 %v697, %v703
        %vm706 = vcmask 7168
        %707 = vst.msk [vmem:[#allocation3] sm:$0xff] %vm706, %v704
        %708 = vst.msk [vmem:[#allocation3 + $0x8] sm:$0xff] %vm706, %v705
        %v709 = vld [vmem:[#allocation4] sm:$0xff]
        %v710 = vld [vmem:[#allocation4 + $0x8] sm:$0xff]
        %712 = vset.pattern.permute.xlu0 0
        %713 = vperm.xlu0 %712, %v675
        %v714 = vpop.permute.xlu0 %713
        %717 = vset.pattern.permute.xlu0 0
        %718 = vperm.xlu0 %717, %v677
        %v719 = vpop.permute.xlu0 %718
        %v721 = vmul.f32 %v714, %v709
        %v722 = vmul.f32 %v719, %v710
        %v724 = vsel %vm663, %v691, 0
        %v727 = vsel %vm663, %v693, 0
        %729 = vmatprep.subr.mxu0 0.0
        %730 = vmatpush1.msra.mxu0 %v569
        %731 = vmatprep.subr.mxu0 0.0
        %732 = vmatpush1.msra.mxu0 %v570
        %733 = vmatprep.subr.mxu0 0.0
        %734 = vmatpush1.msra.mxu0 0.0
        %735 = vmatprep.subr.mxu0 0.0
        %736 = vmatpush1.msra.mxu0 0.0
        %737 = vmatprep.subr.mxu0 0.0
        %738 = vmatpush1.msra.mxu0 0.0
        %739 = vmatprep.subr.mxu0 0.0
        %740 = vmatpush1.msra.mxu0 0.0
        %741 = vmatprep.subr.mxu0 0.0
        %742 = vmatpush1.msra.mxu0 0.0
        %743 = vmatprep.subr.mxu0 0.0
        %744 = vmatpush1.msra.mxu0 0.0
        %745 = vmatprep.subr.mxu0 0.0
        %746 = vmatpush1.msra.mxu0 0.0
        %747 = vmatprep.subr.mxu0 0.0
        %748 = vmatpush1.msra.mxu0 0.0
        %749 = vmatprep.subr.mxu0 0.0
        %750 = vmatpush1.msra.mxu0 0.0
        %751 = vmatprep.subr.mxu0 0.0
        %752 = vmatpush1.msra.mxu0 0.0
        %753 = vmatprep.subr.mxu0 0.0
        %754 = vmatpush1.msra.mxu0 0.0
        %755 = vmatprep.subr.mxu0 0.0
        %756 = vmatpush1.msra.mxu0 0.0
        %757 = vmatprep.subr.mxu0 0.0
        %758 = vmatpush1.msra.mxu0 0.0
        %759 = vmatprep.subr.mxu0 0.0
        %760 = vmatpush1.msra.mxu0 0.0
        %761 = vmatprep.subr.mxu0 0.0
        %762 = vmatpush1.msra.mxu0 0.0
        %763 = vmatprep.subr.mxu0 0.0
        %764 = vmatpush1.msra.mxu0 0.0
        %765 = vmatprep.subr.mxu0 0.0
        %766 = vmatpush1.msra.mxu0 0.0
        %767 = vmatprep.subr.mxu0 0.0
        %768 = vmatpush1.msra.mxu0 0.0
        %769 = vmatprep.subr.mxu0 0.0
        %770 = vmatpush1.msra.mxu0 0.0
        %771 = vmatprep.subr.mxu0 0.0
        %772 = vmatpush1.msra.mxu0 0.0
        %773 = vmatprep.subr.mxu0 0.0
        %774 = vmatpush1.msra.mxu0 0.0
        %775 = vmatprep.subr.mxu0 0.0
        %776 = vmatpush1.msra.mxu0 0.0
        %777 = vmatprep.subr.mxu0 0.0
        %778 = vmatpush1.msra.mxu0 0.0
        %779 = vmatprep.subr.mxu0 0.0
        %780 = vmatpush1.msra.mxu0 0.0
        %781 = vmatprep.subr.mxu0 0.0
        %782 = vmatpush1.msra.mxu0 0.0
        %783 = vmatprep.subr.mxu0 0.0
        %784 = vmatpush1.msra.mxu0 0.0
        %785 = vmatprep.subr.mxu0 0.0
        %786 = vmatpush1.msra.mxu0 0.0
        %787 = vmatprep.subr.mxu0 0.0
        %788 = vmatpush1.msra.mxu0 0.0
        %789 = vmatprep.subr.mxu0 0.0
        %790 = vmatpush1.msra.mxu0 0.0
        %791 = vmatprep.subr.mxu0 0.0
        %792 = vmatpush1.msra.mxu0 0.0
        %793 = vmatprep.mubr.f32.mxu0 0.0
        %794 = vmatmul.mubr.f32.gmra.mrb[0].mxu0 %v724
        %v795 = vpop.f32.mrb[0].mxu0
        %v796 = vadd.f32 0.0, %v795
        %v797 = vpop.f32.mrb[0].mxu0
        %798 = vmatprep.mubr.f32.mxu0 0.0
        %799 = vmatmul.mubr.f32.gmra.mrb[0].mxu0 %v727
        %v800 = vpop.f32.mrb[0].mxu0
        %v801 = vadd.f32 0.0, %v800
        %v802 = vpop.f32.mrb[0].mxu0
        %803 = vdwg.mxu0
        %v804 = vadd.f32 %v721, %v796
        %v805 = vadd.f32 %v722, %v801
        %806 = vst.msk [vmem:[#allocation4] sm:$0xff] %vm571, %v804
        %807 = vst.msk [vmem:[#allocation4 + $0x8] sm:$0xff] %vm571, %v805
        %808 = vst.msk [vmem:[#allocation2] sm:$0xff] %vm706, %v670
        %809 = vst.msk [vmem:[#allocation2 + $0x8] sm:$0xff] %vm706, %v671
        %810 = vrot.lane.b32.xlu0 %v565, 120
        %v811 = vpop.permute.xlu0 %810
        %812 = vrot.lane.b32.xlu0 %v566, 120
        %v813 = vpop.permute.xlu0 %812
        %814 = vrot.lane.b32.xlu0 %v567, 120
        %v815 = vpop.permute.xlu0 %814
        %816 = vrot.lane.b32.xlu0 %v568, 120
        %v817 = vpop.permute.xlu0 %816
        %v818 = vsel %vm571, %v811, 0
        %v820 = vsel %vm571, %v813, 0
        %v822 = vsel %vm571, %v815, 0
        %v824 = vsel %vm571, %v817, 0
        %826 = vmatprep.subr.mxu0 0.0
        %827 = vmatpush1.xpose.msra.mxu0 %v822
        %828 = vmatprep.subr.mxu0 0.0
        %829 = vmatpush1.xpose.msra.mxu0 %v824
        %830 = vmatprep.subr.mxu0 0.0
        %831 = vmatpush1.xpose.msra.mxu0 0.0
        %832 = vmatprep.subr.mxu0 0.0
        %833 = vmatpush1.xpose.msra.mxu0 0.0
        %834 = vmatprep.subr.mxu0 0.0
        %835 = vmatpush1.xpose.msra.mxu0 0.0
        %836 = vmatprep.subr.mxu0 0.0
        %837 = vmatpush1.xpose.msra.mxu0 0.0
        %838 = vmatprep.subr.mxu0 0.0
        %839 = vmatpush1.xpose.msra.mxu0 0.0
        %840 = vmatprep.subr.mxu0 0.0
        %841 = vmatpush1.xpose.msra.mxu0 0.0
        %842 = vmatprep.subr.mxu0 0.0
        %843 = vmatpush1.xpose.msra.mxu0 0.0
        %844 = vmatprep.subr.mxu0 0.0
        %845 = vmatpush1.xpose.msra.mxu0 0.0
        %846 = vmatprep.subr.mxu0 0.0
        %847 = vmatpush1.xpose.msra.mxu0 0.0
        %848 = vmatprep.subr.mxu0 0.0
        %849 = vmatpush1.xpose.msra.mxu0 0.0
        %850 = vmatprep.subr.mxu0 0.0
        %851 = vmatpush1.xpose.msra.mxu0 0.0
        %852 = vmatprep.subr.mxu0 0.0
        %853 = vmatpush1.xpose.msra.mxu0 0.0
        %854 = vmatprep.subr.mxu0 0.0
        %855 = vmatpush1.xpose.msra.mxu0 0.0
        %856 = vmatprep.subr.mxu0 0.0
        %857 = vmatpush1.xpose.msra.mxu0 0.0
        %858 = vmatprep.subr.mxu0 0.0
        %859 = vmatpush1.xpose.msra.mxu0 0.0
        %860 = vmatprep.subr.mxu0 0.0
        %861 = vmatpush1.xpose.msra.mxu0 0.0
        %862 = vmatprep.subr.mxu0 0.0
        %863 = vmatpush1.xpose.msra.mxu0 0.0
        %864 = vmatprep.subr.mxu0 0.0
        %865 = vmatpush1.xpose.msra.mxu0 0.0
        %866 = vmatprep.subr.mxu0 0.0
        %867 = vmatpush1.xpose.msra.mxu0 0.0
        %868 = vmatprep.subr.mxu0 0.0
        %869 = vmatpush1.xpose.msra.mxu0 0.0
        %870 = vmatprep.subr.mxu0 0.0
        %871 = vmatpush1.xpose.msra.mxu0 0.0
        %872 = vmatprep.subr.mxu0 0.0
        %873 = vmatpush1.xpose.msra.mxu0 0.0
        %874 = vmatprep.subr.mxu0 0.0
        %875 = vmatpush1.xpose.msra.mxu0 0.0
        %876 = vmatprep.subr.mxu0 0.0
        %877 = vmatpush1.xpose.msra.mxu0 0.0
        %878 = vmatprep.subr.mxu0 0.0
        %879 = vmatpush1.xpose.msra.mxu0 0.0
        %880 = vmatprep.subr.mxu0 0.0
        %881 = vmatpush1.xpose.msra.mxu0 0.0
        %882 = vmatprep.subr.mxu0 0.0
        %883 = vmatpush1.xpose.msra.mxu0 0.0
        %884 = vmatprep.subr.mxu0 0.0
        %885 = vmatpush1.xpose.msra.mxu0 0.0
        %886 = vmatprep.subr.mxu0 0.0
        %887 = vmatpush1.xpose.msra.mxu0 0.0
        %888 = vmatprep.subr.mxu0 0.0
        %889 = vmatpush1.xpose.msra.mxu0 0.0
        %890 = vmatprep.mubr.f32.mxu0 0.0
        %891 = vmatmul.mubr.f32.gmra.mrb[0].mxu0 %v818
        %v892 = vpop.f32.mrb[0].mxu0
        %v893 = vadd.f32 0.0, %v892
        %v894 = vpop.f32.mrb[0].mxu0
        %895 = vmatprep.mubr.f32.mxu0 0.0
        %896 = vmatmul.mubr.f32.gmra.mrb[0].mxu0 %v820
        %v897 = vpop.f32.mrb[0].mxu0
        %v898 = vadd.f32 0.0, %v897
        %v899 = vpop.f32.mrb[0].mxu0
        %900 = vdwg.mxu0
        %v901 = vmul.f32 %v893, 0.35355338
        %v902 = vmul.f32 %v898, 0.35355338
        %s903 = scalar_lea.vmem [#allocation2], 16
        %v904 = vld [vmem:[%s903] sm:$0xff]
        %v905 = vld [vmem:[%s903 + $0x8] sm:$0xff]
        %v906 = vsel %vm663, %v901, -inf
        %907 = vmax.xlane.f32.xlu0 %v906
        %v908 = vpop.xlane.xlu0 %907
        %v909 = vsel %vm663, %v902, -inf
        %910 = vmax.xlane.f32.xlu0 %v909
        %v911 = vpop.xlane.xlu0 %910
        %v912 = vmax.f32 %v904, %v908
        %v913 = vmax.f32 %v905, %v911
        %v914 = vsub.f32 %v904, %v912
        %v915 = vsub.f32 %v905, %v913
        %v916 = vmul.f32 %v914, 1.442695
        %v917 = vpow.pop %v916
        %v918 = vmul.f32 %v915, 1.442695
        %v919 = vpow.pop %v918
        %921 = vset.pattern.permute.xlu0 0
        %922 = vperm.xlu0 %921, %v912
        %v923 = vpop.permute.xlu0 %922
        %926 = vset.pattern.permute.xlu0 0
        %927 = vperm.xlu0 %926, %v913
        %v928 = vpop.permute.xlu0 %927
        %v930 = vsub.f32 %v901, %v923
        %v931 = vsub.f32 %v902, %v928
        %v932 = vmul.f32 %v930, 1.442695
        %v933 = vpow.pop %v932
        %v934 = vmul.f32 %v931, 1.442695
        %v935 = vpow.pop %v934
        %s936 = scalar_lea.vmem [#allocation3], 16
        %v937 = vld [vmem:[%s936] sm:$0xff]
        %v938 = vld [vmem:[%s936 + $0x8] sm:$0xff]
        %v939 = vmul.f32 %v917, %v937
        %v940 = vmul.f32 %v919, %v938
        %v941 = vsel %vm663, %v933, 0.0
        %942 = vadd.xlane.f32.xlu0 %v941
        %v943 = vpop.xlane.xlu0 %942
        %v944 = vsel %vm663, %v935, 0.0
        %945 = vadd.xlane.f32.xlu0 %v944
        %v946 = vpop.xlane.xlu0 %945
        %v947 = vadd.f32 %v939, %v943
        %v948 = vadd.f32 %v940, %v946
        %949 = vst.msk [vmem:[%s936] sm:$0xff] %vm706, %v947
        %950 = vst.msk [vmem:[%s936 + $0x8] sm:$0xff] %vm706, %v948
        %s951 = scalar_lea.vmem [#allocation4], 16
        %v952 = vld [vmem:[%s951] sm:$0xff]
        %v953 = vld [vmem:[%s951 + $0x8] sm:$0xff]
        %955 = vset.pattern.permute.xlu0 0
        %956 = vperm.xlu0 %955, %v917
        %v957 = vpop.permute.xlu0 %956
        %960 = vset.pattern.permute.xlu0 0
        %961 = vperm.xlu0 %960, %v919
        %v962 = vpop.permute.xlu0 %961
        %v964 = vmul.f32 %v957, %v952
        %v965 = vmul.f32 %v962, %v953
        %968 = vrot.lane.b32.xlu0 %v569, 120
        %v969 = vpop.permute.xlu0 %968
        %970 = vrot.lane.b32.xlu0 %v570, 120
        %v971 = vpop.permute.xlu0 %970
        %v975 = vsel %vm663, %v933, 0
        %v978 = vsel %vm663, %v935, 0
        %980 = vmatprep.subr.mxu0 0.0
        %981 = vmatpush1.msra.mxu0 %v969
        %982 = vmatprep.subr.mxu0 0.0
        %983 = vmatpush1.msra.mxu0 %v971
        %984 = vmatprep.subr.mxu0 0.0
        %985 = vmatpush1.msra.mxu0 0.0
        %986 = vmatprep.subr.mxu0 0.0
        %987 = vmatpush1.msra.mxu0 0.0
        %988 = vmatprep.subr.mxu0 0.0
        %989 = vmatpush1.msra.mxu0 0.0
        %990 = vmatprep.subr.mxu0 0.0
        %991 = vmatpush1.msra.mxu0 0.0
        %992 = vmatprep.subr.mxu0 0.0
        %993 = vmatpush1.msra.mxu0 0.0
        %994 = vmatprep.subr.mxu0 0.0
        %995 = vmatpush1.msra.mxu0 0.0
        %996 = vmatprep.subr.mxu0 0.0
        %997 = vmatpush1.msra.mxu0 0.0
        %998 = vmatprep.subr.mxu0 0.0
        %999 = vmatpush1.msra.mxu0 0.0
        %1000 = vmatprep.subr.mxu0 0.0
        %1001 = vmatpush1.msra.mxu0 0.0
        %1002 = vmatprep.subr.mxu0 0.0
        %1003 = vmatpush1.msra.mxu0 0.0
        %1004 = vmatprep.subr.mxu0 0.0
        %1005 = vmatpush1.msra.mxu0 0.0
        %1006 = vmatprep.subr.mxu0 0.0
        %1007 = vmatpush1.msra.mxu0 0.0
        %1008 = vmatprep.subr.mxu0 0.0
        %1009 = vmatpush1.msra.mxu0 0.0
        %1010 = vmatprep.subr.mxu0 0.0
        %1011 = vmatpush1.msra.mxu0 0.0
        %1012 = vmatprep.subr.mxu0 0.0
        %1013 = vmatpush1.msra.mxu0 0.0
        %1014 = vmatprep.subr.mxu0 0.0
        %1015 = vmatpush1.msra.mxu0 0.0
        %1016 = vmatprep.subr.mxu0 0.0
        %1017 = vmatpush1.msra.mxu0 0.0
        %1018 = vmatprep.subr.mxu0 0.0
        %1019 = vmatpush1.msra.mxu0 0.0
        %1020 = vmatprep.subr.mxu0 0.0
        %1021 = vmatpush1.msra.mxu0 0.0
        %1022 = vmatprep.subr.mxu0 0.0
        %1023 = vmatpush1.msra.mxu0 0.0
        %1024 = vmatprep.subr.mxu0 0.0
        %1025 = vmatpush1.msra.mxu0 0.0
        %1026 = vmatprep.subr.mxu0 0.0
        %1027 = vmatpush1.msra.mxu0 0.0
        %1028 = vmatprep.subr.mxu0 0.0
        %1029 = vmatpush1.msra.mxu0 0.0
        %1030 = vmatprep.subr.mxu0 0.0
        %1031 = vmatpush1.msra.mxu0 0.0
        %1032 = vmatprep.subr.mxu0 0.0
        %1033 = vmatpush1.msra.mxu0 0.0
        %1034 = vmatprep.subr.mxu0 0.0
        %1035 = vmatpush1.msra.mxu0 0.0
        %1036 = vmatprep.subr.mxu0 0.0
        %1037 = vmatpush1.msra.mxu0 0.0
        %1038 = vmatprep.subr.mxu0 0.0
        %1039 = vmatpush1.msra.mxu0 0.0
        %1040 = vmatprep.subr.mxu0 0.0
        %1041 = vmatpush1.msra.mxu0 0.0
        %1042 = vmatprep.subr.mxu0 0.0
        %1043 = vmatpush1.msra.mxu0 0.0
        %1044 = vmatprep.mubr.f32.mxu0 0.0
        %1045 = vmatmul.mubr.f32.gmra.mrb[0].mxu0 %v975
        %v1046 = vpop.f32.mrb[0].mxu0
        %v1047 = vadd.f32 0.0, %v1046
        %v1048 = vpop.f32.mrb[0].mxu0
        %1049 = vmatprep.mubr.f32.mxu0 0.0
        %1050 = vmatmul.mubr.f32.gmra.mrb[0].mxu0 %v978
        %v1051 = vpop.f32.mrb[0].mxu0
        %v1052 = vadd.f32 0.0, %v1051
        %v1053 = vpop.f32.mrb[0].mxu0
        %1054 = vdwg.mxu0
        %v1055 = vadd.f32 %v964, %v1047
        %v1056 = vadd.f32 %v965, %v1052
        %1057 = vst.msk [vmem:[%s951] sm:$0xff] %vm571, %v1055
        %1058 = vst.msk [vmem:[%s951 + $0x8] sm:$0xff] %vm571, %v1056
        %1059 = vst.msk [vmem:[%s903] sm:$0xff] %vm706, %v912
        %1060 = vst.msk [vmem:[%s903 + $0x8] sm:$0xff] %vm706, %v913
        %1061 = vrot.lane.b32.xlu0 %v565, 112
        %v1062 = vpop.permute.xlu0 %1061
        %1063 = vrot.lane.b32.xlu0 %v566, 112
        %v1064 = vpop.permute.xlu0 %1063
        %1065 = vrot.lane.b32.xlu0 %v567, 112
        %v1066 = vpop.permute.xlu0 %1065
        %1067 = vrot.lane.b32.xlu0 %v568, 112
        %v1068 = vpop.permute.xlu0 %1067
        %v1069 = vsel %vm571, %v1062, 0
        %v1071 = vsel %vm571, %v1064, 0
        %v1073 = vsel %vm571, %v1066, 0
        %v1075 = vsel %vm571, %v1068, 0
        %1077 = vmatprep.subr.mxu0 0.0
        %1078 = vmatpush1.xpose.msra.mxu0 %v1073
        %1079 = vmatprep.subr.mxu0 0.0
        %1080 = vmatpush1.xpose.msra.mxu0 %v1075
        %1081 = vmatprep.subr.mxu0 0.0
        %1082 = vmatpush1.xpose.msra.mxu0 0.0
        %1083 = vmatprep.subr.mxu0 0.0
        %1084 = vmatpush1.xpose.msra.mxu0 0.0
        %1085 = vmatprep.subr.mxu0 0.0
        %1086 = vmatpush1.xpose.msra.mxu0 0.0
        %1087 = vmatprep.subr.mxu0 0.0
        %1088 = vmatpush1.xpose.msra.mxu0 0.0
        %1089 = vmatprep.subr.mxu0 0.0
        %1090 = vmatpush1.xpose.msra.mxu0 0.0
        %1091 = vmatprep.subr.mxu0 0.0
        %1092 = vmatpush1.xpose.msra.mxu0 0.0
        %1093 = vmatprep.subr.mxu0 0.0
        %1094 = vmatpush1.xpose.msra.mxu0 0.0
        %1095 = vmatprep.subr.mxu0 0.0
        %1096 = vmatpush1.xpose.msra.mxu0 0.0
        %1097 = vmatprep.subr.mxu0 0.0
        %1098 = vmatpush1.xpose.msra.mxu0 0.0
        %1099 = vmatprep.subr.mxu0 0.0
        %1100 = vmatpush1.xpose.msra.mxu0 0.0
        %1101 = vmatprep.subr.mxu0 0.0
        %1102 = vmatpush1.xpose.msra.mxu0 0.0
        %1103 = vmatprep.subr.mxu0 0.0
        %1104 = vmatpush1.xpose.msra.mxu0 0.0
        %1105 = vmatprep.subr.mxu0 0.0
        %1106 = vmatpush1.xpose.msra.mxu0 0.0
        %1107 = vmatprep.subr.mxu0 0.0
        %1108 = vmatpush1.xpose.msra.mxu0 0.0
        %1109 = vmatprep.subr.mxu0 0.0
        %1110 = vmatpush1.xpose.msra.mxu0 0.0
        %1111 = vmatprep.subr.mxu0 0.0
        %1112 = vmatpush1.xpose.msra.mxu0 0.0
        %1113 = vmatprep.subr.mxu0 0.0
        %1114 = vmatpush1.xpose.msra.mxu0 0.0
        %1115 = vmatprep.subr.mxu0 0.0
        %1116 = vmatpush1.xpose.msra.mxu0 0.0
        %1117 = vmatprep.subr.mxu0 0.0
        %1118 = vmatpush1.xpose.msra.mxu0 0.0
        %1119 = vmatprep.subr.mxu0 0.0
        %1120 = vmatpush1.xpose.msra.mxu0 0.0
        %1121 = vmatprep.subr.mxu0 0.0
        %1122 = vmatpush1.xpose.msra.mxu0 0.0
        %1123 = vmatprep.subr.mxu0 0.0
        %1124 = vmatpush1.xpose.msra.mxu0 0.0
        %1125 = vmatprep.subr.mxu0 0.0
        %1126 = vmatpush1.xpose.msra.mxu0 0.0
        %1127 = vmatprep.subr.mxu0 0.0
        %1128 = vmatpush1.xpose.msra.mxu0 0.0
        %1129 = vmatprep.subr.mxu0 0.0
        %1130 = vmatpush1.xpose.msra.mxu0 0.0
        %1131 = vmatprep.subr.mxu0 0.0
        %1132 = vmatpush1.xpose.msra.mxu0 0.0
        %1133 = vmatprep.subr.mxu0 0.0
        %1134 = vmatpush1.xpose.msra.mxu0 0.0
        %1135 = vmatprep.subr.mxu0 0.0
        %1136 = vmatpush1.xpose.msra.mxu0 0.0
        %1137 = vmatprep.subr.mxu0 0.0
        %1138 = vmatpush1.xpose.msra.mxu0 0.0
        %1139 = vmatprep.subr.mxu0 0.0
        %1140 = vmatpush1.xpose.msra.mxu0 0.0
        %1141 = vmatprep.mubr.f32.mxu0 0.0
        %1142 = vmatmul.mubr.f32.gmra.mrb[0].mxu0 %v1069
        %v1143 = vpop.f32.mrb[0].mxu0
        %v1144 = vadd.f32 0.0, %v1143
        %v1145 = vpop.f32.mrb[0].mxu0
        %1146 = vmatprep.mubr.f32.mxu0 0.0
        %1147 = vmatmul.mubr.f32.gmra.mrb[0].mxu0 %v1071
        %v1148 = vpop.f32.mrb[0].mxu0
        %v1149 = vadd.f32 0.0, %v1148
        %v1150 = vpop.f32.mrb[0].mxu0
        %1151 = vdwg.mxu0
        %v1152 = vmul.f32 %v1144, 0.35355338
        %v1153 = vmul.f32 %v1149, 0.35355338
        %s1154 = scalar_lea.vmem [#allocation2], 32
        %v1155 = vld [vmem:[%s1154] sm:$0xff]
        %v1156 = vld [vmem:[%s1154 + $0x8] sm:$0xff]
        %v1157 = vsel %vm663, %v1152, -inf
        %1158 = vmax.xlane.f32.xlu0 %v1157
        %v1159 = vpop.xlane.xlu0 %1158
        %v1160 = vsel %vm663, %v1153, -inf
        %1161 = vmax.xlane.f32.xlu0 %v1160
        %v1162 = vpop.xlane.xlu0 %1161
        %v1163 = vmax.f32 %v1155, %v1159
        %v1164 = vmax.f32 %v1156, %v1162
        %v1165 = vsub.f32 %v1155, %v1163
        %v1166 = vsub.f32 %v1156, %v1164
        %v1167 = vmul.f32 %v1165, 1.442695
        %v1168 = vpow.pop %v1167
        %v1169 = vmul.f32 %v1166, 1.442695
        %v1170 = vpow.pop %v1169
        %1172 = vset.pattern.permute.xlu0 0
        %1173 = vperm.xlu0 %1172, %v1163
        %v1174 = vpop.permute.xlu0 %1173
        %1177 = vset.pattern.permute.xlu0 0
        %1178 = vperm.xlu0 %1177, %v1164
        %v1179 = vpop.permute.xlu0 %1178
        %v1181 = vsub.f32 %v1152, %v1174
        %v1182 = vsub.f32 %v1153, %v1179
        %v1183 = vmul.f32 %v1181, 1.442695
        %v1184 = vpow.pop %v1183
        %v1185 = vmul.f32 %v1182, 1.442695
        %v1186 = vpow.pop %v1185
        %s1187 = scalar_lea.vmem [#allocation3], 32
        %v1188 = vld [vmem:[%s1187] sm:$0xff]
        %v1189 = vld [vmem:[%s1187 + $0x8] sm:$0xff]
        %v1190 = vmul.f32 %v1168, %v1188
        %v1191 = vmul.f32 %v1170, %v1189
        %v1192 = vsel %vm663, %v1184, 0.0
        %1193 = vadd.xlane.f32.xlu0 %v1192
        %v1194 = vpop.xlane.xlu0 %1193
        %v1195 = vsel %vm663, %v1186, 0.0
        %1196 = vadd.xlane.f32.xlu0 %v1195
        %v1197 = vpop.xlane.xlu0 %1196
        %v1198 = vadd.f32 %v1190, %v1194
        %v1199 = vadd.f32 %v1191, %v1197
        %1200 = vst.msk [vmem:[%s1187] sm:$0xff] %vm706, %v1198
        %1201 = vst.msk [vmem:[%s1187 + $0x8] sm:$0xff] %vm706, %v1199
        %s1202 = scalar_lea.vmem [#allocation4], 32
        %v1203 = vld [vmem:[%s1202] sm:$0xff]
        %v1204 = vld [vmem:[%s1202 + $0x8] sm:$0xff]
        %1206 = vset.pattern.permute.xlu0 0
        %1207 = vperm.xlu0 %1206, %v1168
        %v1208 = vpop.permute.xlu0 %1207
        %1211 = vset.pattern.permute.xlu0 0
        %1212 = vperm.xlu0 %1211, %v1170
        %v1213 = vpop.permute.xlu0 %1212
        %v1215 = vmul.f32 %v1208, %v1203
        %v1216 = vmul.f32 %v1213, %v1204
        %1217 = vrot.lane.b32.xlu0 %v569, 112
        %v1218 = vpop.permute.xlu0 %1217
        %1219 = vrot.lane.b32.xlu0 %v570, 112
        %v1220 = vpop.permute.xlu0 %1219
        %v1224 = vsel %vm663, %v1184, 0
        %v1227 = vsel %vm663, %v1186, 0
        %1229 = vmatprep.subr.mxu0 0.0
        %1230 = vmatpush1.msra.mxu0 %v1218
        %1231 = vmatprep.subr.mxu0 0.0
        %1232 = vmatpush1.msra.mxu0 %v1220
        %1233 = vmatprep.subr.mxu0 0.0
        %1234 = vmatpush1.msra.mxu0 0.0
        %1235 = vmatprep.subr.mxu0 0.0
        %1236 = vmatpush1.msra.mxu0 0.0
        %1237 = vmatprep.subr.mxu0 0.0
        %1238 = vmatpush1.msra.mxu0 0.0
        %1239 = vmatprep.subr.mxu0 0.0
        %1240 = vmatpush1.msra.mxu0 0.0
        %1241 = vmatprep.subr.mxu0 0.0
        %1242 = vmatpush1.msra.mxu0 0.0
        %1243 = vmatprep.subr.mxu0 0.0
        %1244 = vmatpush1.msra.mxu0 0.0
        %1245 = vmatprep.subr.mxu0 0.0
        %1246 = vmatpush1.msra.mxu0 0.0
        %1247 = vmatprep.subr.mxu0 0.0
        %1248 = vmatpush1.msra.mxu0 0.0
        %1249 = vmatprep.subr.mxu0 0.0
        %1250 = vmatpush1.msra.mxu0 0.0
        %1251 = vmatprep.subr.mxu0 0.0
        %1252 = vmatpush1.msra.mxu0 0.0
        %1253 = vmatprep.subr.mxu0 0.0
        %1254 = vmatpush1.msra.mxu0 0.0
        %1255 = vmatprep.subr.mxu0 0.0
        %1256 = vmatpush1.msra.mxu0 0.0
        %1257 = vmatprep.subr.mxu0 0.0
        %1258 = vmatpush1.msra.mxu0 0.0
        %1259 = vmatprep.subr.mxu0 0.0
        %1260 = vmatpush1.msra.mxu0 0.0
        %1261 = vmatprep.subr.mxu0 0.0
        %1262 = vmatpush1.msra.mxu0 0.0
        %1263 = vmatprep.subr.mxu0 0.0
        %1264 = vmatpush1.msra.mxu0 0.0
        %1265 = vmatprep.subr.mxu0 0.0
        %1266 = vmatpush1.msra.mxu0 0.0
        %1267 = vmatprep.subr.mxu0 0.0
        %1268 = vmatpush1.msra.mxu0 0.0
        %1269 = vmatprep.subr.mxu0 0.0
        %1270 = vmatpush1.msra.mxu0 0.0
        %1271 = vmatprep.subr.mxu0 0.0
        %1272 = vmatpush1.msra.mxu0 0.0
        %1273 = vmatprep.subr.mxu0 0.0
        %1274 = vmatpush1.msra.mxu0 0.0
        %1275 = vmatprep.subr.mxu0 0.0
        %1276 = vmatpush1.msra.mxu0 0.0
        %1277 = vmatprep.subr.mxu0 0.0
        %1278 = vmatpush1.msra.mxu0 0.0
        %1279 = vmatprep.subr.mxu0 0.0
        %1280 = vmatpush1.msra.mxu0 0.0
        %1281 = vmatprep.subr.mxu0 0.0
        %1282 = vmatpush1.msra.mxu0 0.0
        %1283 = vmatprep.subr.mxu0 0.0
        %1284 = vmatpush1.msra.mxu0 0.0
        %1285 = vmatprep.subr.mxu0 0.0
        %1286 = vmatpush1.msra.mxu0 0.0
        %1287 = vmatprep.subr.mxu0 0.0
        %1288 = vmatpush1.msra.mxu0 0.0
        %1289 = vmatprep.subr.mxu0 0.0
        %1290 = vmatpush1.msra.mxu0 0.0
        %1291 = vmatprep.subr.mxu0 0.0
        %1292 = vmatpush1.msra.mxu0 0.0
        %1293 = vmatprep.mubr.f32.mxu0 0.0
        %1294 = vmatmul.mubr.f32.gmra.mrb[0].mxu0 %v1224
        %v1295 = vpop.f32.mrb[0].mxu0
        %v1296 = vadd.f32 0.0, %v1295
        %v1297 = vpop.f32.mrb[0].mxu0
        %1298 = vmatprep.mubr.f32.mxu0 0.0
        %1299 = vmatmul.mubr.f32.gmra.mrb[0].mxu0 %v1227
        %v1300 = vpop.f32.mrb[0].mxu0
        %v1301 = vadd.f32 0.0, %v1300
        %v1302 = vpop.f32.mrb[0].mxu0
        %1303 = vdwg.mxu0
        %v1304 = vadd.f32 %v1215, %v1296
        %v1305 = vadd.f32 %v1216, %v1301
        %1306 = vst.msk [vmem:[%s1202] sm:$0xff] %vm571, %v1304
        %1307 = vst.msk [vmem:[%s1202 + $0x8] sm:$0xff] %vm571, %v1305
        %1308 = vst.msk [vmem:[%s1154] sm:$0xff] %vm706, %v1163
        %1309 = vst.msk [vmem:[%s1154 + $0x8] sm:$0xff] %vm706, %v1164
        %1310 = vrot.lane.b32.xlu0 %v565, 104
        %v1311 = vpop.permute.xlu0 %1310
        %1312 = vrot.lane.b32.xlu0 %v566, 104
        %v1313 = vpop.permute.xlu0 %1312
        %1314 = vrot.lane.b32.xlu0 %v567, 104
        %v1315 = vpop.permute.xlu0 %1314
        %1316 = vrot.lane.b32.xlu0 %v568, 104
        %v1317 = vpop.permute.xlu0 %1316
        %v1318 = vsel %vm571, %v1311, 0
        %v1320 = vsel %vm571, %v1313, 0
        %v1322 = vsel %vm571, %v1315, 0
        %v1324 = vsel %vm571, %v1317, 0
        %1326 = vmatprep.subr.mxu0 0.0
        %1327 = vmatpush1.xpose.msra.mxu0 %v1322
        %1328 = vmatprep.subr.mxu0 0.0
        %1329 = vmatpush1.xpose.msra.mxu0 %v1324
        %1330 = vmatprep.subr.mxu0 0.0
        %1331 = vmatpush1.xpose.msra.mxu0 0.0
        %1332 = vmatprep.subr.mxu0 0.0
        %1333 = vmatpush1.xpose.msra.mxu0 0.0
        %1334 = vmatprep.subr.mxu0 0.0
        %1335 = vmatpush1.xpose.msra.mxu0 0.0
        %1336 = vmatprep.subr.mxu0 0.0
        %1337 = vmatpush1.xpose.msra.mxu0 0.0
        %1338 = vmatprep.subr.mxu0 0.0
        %1339 = vmatpush1.xpose.msra.mxu0 0.0
        %1340 = vmatprep.subr.mxu0 0.0
        %1341 = vmatpush1.xpose.msra.mxu0 0.0
        %1342 = vmatprep.subr.mxu0 0.0
        %1343 = vmatpush1.xpose.msra.mxu0 0.0
        %1344 = vmatprep.subr.mxu0 0.0
        %1345 = vmatpush1.xpose.msra.mxu0 0.0
        %1346 = vmatprep.subr.mxu0 0.0
        %1347 = vmatpush1.xpose.msra.mxu0 0.0
        %1348 = vmatprep.subr.mxu0 0.0
        %1349 = vmatpush1.xpose.msra.mxu0 0.0
        %1350 = vmatprep.subr.mxu0 0.0
        %1351 = vmatpush1.xpose.msra.mxu0 0.0
        %1352 = vmatprep.subr.mxu0 0.0
        %1353 = vmatpush1.xpose.msra.mxu0 0.0
        %1354 = vmatprep.subr.mxu0 0.0
        %1355 = vmatpush1.xpose.msra.mxu0 0.0
        %1356 = vmatprep.subr.mxu0 0.0
        %1357 = vmatpush1.xpose.msra.mxu0 0.0
        %1358 = vmatprep.subr.mxu0 0.0
        %1359 = vmatpush1.xpose.msra.mxu0 0.0
        %1360 = vmatprep.subr.mxu0 0.0
        %1361 = vmatpush1.xpose.msra.mxu0 0.0
        %1362 = vmatprep.subr.mxu0 0.0
        %1363 = vmatpush1.xpose.msra.mxu0 0.0
        %1364 = vmatprep.subr.mxu0 0.0
        %1365 = vmatpush1.xpose.msra.mxu0 0.0
        %1366 = vmatprep.subr.mxu0 0.0
        %1367 = vmatpush1.xpose.msra.mxu0 0.0
        %1368 = vmatprep.subr.mxu0 0.0
        %1369 = vmatpush1.xpose.msra.mxu0 0.0
        %1370 = vmatprep.subr.mxu0 0.0
        %1371 = vmatpush1.xpose.msra.mxu0 0.0
        %1372 = vmatprep.subr.mxu0 0.0
        %1373 = vmatpush1.xpose.msra.mxu0 0.0
        %1374 = vmatprep.subr.mxu0 0.0
        %1375 = vmatpush1.xpose.msra.mxu0 0.0
        %1376 = vmatprep.subr.mxu0 0.0
        %1377 = vmatpush1.xpose.msra.mxu0 0.0
        %1378 = vmatprep.subr.mxu0 0.0
        %1379 = vmatpush1.xpose.msra.mxu0 0.0
        %1380 = vmatprep.subr.mxu0 0.0
        %1381 = vmatpush1.xpose.msra.mxu0 0.0
        %1382 = vmatprep.subr.mxu0 0.0
        %1383 = vmatpush1.xpose.msra.mxu0 0.0
        %1384 = vmatprep.subr.mxu0 0.0
        %1385 = vmatpush1.xpose.msra.mxu0 0.0
        %1386 = vmatprep.subr.mxu0 0.0
        %1387 = vmatpush1.xpose.msra.mxu0 0.0
        %1388 = vmatprep.subr.mxu0 0.0
        %1389 = vmatpush1.xpose.msra.mxu0 0.0
        %1390 = vmatprep.mubr.f32.mxu0 0.0
        %1391 = vmatmul.mubr.f32.gmra.mrb[0].mxu0 %v1318
        %v1392 = vpop.f32.mrb[0].mxu0
        %v1393 = vadd.f32 0.0, %v1392
        %v1394 = vpop.f32.mrb[0].mxu0
        %1395 = vmatprep.mubr.f32.mxu0 0.0
        %1396 = vmatmul.mubr.f32.gmra.mrb[0].mxu0 %v1320
        %v1397 = vpop.f32.mrb[0].mxu0
        %v1398 = vadd.f32 0.0, %v1397
        %v1399 = vpop.f32.mrb[0].mxu0
        %1400 = vdwg.mxu0
        %v1401 = vmul.f32 %v1393, 0.35355338
        %v1402 = vmul.f32 %v1398, 0.35355338
        %s1403 = scalar_lea.vmem [#allocation2], 48
        %v1404 = vld [vmem:[%s1403] sm:$0xff]
        %v1405 = vld [vmem:[%s1403 + $0x8] sm:$0xff]
        %v1406 = vsel %vm663, %v1401, -inf
        %1407 = vmax.xlane.f32.xlu0 %v1406
        %v1408 = vpop.xlane.xlu0 %1407
        %v1409 = vsel %vm663, %v1402, -inf
        %1410 = vmax.xlane.f32.xlu0 %v1409
        %v1411 = vpop.xlane.xlu0 %1410
        %v1412 = vmax.f32 %v1404, %v1408
        %v1413 = vmax.f32 %v1405, %v1411
        %v1414 = vsub.f32 %v1404, %v1412
        %v1415 = vsub.f32 %v1405, %v1413
        %v1416 = vmul.f32 %v1414, 1.442695
        %v1417 = vpow.pop %v1416
        %v1418 = vmul.f32 %v1415, 1.442695
        %v1419 = vpow.pop %v1418
        %1421 = vset.pattern.permute.xlu0 0
        %1422 = vperm.xlu0 %1421, %v1412
        %v1423 = vpop.permute.xlu0 %1422
        %1426 = vset.pattern.permute.xlu0 0
        %1427 = vperm.xlu0 %1426, %v1413
        %v1428 = vpop.permute.xlu0 %1427
        %v1430 = vsub.f32 %v1401, %v1423
        %v1431 = vsub.f32 %v1402, %v1428
        %v1432 = vmul.f32 %v1430, 1.442695
        %v1433 = vpow.pop %v1432
        %v1434 = vmul.f32 %v1431, 1.442695
        %v1435 = vpow.pop %v1434
        %s1436 = scalar_lea.vmem [#allocation3], 48
        %v1437 = vld [vmem:[%s1436] sm:$0xff]
        %v1438 = vld [vmem:[%s1436 + $0x8] sm:$0xff]
        %v1439 = vmul.f32 %v1417, %v1437
        %v1440 = vmul.f32 %v1419, %v1438
        %v1441 = vsel %vm663, %v1433, 0.0
        %1442 = vadd.xlane.f32.xlu0 %v1441
        %v1443 = vpop.xlane.xlu0 %1442
        %v1444 = vsel %vm663, %v1435, 0.0
        %1445 = vadd.xlane.f32.xlu0 %v1444
        %v1446 = vpop.xlane.xlu0 %1445
        %v1447 = vadd.f32 %v1439, %v1443
        %v1448 = vadd.f32 %v1440, %v1446
        %1449 = vst.msk [vmem:[%s1436] sm:$0xff] %vm706, %v1447
        %1450 = vst.msk [vmem:[%s1436 + $0x8] sm:$0xff] %vm706, %v1448
        %s1451 = scalar_lea.vmem [#allocation4], 48
        %v1452 = vld [vmem:[%s1451] sm:$0xff]
        %v1453 = vld [vmem:[%s1451 + $0x8] sm:$0xff]
        %1455 = vset.pattern.permute.xlu0 0
        %1456 = vperm.xlu0 %1455, %v1417
        %v1457 = vpop.permute.xlu0 %1456
        %1460 = vset.pattern.permute.xlu0 0
        %1461 = vperm.xlu0 %1460, %v1419
        %v1462 = vpop.permute.xlu0 %1461
        %v1464 = vmul.f32 %v1457, %v1452
        %v1465 = vmul.f32 %v1462, %v1453
        %1466 = vrot.lane.b32.xlu0 %v569, 104
        %v1467 = vpop.permute.xlu0 %1466
        %1468 = vrot.lane.b32.xlu0 %v570, 104
        %v1469 = vpop.permute.xlu0 %1468
        %v1473 = vsel %vm663, %v1433, 0
        %v1476 = vsel %vm663, %v1435, 0
        %1478 = vmatprep.subr.mxu0 0.0
        %1479 = vmatpush1.msra.mxu0 %v1467
        %1480 = vmatprep.subr.mxu0 0.0
        %1481 = vmatpush1.msra.mxu0 %v1469
        %1482 = vmatprep.subr.mxu0 0.0
        %1483 = vmatpush1.msra.mxu0 0.0
        %1484 = vmatprep.subr.mxu0 0.0
        %1485 = vmatpush1.msra.mxu0 0.0
        %1486 = vmatprep.subr.mxu0 0.0
        %1487 = vmatpush1.msra.mxu0 0.0
        %1488 = vmatprep.subr.mxu0 0.0
        %1489 = vmatpush1.msra.mxu0 0.0
        %1490 = vmatprep.subr.mxu0 0.0
        %1491 = vmatpush1.msra.mxu0 0.0
        %1492 = vmatprep.subr.mxu0 0.0
        %1493 = vmatpush1.msra.mxu0 0.0
        %1494 = vmatprep.subr.mxu0 0.0
        %1495 = vmatpush1.msra.mxu0 0.0
        %1496 = vmatprep.subr.mxu0 0.0
        %1497 = vmatpush1.msra.mxu0 0.0
        %1498 = vmatprep.subr.mxu0 0.0
        %1499 = vmatpush1.msra.mxu0 0.0
        %1500 = vmatprep.subr.mxu0 0.0
        %1501 = vmatpush1.msra.mxu0 0.0
        %1502 = vmatprep.subr.mxu0 0.0
        %1503 = vmatpush1.msra.mxu0 0.0
        %1504 = vmatprep.subr.mxu0 0.0
        %1505 = vmatpush1.msra.mxu0 0.0
        %1506 = vmatprep.subr.mxu0 0.0
        %1507 = vmatpush1.msra.mxu0 0.0
        %1508 = vmatprep.subr.mxu0 0.0
        %1509 = vmatpush1.msra.mxu0 0.0
        %1510 = vmatprep.subr.mxu0 0.0
        %1511 = vmatpush1.msra.mxu0 0.0
        %1512 = vmatprep.subr.mxu0 0.0
        %1513 = vmatpush1.msra.mxu0 0.0
        %1514 = vmatprep.subr.mxu0 0.0
        %1515 = vmatpush1.msra.mxu0 0.0
        %1516 = vmatprep.subr.mxu0 0.0
        %1517 = vmatpush1.msra.mxu0 0.0
        %1518 = vmatprep.subr.mxu0 0.0
        %1519 = vmatpush1.msra.mxu0 0.0
        %1520 = vmatprep.subr.mxu0 0.0
        %1521 = vmatpush1.msra.mxu0 0.0
        %1522 = vmatprep.subr.mxu0 0.0
        %1523 = vmatpush1.msra.mxu0 0.0
        %1524 = vmatprep.subr.mxu0 0.0
        %1525 = vmatpush1.msra.mxu0 0.0
        %1526 = vmatprep.subr.mxu0 0.0
        %1527 = vmatpush1.msra.mxu0 0.0
        %1528 = vmatprep.subr.mxu0 0.0
        %1529 = vmatpush1.msra.mxu0 0.0
        %1530 = vmatprep.subr.mxu0 0.0
        %1531 = vmatpush1.msra.mxu0 0.0
        %1532 = vmatprep.subr.mxu0 0.0
        %1533 = vmatpush1.msra.mxu0 0.0
        %1534 = vmatprep.subr.mxu0 0.0
        %1535 = vmatpush1.msra.mxu0 0.0
        %1536 = vmatprep.subr.mxu0 0.0
        %1537 = vmatpush1.msra.mxu0 0.0
        %1538 = vmatprep.subr.mxu0 0.0
        %1539 = vmatpush1.msra.mxu0 0.0
        %1540 = vmatprep.subr.mxu0 0.0
        %1541 = vmatpush1.msra.mxu0 0.0
        %1542 = vmatprep.mubr.f32.mxu0 0.0
        %1543 = vmatmul.mubr.f32.gmra.mrb[0].mxu0 %v1473
        %v1544 = vpop.f32.mrb[0].mxu0
        %v1545 = vadd.f32 0.0, %v1544
        %v1546 = vpop.f32.mrb[0].mxu0
        %1547 = vmatprep.mubr.f32.mxu0 0.0
        %1548 = vmatmul.mubr.f32.gmra.mrb[0].mxu0 %v1476
        %v1549 = vpop.f32.mrb[0].mxu0
        %v1550 = vadd.f32 0.0, %v1549
        %v1551 = vpop.f32.mrb[0].mxu0
        %1552 = vdwg.mxu0
        %v1553 = vadd.f32 %v1464, %v1545
        %v1554 = vadd.f32 %v1465, %v1550
        %1555 = vst.msk [vmem:[%s1451] sm:$0xff] %vm571, %v1553
        %1556 = vst.msk [vmem:[%s1451 + $0x8] sm:$0xff] %vm571, %v1554
        %1557 = vst.msk [vmem:[%s1403] sm:$0xff] %vm706, %v1412
        %1558 = vst.msk [vmem:[%s1403 + $0x8] sm:$0xff] %vm706, %v1413
        // Predicated region
        $region89: #{transformer_forward_pallas.15} parent=51 // pred_check
          %p1559 = pneg %p535
        $region90: #{transformer_forward_pallas.15} parent=51 // pred_check_branch
          %1561 = sbr.rel (%p1559) target = $region92
        $region91: #{transformer_forward_pallas.15} parent=51 // pred_region
          %v1562 = vld [vmem:[#allocation3] sm:$0xff]
          %v1563 = vld [vmem:[#allocation3 + $0x8] sm:$0xff]
          %v1564 = vrcp.pop %v1562
          %v1565 = vrcp.pop %v1563
          %v1566 = vld [vmem:[#allocation4] sm:$0xff]
          %v1567 = vld [vmem:[#allocation4 + $0x8] sm:$0xff]
          %1569 = vset.pattern.permute.xlu0 0
          %1570 = vperm.xlu0 %1569, %v1564
          %v1571 = vpop.permute.xlu0 %1570
          %1574 = vset.pattern.permute.xlu0 0
          %1575 = vperm.xlu0 %1574, %v1565
          %v1576 = vpop.permute.xlu0 %1575
          %v1578 = vmul.f32 %v1566, %v1571
          %v1579 = vmul.f32 %v1567, %v1576
          %v1580 = vld [vmem:[%s936] sm:$0xff]
          %v1581 = vld [vmem:[%s936 + $0x8] sm:$0xff]
          %v1582 = vrcp.pop %v1580
          %v1583 = vrcp.pop %v1581
          %v1584 = vld [vmem:[%s951] sm:$0xff]
          %v1585 = vld [vmem:[%s951 + $0x8] sm:$0xff]
          %1587 = vset.pattern.permute.xlu0 0
          %1588 = vperm.xlu0 %1587, %v1582
          %v1589 = vpop.permute.xlu0 %1588
          %1592 = vset.pattern.permute.xlu0 0
          %1593 = vperm.xlu0 %1592, %v1583
          %v1594 = vpop.permute.xlu0 %1593
          %v1596 = vmul.f32 %v1584, %v1589
          %v1597 = vmul.f32 %v1585, %v1594
          %v1598 = vld [vmem:[%s1187] sm:$0xff]
          %v1599 = vld [vmem:[%s1187 + $0x8] sm:$0xff]
          %v1600 = vrcp.pop %v1598
          %v1601 = vrcp.pop %v1599
          %v1602 = vld [vmem:[%s1202] sm:$0xff]
          %v1603 = vld [vmem:[%s1202 + $0x8] sm:$0xff]
          %1605 = vset.pattern.permute.xlu0 0
          %1606 = vperm.xlu0 %1605, %v1600
          %v1607 = vpop.permute.xlu0 %1606
          %1610 = vset.pattern.permute.xlu0 0
          %1611 = vperm.xlu0 %1610, %v1601
          %v1612 = vpop.permute.xlu0 %1611
          %v1614 = vmul.f32 %v1602, %v1607
          %v1615 = vmul.f32 %v1603, %v1612
          %v1616 = vld [vmem:[%s1436] sm:$0xff]
          %v1617 = vld [vmem:[%s1436 + $0x8] sm:$0xff]
          %v1618 = vrcp.pop %v1616
          %v1619 = vrcp.pop %v1617
          %v1620 = vld [vmem:[%s1451] sm:$0xff]
          %v1621 = vld [vmem:[%s1451 + $0x8] sm:$0xff]
          %1623 = vset.pattern.permute.xlu0 0
          %1624 = vperm.xlu0 %1623, %v1618
          %v1625 = vpop.permute.xlu0 %1624
          %1628 = vset.pattern.permute.xlu0 0
          %1629 = vperm.xlu0 %1628, %v1619
          %v1630 = vpop.permute.xlu0 %1629
          %v1632 = vmul.f32 %v1620, %v1625
          %v1633 = vmul.f32 %v1621, %v1630
          %1636 = vrot.lane.b32.xlu0 %v1596, 8
          %v1637 = vpop.permute.xlu0 %1636
          %1638 = vrot.lane.b32.xlu0 %v1597, 8
          %v1639 = vpop.permute.xlu0 %1638
          %1644 = vrot.lane.b32.xlu0 %v1614, 16
          %v1645 = vpop.permute.xlu0 %1644
          %1646 = vrot.lane.b32.xlu0 %v1615, 16
          %v1647 = vpop.permute.xlu0 %1646
          %1652 = vrot.lane.b32.xlu0 %v1632, 24
          %v1653 = vpop.permute.xlu0 %1652
          %1654 = vrot.lane.b32.xlu0 %v1633, 24
          %v1655 = vpop.permute.xlu0 %1654
          %v1658 = vsel %vm571, %v1578, %v1637
          %v1659 = vsel %vm571, %v1579, %v1639
          %v1660 = vsel %vm663, %v1658, %v1645
          %v1661 = vsel %vm663, %v1659, %v1647
          %vm1662 = vcmask 195584
          %v1663 = vsel %vm1662, %v1660, %v1653
          %v1664 = vsel %vm1662, %v1661, %v1655
          %v1665 = vld [vmem:[#allocation13] sm:$0xff]
          %v1666 = vld [vmem:[#allocation13 + $0x8] sm:$0xff]
          %v1667 = vld [vmem:[#allocation13 + $0x10] sm:$0xff]
          %v1668 = vld [vmem:[#allocation13 + $0x18] sm:$0xff]
          %v1669 = vld [vmem:[#allocation14] sm:$0x1]
          %v1671 = vlaneseq
          %v1672 = vshrl.u32 %v1671, 7
          %v1673 = vsub.s32 0, %v1672
          %v1674 = vrot.slane %v1669, %v1673
          %vm1676 = vcmask 261120
          %v1678 = vsel %vm1676, %v1663, 0
          %v1681 = vsel %vm1676, %v1664, 0
          %1683 = vmatprep.subr.mxu0 0.0
          %1684 = vmatpush1.msra.mxu0 %v1665
          %1685 = vmatprep.subr.mxu0 0.0
          %1686 = vmatpush1.msra.mxu0 %v1666
          %1687 = vmatprep.subr.mxu0 0.0
          %1688 = vmatpush1.msra.mxu0 %v1667
          %1689 = vmatprep.subr.mxu0 0.0
          %1690 = vmatpush1.msra.mxu0 %v1668
          %1691 = vmatprep.subr.mxu0 0.0
          %1692 = vmatpush1.msra.mxu0 0.0
          %1693 = vmatprep.subr.mxu0 0.0
          %1694 = vmatpush1.msra.mxu0 0.0
          %1695 = vmatprep.subr.mxu0 0.0
          %1696 = vmatpush1.msra.mxu0 0.0
          %1697 = vmatprep.subr.mxu0 0.0
          %1698 = vmatpush1.msra.mxu0 0.0
          %1699 = vmatprep.subr.mxu0 0.0
          %1700 = vmatpush1.msra.mxu0 0.0
          %1701 = vmatprep.subr.mxu0 0.0
          %1702 = vmatpush1.msra.mxu0 0.0
          %1703 = vmatprep.subr.mxu0 0.0
          %1704 = vmatpush1.msra.mxu0 0.0
          %1705 = vmatprep.subr.mxu0 0.0
          %1706 = vmatpush1.msra.mxu0 0.0
          %1707 = vmatprep.subr.mxu0 0.0
          %1708 = vmatpush1.msra.mxu0 0.0
          %1709 = vmatprep.subr.mxu0 0.0
          %1710 = vmatpush1.msra.mxu0 0.0
          %1711 = vmatprep.subr.mxu0 0.0
          %1712 = vmatpush1.msra.mxu0 0.0
          %1713 = vmatprep.subr.mxu0 0.0
          %1714 = vmatpush1.msra.mxu0 0.0
          %1715 = vmatprep.subr.mxu0 0.0
          %1716 = vmatpush1.msra.mxu0 0.0
          %1717 = vmatprep.subr.mxu0 0.0
          %1718 = vmatpush1.msra.mxu0 0.0
          %1719 = vmatprep.subr.mxu0 0.0
          %1720 = vmatpush1.msra.mxu0 0.0
          %1721 = vmatprep.subr.mxu0 0.0
          %1722 = vmatpush1.msra.mxu0 0.0
          %1723 = vmatprep.subr.mxu0 0.0
          %1724 = vmatpush1.msra.mxu0 0.0
          %1725 = vmatprep.subr.mxu0 0.0
          %1726 = vmatpush1.msra.mxu0 0.0
          %1727 = vmatprep.subr.mxu0 0.0
          %1728 = vmatpush1.msra.mxu0 0.0
          %1729 = vmatprep.subr.mxu0 0.0
          %1730 = vmatpush1.msra.mxu0 0.0
          %1731 = vmatprep.subr.mxu0 0.0
          %1732 = vmatpush1.msra.mxu0 0.0
          %1733 = vmatprep.subr.mxu0 0.0
          %1734 = vmatpush1.msra.mxu0 0.0
          %1735 = vmatprep.subr.mxu0 0.0
          %1736 = vmatpush1.msra.mxu0 0.0
          %1737 = vmatprep.subr.mxu0 0.0
          %1738 = vmatpush1.msra.mxu0 0.0
          %1739 = vmatprep.subr.mxu0 0.0
          %1740 = vmatpush1.msra.mxu0 0.0
          %1741 = vmatprep.subr.mxu0 0.0
          %1742 = vmatpush1.msra.mxu0 0.0
          %1743 = vmatprep.subr.mxu0 0.0
          %1744 = vmatpush1.msra.mxu0 0.0
          %1745 = vmatprep.subr.mxu0 0.0
          %1746 = vmatpush1.msra.mxu0 0.0
          %1747 = vmatprep.mubr.f32.mxu0 0.0
          %1748 = vmatmul.mubr.f32.gmra.mrb[0].mxu0 %v1678
          %v1749 = vpop.f32.mrb[0].mxu0
          %v1750 = vadd.f32 %v1674, %v1749
          %v1751 = vpop.f32.mrb[0].mxu0
          %1752 = vmatprep.mubr.f32.mxu0 0.0
          %1753 = vmatmul.mubr.f32.gmra.mrb[0].mxu0 %v1681
          %v1754 = vpop.f32.mrb[0].mxu0
          %v1755 = vadd.f32 %v1674, %v1754
          %v1756 = vpop.f32.mrb[0].mxu0
          %1757 = vdwg.mxu0
          %v1758 = vld [vmem:[%s466] sm:$0xff]
          %v1759 = vld [vmem:[%s466 + $0x8] sm:$0xff]
          %v1760 = vadd.f32 %v1758, %v1750
          %v1761 = vadd.f32 %v1759, %v1755
          %v1762 = vsel %vm1676, %v1760, 0.0
          %1763 = vadd.xlane.f32.xlu0 %v1762
          %v1764 = vpop.xlane.xlu0 %1763
          %v1765 = vsel %vm1676, %v1761, 0.0
          %1766 = vadd.xlane.f32.xlu0 %v1765
          %v1767 = vpop.xlane.xlu0 %1766
          %v1768 = vrcp.pop 32.0
          %v1769 = vmul.f32 %v1764, %v1768
          %v1770 = vmul.f32 %v1767, %v1768
          %v1771 = vsub.f32 %v1760, %v1769
          %v1772 = vsub.f32 %v1761, %v1770
          %v1773 = vmul.f32 %v1771, %v1771
          %v1774 = vmul.f32 %v1772, %v1772
          %v1775 = vsel %vm1676, %v1773, 0.0
          %1776 = vadd.xlane.f32.xlu0 %v1775
          %v1777 = vpop.xlane.xlu0 %1776
          %v1778 = vsel %vm1676, %v1774, 0.0
          %1779 = vadd.xlane.f32.xlu0 %v1778
          %v1780 = vpop.xlane.xlu0 %1779
          %v1781 = vmul.f32 %v1777, %v1768
          %v1782 = vmul.f32 %v1780, %v1768
          %v1783 = vadd.f32 %v1781, 1e-12
          %v1784 = vadd.f32 %v1782, 1e-12
          %v1785 = vrsqrt.pop %v1783
          %v1786 = vrsqrt.pop %v1784
          %v1787 = vmul.f32 %v1771, %v1785
          %v1788 = vmul.f32 %v1772, %v1786
          %v1789 = vld [vmem:[#allocation16] sm:$0x1]
          %v1791 = vlaneseq
          %v1792 = vshrl.u32 %v1791, 7
          %v1793 = vsub.s32 0, %v1792
          %v1794 = vrot.slane %v1789, %v1793
          %v1796 = vmul.f32 %v1787, %v1794
          %v1797 = vmul.f32 %v1788, %v1794
          %v1798 = vld [vmem:[#allocation17] sm:$0x1]
          %v1800 = vlaneseq
          %v1801 = vshrl.u32 %v1800, 7
          %v1802 = vsub.s32 0, %v1801
          %v1803 = vrot.slane %v1798, %v1802
          %v1805 = vadd.f32 %v1796, %v1803
          %v1806 = vadd.f32 %v1797, %v1803
          %1807 = vst.msk [vmem:[%s529] sm:$0xff] %vm1676, %v1805
          %1808 = vst.msk [vmem:[%s529 + $0x8] sm:$0xff] %vm1676, %v1806
        $region92: #{transformer_forward_pallas.15} parent=51 // pred_fallthru
          _
        %s1809 = sand.u32 %s258, 1
        %s1810 = scalar_lea.sflag [#allocation7], %s1809
        %s1811 = sand.u32 %s258, 1
        %s1812 = smul.addr %s1811, 16
        %s1813 = scalar_lea.vmem [#allocation19], %s1812
        // Predicated region
        $region93: #{transformer_forward_pallas.15} parent=51 // pred_check
          %p1814 = pneg %p268
        $region94: #{transformer_forward_pallas.15} parent=51 // pred_check_branch
          %1816 = sbr.rel (%p1814) target = $region96
        $region95: #{transformer_forward_pallas.15} parent=51 // pred_region
          %s1817 = smul.u32 2, %s39
          %s1819 = ssub.s32 256, 256
          %1820 = vsyncadd %s1810, %s1819
          %s1821 = smul.addr %s38, 2
          %s1822 = sadd.s32 %s1817, %s1821
          %s1823 = smul.addr %s1822, 128
          %s1824 = scalar_lea.hbm %s8, %s1823
          %s1825 = sshll.u32 %s1813, 4
          %s1826 = int_to_ptr.vmem [resolvable:$true] %s1825
          %1831 = dma.vmem_to_hbm [thread:$0]  %s1826, 256, %s1824, %s1810, 128, 128, 8
        $region96: #{transformer_forward_pallas.15} parent=51 // pred_fallthru
          _
      $region52: #{transformer_forward_pallas.15} parent=5 // pred_fallthru
        _
      %p1832 = scmp.le.s32.totalorder 2, %s28
      // Predicated region
      $region97: #{transformer_forward_pallas.15} parent=5 // pred_check
        %p1833 = pneg %p1832
      $region98: #{transformer_forward_pallas.15} parent=5 // pred_check_branch
        %1835 = sbr.rel (%p1833) target = $region100
      $region99: #{transformer_forward_pallas.15} parent=5 // pred_region
        %s1836 = ssub.s32 %s28, 2
        // Predicated region
        $region101: #{transformer_forward_pallas.15} parent=99 // pred_check
          %p1837 = pneg %p274
        $region102: #{transformer_forward_pallas.15} parent=99 // pred_check_branch
          %1839 = sbr.rel (%p1837) target = $region104
        $region103: #{transformer_forward_pallas.15} parent=99 // pred_region
          %s1840 = sand.u32 %s259, 1
          %s1841 = scalar_lea.sflag [#allocation7], %s1840
          %s1842 = sand.u32 %s259, 1
          %s1843 = smul.addr %s1842, 16
          %s1844 = scalar_lea.vmem [#allocation19], %s1843
          %1845 = dma.done %s1841, 256
        $region104: #{transformer_forward_pallas.15} parent=99 // pred_fallthru
          _
      $region100: #{transformer_forward_pallas.15} parent=5 // pred_fallthru
        _
    $region6: #{transformer_forward_pallas.15} parent=1 // loop_footer
      %s32 = sadd.s32 1, %s28
    $region7: #{transformer_forward_pallas.15} parent=1 // loop_footer_branch
      %27 = sbr.rel target = $region3
    $region8: #{transformer_forward_pallas.15} parent=1 // loop_exit
      _
    %1846 = vsyncpa [#allocation6], 1
    %s1847 = scalar_lea.sflag [#allocation6], 1
    %1848 = vsyncpa %s1847, 1
    %1849 = vsyncpa [#allocation9], 1
    %s1850 = scalar_lea.sflag [#allocation9], 1
    %1851 = vsyncpa %s1850, 1
    %1852 = vsyncpa [#allocation12], 1
    %s1853 = scalar_lea.sflag [#allocation12], 1
    %1854 = vsyncpa %s1853, 1
    %1855 = vsyncpa [#allocation15], 1
    %1856 = vsyncpa [#allocation18], 1
    %1857 = vsyncpa [#allocation7], 1
    %s1858 = scalar_lea.sflag [#allocation7], 1
    %1859 = vsyncpa %s1858, 1

// kernel: transformer_forward_pallas.23
$region0: #{transformer_forward_pallas.23}
  #allocation0 [shape = 'u32[]', space=smem, size = 0x4, offset = 0x4, fixed_abs, tag = 'smem constant byte address 0x4 - core index']
  #allocation1 [shape = 'u32[144,128]{1,0:T(1,128)}', space=vmem, size = 0x12000, scoped, tag = 'internal scratch']
  %s0 = inlined_call_operand.hbm [shape: f32[2,32], index: 0, kind: input, shape index: {}]
  %s1 = inlined_call_operand.hbm [shape: f32[32,16], index: 1, kind: input, shape index: {}]
  %s2 = inlined_call_operand.hbm [shape: f32[1,16], index: 2, kind: input, shape index: {}]
  %s3 = inlined_call_operand.hbm [shape: f32[16,8], index: 3, kind: input, shape index: {}]
  %s4 = inlined_call_operand.hbm [shape: f32[1,8], index: 4, kind: input, shape index: {}]
  %s5 = inlined_call_operand.hbm [shape: f32[8,4], index: 5, kind: input, shape index: {}]
  %s6 = inlined_call_operand.hbm [shape: f32[1,4], index: 6, kind: input, shape index: {}]
  %s7 = inlined_call_operand.hbm [shape: f32[2,4], index: 7, kind: output, shape index: {}]
  %s8 = sld [smem:[#allocation0]]
  $region66: #{transformer_forward_pallas.23} parent=0
    _
  %s10 = ssub.s32 1, %s8
  %s11 = scalar_select 0, %s10, %s8
  $region1: #{transformer_forward_pallas.23} parent=0
    #allocation2 [shape = 'u8[1024]{0}', space=vmem, size = 0x400, scoped, tag = 'input window, operand 0, single buffered']
    #allocation3 [shape = 's32[1]{0}', space=sflag, size = 0x4, scoped, tag = 'scoped memory for transformer_forward_pallas.23']
    #allocation4 [shape = 's32[1]{0}', space=sflag, size = 0x4, scoped, tag = 'scoped memory for transformer_forward_pallas.23']
    #allocation5 [shape = 'u8[16384]{0}', space=vmem, size = 0x4000, scoped, tag = 'input window, operand 1, single buffered']
    #allocation6 [shape = 's32[1]{0}', space=sflag, size = 0x4, scoped, tag = 'scoped memory for transformer_forward_pallas.23']
    #allocation7 [shape = 'u8[512]{0}', space=vmem, size = 0x400, scoped, tag = 'input window, operand 2, single buffered']
    #allocation8 [shape = 'u8[8192]{0}', space=vmem, size = 0x2000, scoped, tag = 'input window, operand 3, single buffered']
    #allocation9 [shape = 's32[1]{0}', space=sflag, size = 0x4, scoped, tag = 'scoped memory for transformer_forward_pallas.23']
    #allocation10 [shape = 'u8[512]{0}', space=vmem, size = 0x400, scoped, tag = 'input window, operand 4, single buffered']
    #allocation11 [shape = 'u8[4096]{0}', space=vmem, size = 0x1000, scoped, tag = 'input window, operand 5, single buffered']
    #allocation12 [shape = 's32[1]{0}', space=sflag, size = 0x4, scoped, tag = 'scoped memory for transformer_forward_pallas.23']
    #allocation13 [shape = 'u8[512]{0}', space=vmem, size = 0x400, scoped, tag = 'input window, operand 6, single buffered']
    #allocation14 [shape = 'u8[1024]{0}', space=vmem, size = 0x400, scoped, tag = 'output window, operand 0, single buffered']
    %12 = vsyncpa [#allocation3], 0
    %13 = vsyncpa [#allocation6], 0
    %14 = vsyncpa [#allocation9], 0
    %15 = vsyncpa [#allocation12], 0
    %16 = vsyncpa [#allocation4], 0
    // Predicated region
    $region2: #{transformer_forward_pallas.23} parent=1 // pred_check
      _
    $region3: #{transformer_forward_pallas.23} parent=1 // pred_check_branch
      %18 = sbr.rel (0) target = $region5
    $region4: #{transformer_forward_pallas.23} parent=1 // pred_region
      %s20 = ssub.s32 32, 32
      %21 = vsyncadd [#allocation3], %s20
      %s23 = sshll.u32 [#allocation2], 4
      %s24 = int_to_ptr.vmem [resolvable:$true] %s23
      %26 = dma.hbm_to_vmem [thread:$0]  %s0, 32, %s24, [#allocation3]
    $region5: #{transformer_forward_pallas.23} parent=1 // pred_fallthru
      _
    // Predicated region
    $region6: #{transformer_forward_pallas.23} parent=1 // pred_check
      _
    $region7: #{transformer_forward_pallas.23} parent=1 // pred_check_branch
      %28 = sbr.rel (0) target = $region9
    $region8: #{transformer_forward_pallas.23} parent=1 // pred_region
      %s30 = ssub.s32 512, 512
      %31 = vsyncadd [#allocation6], %s30
      %s32 = sshll.u32 [#allocation5], 4
      %s33 = int_to_ptr.vmem [resolvable:$true] %s32
      %38 = dma.hbm_to_vmem [thread:$0]  %s1, 512, %s33, [#allocation6], 128, 128, 8
    $region9: #{transformer_forward_pallas.23} parent=1 // pred_fallthru
      _
    // Predicated region
    $region10: #{transformer_forward_pallas.23} parent=1 // pred_check
      _
    $region11: #{transformer_forward_pallas.23} parent=1 // pred_check_branch
      %40 = sbr.rel (0) target = $region13
    $region12: #{transformer_forward_pallas.23} parent=1 // pred_region
      %s42 = ssub.s32 16, 16
      %43 = vsyncadd [#allocation6], %s42
      %s45 = sshll.u32 [#allocation7], 4
      %s46 = int_to_ptr.vmem [resolvable:$true] %s45
      %48 = dma.hbm_to_vmem [thread:$0]  %s2, 16, %s46, [#allocation6]
    $region13: #{transformer_forward_pallas.23} parent=1 // pred_fallthru
      _
    // Predicated region
    $region14: #{transformer_forward_pallas.23} parent=1 // pred_check
      _
    $region15: #{transformer_forward_pallas.23} parent=1 // pred_check_branch
      %50 = sbr.rel (0) target = $region17
    $region16: #{transformer_forward_pallas.23} parent=1 // pred_region
      %s52 = ssub.s32 256, 256
      %53 = vsyncadd [#allocation9], %s52
      %s54 = sshll.u32 [#allocation8], 4
      %s55 = int_to_ptr.vmem [resolvable:$true] %s54
      %60 = dma.hbm_to_vmem [thread:$0]  %s3, 256, %s55, [#allocation9], 128, 128, 8
    $region17: #{transformer_forward_pallas.23} parent=1 // pred_fallthru
      _
    // Predicated region
    $region18: #{transformer_forward_pallas.23} parent=1 // pred_check
      _
    $region19: #{transformer_forward_pallas.23} parent=1 // pred_check_branch
      %62 = sbr.rel (0) target = $region21
    $region20: #{transformer_forward_pallas.23} parent=1 // pred_region
      %s64 = ssub.s32 16, 16
      %65 = vsyncadd [#allocation9], %s64
      %s67 = sshll.u32 [#allocation10], 4
      %s68 = int_to_ptr.vmem [resolvable:$true] %s67
      %70 = dma.hbm_to_vmem [thread:$0]  %s4, 16, %s68, [#allocation9]
    $region21: #{transformer_forward_pallas.23} parent=1 // pred_fallthru
      _
    // Predicated region
    $region22: #{transformer_forward_pallas.23} parent=1 // pred_check
      _
    $region23: #{transformer_forward_pallas.23} parent=1 // pred_check_branch
      %72 = sbr.rel (0) target = $region25
    $region24: #{transformer_forward_pallas.23} parent=1 // pred_region
      %s74 = ssub.s32 128, 128
      %75 = vsyncadd [#allocation12], %s74
      %s77 = sshll.u32 [#allocation11], 4
      %s78 = int_to_ptr.vmem [resolvable:$true] %s77
      %80 = dma.hbm_to_vmem [thread:$0]  %s5, 128, %s78, [#allocation12]
    $region25: #{transformer_forward_pallas.23} parent=1 // pred_fallthru
      _
    // Predicated region
    $region26: #{transformer_forward_pallas.23} parent=1 // pred_check
      _
    $region27: #{transformer_forward_pallas.23} parent=1 // pred_check_branch
      %82 = sbr.rel (0) target = $region29
    $region28: #{transformer_forward_pallas.23} parent=1 // pred_region
      %s84 = ssub.s32 16, 16
      %85 = vsyncadd [#allocation12], %s84
      %s87 = sshll.u32 [#allocation13], 4
      %s88 = int_to_ptr.vmem [resolvable:$true] %s87
      %90 = dma.hbm_to_vmem [thread:$0]  %s6, 16, %s88, [#allocation12]
    $region29: #{transformer_forward_pallas.23} parent=1 // pred_fallthru
      _
    // Predicated region
    $region30: #{transformer_forward_pallas.23} parent=1 // pred_check
      _
    $region31: #{transformer_forward_pallas.23} parent=1 // pred_check_branch
      %92 = sbr.rel (0) target = $region33
    $region32: #{transformer_forward_pallas.23} parent=1 // pred_region
      %93 = dma.done [#allocation3], 32
    $region33: #{transformer_forward_pallas.23} parent=1 // pred_fallthru
      _
    // Predicated region
    $region34: #{transformer_forward_pallas.23} parent=1 // pred_check
      _
    $region35: #{transformer_forward_pallas.23} parent=1 // pred_check_branch
      %95 = sbr.rel (0) target = $region37
    $region36: #{transformer_forward_pallas.23} parent=1 // pred_region
      %96 = dma.done [#allocation6], 512
    $region37: #{transformer_forward_pallas.23} parent=1 // pred_fallthru
      _
    // Predicated region
    $region38: #{transformer_forward_pallas.23} parent=1 // pred_check
      _
    $region39: #{transformer_forward_pallas.23} parent=1 // pred_check_branch
      %98 = sbr.rel (0) target = $region41
    $region40: #{transformer_forward_pallas.23} parent=1 // pred_region
      %99 = dma.done [#allocation6], 16
    $region41: #{transformer_forward_pallas.23} parent=1 // pred_fallthru
      _
    // Predicated region
    $region42: #{transformer_forward_pallas.23} parent=1 // pred_check
      _
    $region43: #{transformer_forward_pallas.23} parent=1 // pred_check_branch
      %101 = sbr.rel (0) target = $region45
    $region44: #{transformer_forward_pallas.23} parent=1 // pred_region
      %102 = dma.done [#allocation9], 256
    $region45: #{transformer_forward_pallas.23} parent=1 // pred_fallthru
      _
    // Predicated region
    $region46: #{transformer_forward_pallas.23} parent=1 // pred_check
      _
    $region47: #{transformer_forward_pallas.23} parent=1 // pred_check_branch
      %104 = sbr.rel (0) target = $region49
    $region48: #{transformer_forward_pallas.23} parent=1 // pred_region
      %105 = dma.done [#allocation9], 16
    $region49: #{transformer_forward_pallas.23} parent=1 // pred_fallthru
      _
    // Predicated region
    $region50: #{transformer_forward_pallas.23} parent=1 // pred_check
      _
    $region51: #{transformer_forward_pallas.23} parent=1 // pred_check_branch
      %107 = sbr.rel (0) target = $region53
    $region52: #{transformer_forward_pallas.23} parent=1 // pred_region
      %108 = dma.done [#allocation12], 128
    $region53: #{transformer_forward_pallas.23} parent=1 // pred_fallthru
      _
    // Predicated region
    $region54: #{transformer_forward_pallas.23} parent=1 // pred_check
      _
    $region55: #{transformer_forward_pallas.23} parent=1 // pred_check_branch
      %110 = sbr.rel (0) target = $region57
    $region56: #{transformer_forward_pallas.23} parent=1 // pred_region
      %111 = dma.done [#allocation12], 16
    $region57: #{transformer_forward_pallas.23} parent=1 // pred_fallthru
      _
    %v112 = vld [vmem:[#allocation2] sm:$0x3]
    %v113 = vld [vmem:[#allocation5] sm:$0xff]
    %v114 = vld [vmem:[#allocation5 + $0x8] sm:$0xff]
    %v115 = vld [vmem:[#allocation5 + $0x10] sm:$0xff]
    %v116 = vld [vmem:[#allocation5 + $0x18] sm:$0xff]
    %v117 = vld [vmem:[#allocation7] sm:$0x1]
    %v119 = vlaneseq
    %v120 = vshrl.u32 %v119, 7
    %v121 = vsub.s32 0, %v120
    %v122 = vrot.slane %v117, %v121
    %vm124 = vcmask 261120
    %v126 = vsel %vm124, %v112, 0
    %128 = vmatprep.subr.mxu0 0.0
    %129 = vmatpush1.msra.mxu0 %v113
    %130 = vmatprep.subr.mxu0 0.0
    %131 = vmatpush1.msra.mxu0 %v114
    %132 = vmatprep.subr.mxu0 0.0
    %133 = vmatpush1.msra.mxu0 %v115
    %134 = vmatprep.subr.mxu0 0.0
    %135 = vmatpush1.msra.mxu0 %v116
    %136 = vmatprep.subr.mxu0 0.0
    %137 = vmatpush1.msra.mxu0 0.0
    %138 = vmatprep.subr.mxu0 0.0
    %139 = vmatpush1.msra.mxu0 0.0
    %140 = vmatprep.subr.mxu0 0.0
    %141 = vmatpush1.msra.mxu0 0.0
    %142 = vmatprep.subr.mxu0 0.0
    %143 = vmatpush1.msra.mxu0 0.0
    %144 = vmatprep.subr.mxu0 0.0
    %145 = vmatpush1.msra.mxu0 0.0
    %146 = vmatprep.subr.mxu0 0.0
    %147 = vmatpush1.msra.mxu0 0.0
    %148 = vmatprep.subr.mxu0 0.0
    %149 = vmatpush1.msra.mxu0 0.0
    %150 = vmatprep.subr.mxu0 0.0
    %151 = vmatpush1.msra.mxu0 0.0
    %152 = vmatprep.subr.mxu0 0.0
    %153 = vmatpush1.msra.mxu0 0.0
    %154 = vmatprep.subr.mxu0 0.0
    %155 = vmatpush1.msra.mxu0 0.0
    %156 = vmatprep.subr.mxu0 0.0
    %157 = vmatpush1.msra.mxu0 0.0
    %158 = vmatprep.subr.mxu0 0.0
    %159 = vmatpush1.msra.mxu0 0.0
    %160 = vmatprep.subr.mxu0 0.0
    %161 = vmatpush1.msra.mxu0 0.0
    %162 = vmatprep.subr.mxu0 0.0
    %163 = vmatpush1.msra.mxu0 0.0
    %164 = vmatprep.subr.mxu0 0.0
    %165 = vmatpush1.msra.mxu0 0.0
    %166 = vmatprep.subr.mxu0 0.0
    %167 = vmatpush1.msra.mxu0 0.0
    %168 = vmatprep.subr.mxu0 0.0
    %169 = vmatpush1.msra.mxu0 0.0
    %170 = vmatprep.subr.mxu0 0.0
    %171 = vmatpush1.msra.mxu0 0.0
    %172 = vmatprep.subr.mxu0 0.0
    %173 = vmatpush1.msra.mxu0 0.0
    %174 = vmatprep.subr.mxu0 0.0
    %175 = vmatpush1.msra.mxu0 0.0
    %176 = vmatprep.subr.mxu0 0.0
    %177 = vmatpush1.msra.mxu0 0.0
    %178 = vmatprep.subr.mxu0 0.0
    %179 = vmatpush1.msra.mxu0 0.0
    %180 = vmatprep.subr.mxu0 0.0
    %181 = vmatpush1.msra.mxu0 0.0
    %182 = vmatprep.subr.mxu0 0.0
    %183 = vmatpush1.msra.mxu0 0.0
    %184 = vmatprep.subr.mxu0 0.0
    %185 = vmatpush1.msra.mxu0 0.0
    %186 = vmatprep.subr.mxu0 0.0
    %187 = vmatpush1.msra.mxu0 0.0
    %188 = vmatprep.subr.mxu0 0.0
    %189 = vmatpush1.msra.mxu0 0.0
    %190 = vmatprep.subr.mxu0 0.0
    %191 = vmatpush1.msra.mxu0 0.0
    %192 = vmatprep.mubr.f32.mxu0 0.0
    %193 = vmatmul.mubr.f32.gmra.mrb[0].mxu0 %v126
    %v194 = vpop.f32.mrb[0].mxu0
    %v195 = vadd.f32 %v122, %v194
    %v196 = vpop.f32.mrb[0].mxu0
    %197 = vdwg.mxu0
    %v198 = vld [vmem:[#allocation8] sm:$0xff]
    %v199 = vld [vmem:[#allocation8 + $0x8] sm:$0xff]
    %v200 = vld [vmem:[#allocation10] sm:$0x1]
    %v202 = vlaneseq
    %v203 = vshrl.u32 %v202, 7
    %v204 = vsub.s32 0, %v203
    %v205 = vrot.slane %v200, %v204
    %vm207 = vcmask 130048
    %v209 = vsel %vm207, %v195, 0
    %211 = vmatprep.subr.mxu0 0.0
    %212 = vmatpush1.msra.mxu0 %v198
    %213 = vmatprep.subr.mxu0 0.0
    %214 = vmatpush1.msra.mxu0 %v199
    %215 = vmatprep.subr.mxu0 0.0
    %216 = vmatpush1.msra.mxu0 0.0
    %217 = vmatprep.subr.mxu0 0.0
    %218 = vmatpush1.msra.mxu0 0.0
    %219 = vmatprep.subr.mxu0 0.0
    %220 = vmatpush1.msra.mxu0 0.0
    %221 = vmatprep.subr.mxu0 0.0
    %222 = vmatpush1.msra.mxu0 0.0
    %223 = vmatprep.subr.mxu0 0.0
    %224 = vmatpush1.msra.mxu0 0.0
    %225 = vmatprep.subr.mxu0 0.0
    %226 = vmatpush1.msra.mxu0 0.0
    %227 = vmatprep.subr.mxu0 0.0
    %228 = vmatpush1.msra.mxu0 0.0
    %229 = vmatprep.subr.mxu0 0.0
    %230 = vmatpush1.msra.mxu0 0.0
    %231 = vmatprep.subr.mxu0 0.0
    %232 = vmatpush1.msra.mxu0 0.0
    %233 = vmatprep.subr.mxu0 0.0
    %234 = vmatpush1.msra.mxu0 0.0
    %235 = vmatprep.subr.mxu0 0.0
    %236 = vmatpush1.msra.mxu0 0.0
    %237 = vmatprep.subr.mxu0 0.0
    %238 = vmatpush1.msra.mxu0 0.0
    %239 = vmatprep.subr.mxu0 0.0
    %240 = vmatpush1.msra.mxu0 0.0
    %241 = vmatprep.subr.mxu0 0.0
    %242 = vmatpush1.msra.mxu0 0.0
    %243 = vmatprep.subr.mxu0 0.0
    %244 = vmatpush1.msra.mxu0 0.0
    %245 = vmatprep.subr.mxu0 0.0
    %246 = vmatpush1.msra.mxu0 0.0
    %247 = vmatprep.subr.mxu0 0.0
    %248 = vmatpush1.msra.mxu0 0.0
    %249 = vmatprep.subr.mxu0 0.0
    %250 = vmatpush1.msra.mxu0 0.0
    %251 = vmatprep.subr.mxu0 0.0
    %252 = vmatpush1.msra.mxu0 0.0
    %253 = vmatprep.subr.mxu0 0.0
    %254 = vmatpush1.msra.mxu0 0.0
    %255 = vmatprep.subr.mxu0 0.0
    %256 = vmatpush1.msra.mxu0 0.0
    %257 = vmatprep.subr.mxu0 0.0
    %258 = vmatpush1.msra.mxu0 0.0
    %259 = vmatprep.subr.mxu0 0.0
    %260 = vmatpush1.msra.mxu0 0.0
    %261 = vmatprep.subr.mxu0 0.0
    %262 = vmatpush1.msra.mxu0 0.0
    %263 = vmatprep.subr.mxu0 0.0
    %264 = vmatpush1.msra.mxu0 0.0
    %265 = vmatprep.subr.mxu0 0.0
    %266 = vmatpush1.msra.mxu0 0.0
    %267 = vmatprep.subr.mxu0 0.0
    %268 = vmatpush1.msra.mxu0 0.0
    %269 = vmatprep.subr.mxu0 0.0
    %270 = vmatpush1.msra.mxu0 0.0
    %271 = vmatprep.subr.mxu0 0.0
    %272 = vmatpush1.msra.mxu0 0.0
    %273 = vmatprep.subr.mxu0 0.0
    %274 = vmatpush1.msra.mxu0 0.0
    %275 = vmatprep.mubr.f32.mxu0 0.0
    %276 = vmatmul.mubr.f32.gmra.mrb[0].mxu0 %v209
    %v277 = vpop.f32.mrb[0].mxu0
    %v278 = vadd.f32 %v205, %v277
    %v279 = vpop.f32.mrb[0].mxu0
    %280 = vdwg.mxu0
    %v281 = vld [vmem:[#allocation11] sm:$0xff]
    %v282 = vld [vmem:[#allocation13] sm:$0x1]
    %v284 = vlaneseq
    %v285 = vshrl.u32 %v284, 7
    %v286 = vsub.s32 0, %v285
    %v287 = vrot.slane %v282, %v286
    %vm289 = vcmask 64512
    %v291 = vsel %vm289, %v278, 0
    %293 = vmatprep.subr.mxu0 0.0
    %294 = vmatpush1.msra.mxu0 %v281
    %295 = vmatprep.subr.mxu0 0.0
    %296 = vmatpush1.msra.mxu0 0.0
    %297 = vmatprep.subr.mxu0 0.0
    %298 = vmatpush1.msra.mxu0 0.0
    %299 = vmatprep.subr.mxu0 0.0
    %300 = vmatpush1.msra.mxu0 0.0
    %301 = vmatprep.subr.mxu0 0.0
    %302 = vmatpush1.msra.mxu0 0.0
    %303 = vmatprep.subr.mxu0 0.0
    %304 = vmatpush1.msra.mxu0 0.0
    %305 = vmatprep.subr.mxu0 0.0
    %306 = vmatpush1.msra.mxu0 0.0
    %307 = vmatprep.subr.mxu0 0.0
    %308 = vmatpush1.msra.mxu0 0.0
    %309 = vmatprep.subr.mxu0 0.0
    %310 = vmatpush1.msra.mxu0 0.0
    %311 = vmatprep.subr.mxu0 0.0
    %312 = vmatpush1.msra.mxu0 0.0
    %313 = vmatprep.subr.mxu0 0.0
    %314 = vmatpush1.msra.mxu0 0.0
    %315 = vmatprep.subr.mxu0 0.0
    %316 = vmatpush1.msra.mxu0 0.0
    %317 = vmatprep.subr.mxu0 0.0
    %318 = vmatpush1.msra.mxu0 0.0
    %319 = vmatprep.subr.mxu0 0.0
    %320 = vmatpush1.msra.mxu0 0.0
    %321 = vmatprep.subr.mxu0 0.0
    %322 = vmatpush1.msra.mxu0 0.0
    %323 = vmatprep.subr.mxu0 0.0
    %324 = vmatpush1.msra.mxu0 0.0
    %325 = vmatprep.subr.mxu0 0.0
    %326 = vmatpush1.msra.mxu0 0.0
    %327 = vmatprep.subr.mxu0 0.0
    %328 = vmatpush1.msra.mxu0 0.0
    %329 = vmatprep.subr.mxu0 0.0
    %330 = vmatpush1.msra.mxu0 0.0
    %331 = vmatprep.subr.mxu0 0.0
    %332 = vmatpush1.msra.mxu0 0.0
    %333 = vmatprep.subr.mxu0 0.0
    %334 = vmatpush1.msra.mxu0 0.0
    %335 = vmatprep.subr.mxu0 0.0
    %336 = vmatpush1.msra.mxu0 0.0
    %337 = vmatprep.subr.mxu0 0.0
    %338 = vmatpush1.msra.mxu0 0.0
    %339 = vmatprep.subr.mxu0 0.0
    %340 = vmatpush1.msra.mxu0 0.0
    %341 = vmatprep.subr.mxu0 0.0
    %342 = vmatpush1.msra.mxu0 0.0
    %343 = vmatprep.subr.mxu0 0.0
    %344 = vmatpush1.msra.mxu0 0.0
    %345 = vmatprep.subr.mxu0 0.0
    %346 = vmatpush1.msra.mxu0 0.0
    %347 = vmatprep.subr.mxu0 0.0
    %348 = vmatpush1.msra.mxu0 0.0
    %349 = vmatprep.subr.mxu0 0.0
    %350 = vmatpush1.msra.mxu0 0.0
    %351 = vmatprep.subr.mxu0 0.0
    %352 = vmatpush1.msra.mxu0 0.0
    %353 = vmatprep.subr.mxu0 0.0
    %354 = vmatpush1.msra.mxu0 0.0
    %355 = vmatprep.subr.mxu0 0.0
    %356 = vmatpush1.msra.mxu0 0.0
    %357 = vmatprep.mubr.f32.mxu0 0.0
    %358 = vmatmul.mubr.f32.gmra.mrb[0].mxu0 %v291
    %v359 = vpop.f32.mrb[0].mxu0
    %v360 = vadd.f32 %v287, %v359
    %v361 = vpop.f32.mrb[0].mxu0
    %362 = vdwg.mxu0
    %vm363 = vcmask 25600
    %364 = vst.msk [vmem:[#allocation14] sm:$0x3] %vm363, %v360
    // Predicated region
    $region58: #{transformer_forward_pallas.23} parent=1 // pred_check
      _
    $region59: #{transformer_forward_pallas.23} parent=1 // pred_check_branch
      %366 = sbr.rel (0) target = $region61
    $region60: #{transformer_forward_pallas.23} parent=1 // pred_region
      %s368 = ssub.s32 32, 32
      %369 = vsyncadd [#allocation4], %s368
      %s371 = sshll.u32 [#allocation14], 4
      %s372 = int_to_ptr.vmem [resolvable:$true] %s371
      %374 = dma.vmem_to_hbm [thread:$0]  %s372, 32, %s7, [#allocation4]
    $region61: #{transformer_forward_pallas.23} parent=1 // pred_fallthru
      _
    // Predicated region
    $region62: #{transformer_forward_pallas.23} parent=1 // pred_check
      _
    $region63: #{transformer_forward_pallas.23} parent=1 // pred_check_branch
      %376 = sbr.rel (0) target = $region65
    $region64: #{transformer_forward_pallas.23} parent=1 // pred_region
      %377 = dma.done [#allocation4], 32
    $region65: #{transformer_forward_pallas.23} parent=1 // pred_fallthru
      _
    %378 = vsyncpa [#allocation3], 1
    %379 = vsyncpa [#allocation6], 1
    %380 = vsyncpa [#allocation9], 1
    %381 = vsyncpa [#allocation12], 1
    %382 = vsyncpa [#allocation4], 1

</llo_original>
